<compile_context>
chip_gen: v7x
topology: tpu7x:2x2x1
jax: 0.10.0
libtpu: 0.0.40
codegen_flags: <defaults>
</compile_context>

<pallas_src>
import functools

import jax
import jax.numpy as jnp
from jax.experimental import pallas as pl
from jax.experimental.pallas import tpu as pltpu


def _round_up(x, m):
    return ((x + m - 1) // m) * m


def _vmem_budget_bytes():
    """Per-generation VMEM request ceiling (~48 MiB on v7x, ~96 MiB on v5e/v6e)."""
    try:
        cap = pltpu.get_tpu_info().vmem_capacity_bytes
    except Exception:                      # fall back to the smallest (v7x) budget
        cap = 64 * 1024 * 1024
    return int(min(0.75 * cap, 100 * 1024 * 1024))


def plan_propagation(n, d, *, force_ktiled=False):
    """Pick tiling and whether E^l can stay VMEM-resident for a whole layer."""
    budget = _vmem_budget_bytes()
    if not force_ktiled:
        n_pad = _round_up(n, 256)
        for tm in (1024, 512, 256):        # prefer the largest A row strip
            if n_pad % tm:
                continue
            est = (2 * n_pad * d * 2               # E^l resident (bf16)
                   + 2 * tm * n_pad * 2            # A row strip, double-buffered bf16
                   + 2 * tm * d * (4 + 2 + 4))     # acc_in + e_out + acc_out slabs
            if est <= int(0.8 * budget):
                return dict(resident=True, tm=tm, tk=None, n_pad=n_pad,
                            vmem_limit=int(min(budget, max(2 * est, 32 << 20))))
    # Fallback: stream A as ~1 MiB bf16 (tm, tk) tiles, reduction axis last.
    tm, tk = 512, 1024
    n_pad = _round_up(n, max(tm, tk))      # tm, tk powers of two -> lcm == max
    est = (2 * tm * tk * 2 + 2 * tk * d * 2 + 2 * tm * d * (4 + 2 + 4))
    return dict(resident=False, tm=tm, tk=tk, n_pad=n_pad,
                vmem_limit=int(min(budget, max(2 * est, 32 << 20))))


def prepare_graph(graph, n_pad):
    """One-time graph prep (outside the jitted forward): bf16 cast BEFORE padding."""
    g = jnp.asarray(graph).astype(jnp.bfloat16)
    n = g.shape[0]
    return jnp.pad(g, ((0, n_pad - n), (0, n_pad - n)))


# ----------------------------------------------------------------------------
# Kernel 1: one LightGCN propagation layer  (E_next = A @ E,  acc += E_next)
# ----------------------------------------------------------------------------
def _prop_resident_kernel(a_ref, e_ref, acc_in_ref, e_out_ref, acc_out_ref):
    # a_ref:       (TM, Npad) bf16  A row strip (large, lane-dense DMA)
    # e_ref:       (Npad, D)  bf16  E^l, VMEM-resident (constant block index)
    # acc_in/out:  (TM, D)    f32   running sum of E^0..E^l (HBM-aliased)
    # e_out:       (TM, D)    bf16  E^{l+1}
    s = jnp.dot(a_ref[...], e_ref[...], preferred_element_type=jnp.float32)
    e_out_ref[...] = s.astype(e_out_ref.dtype)
    acc_out_ref[...] = acc_in_ref[...] + s


def _prop_ktiled_kernel(a_ref, e_ref, acc_in_ref, e_out_ref, acc_out_ref):
    # a_ref: (TM, TK) bf16; e_ref: (TK, D) bf16.  The (TM, D) outputs have a
    # k-constant block index, so they are VMEM-resident across the reduction and
    # acc_out doubles as the f32 matmul accumulator (no scratch buffer).
    k = pl.program_id(1)

    @pl.when(k == 0)
    def _():
        acc_out_ref[...] = jnp.zeros_like(acc_out_ref)

    acc_out_ref[...] += jnp.dot(a_ref[...], e_ref[...],
                                preferred_element_type=jnp.float32)

    @pl.when(k == pl.num_programs(1) - 1)
    def _():
        e_out_ref[...] = acc_out_ref[...].astype(e_out_ref.dtype)   # E^{l+1}
        acc_out_ref[...] += acc_in_ref[...]                         # running sum


def lightgcn_propagate(graph_pad, emb_pad, n_layers, *, resident, tm, tk,
                       vmem_limit):
    """Runs E <- A @ E for n_layers and returns sum(E^0..E^L) in f32."""
    n_pad, d = emb_pad.shape

    if resident:
        grid = (n_pad // tm,)
        in_specs = [
            pl.BlockSpec((tm, n_pad), lambda i: (i, 0)),      # A row strip
            # Full-extent block, constant index: E^l is DMA'd once per layer.
            pl.BlockSpec((n_pad, d), lambda i: (0, 0)),
            pl.BlockSpec((tm, d), lambda i: (i, 0)),          # acc_in slab
        ]
        out_specs = (pl.BlockSpec((tm, d), lambda i: (i, 0)),  # E^{l+1} (bf16)
                     pl.BlockSpec((tm, d), lambda i: (i, 0)))  # running sum
        kernel = _prop_resident_kernel
        dims = ("parallel",)
    else:
        grid = (n_pad // tm, n_pad // tk)
        in_specs = [
            # If DMA is still exposed (v7x), this spec can additionally take
            # pipeline_mode=pl.Buffered(3).
            pl.BlockSpec((tm, tk), lambda i, k: (i, k)),       # A tile
            pl.BlockSpec((tk, d), lambda i, k: (k, 0)),        # E^l slab (bf16)
            pl.BlockSpec((tm, d), lambda i, k: (i, 0)),        # acc_in slab
        ]
        out_specs = (pl.BlockSpec((tm, d), lambda i, k: (i, 0)),
                     pl.BlockSpec((tm, d), lambda i, k: (i, 0)))
        kernel = _prop_ktiled_kernel
        dims = ("parallel", "arbitrary")

    prop_layer = pl.pallas_call(
        kernel,
        out_shape=(jax.ShapeDtypeStruct((n_pad, d), jnp.bfloat16),   # E^{l+1}
                   jax.ShapeDtypeStruct((n_pad, d), jnp.float32)),   # running sum
        grid_spec=pltpu.PrefetchScalarGridSpec(
            num_scalar_prefetch=0, grid=grid,
            in_specs=in_specs, out_specs=out_specs),
        input_output_aliases={2: 1},   # acc_in -> acc_out (in-place in HBM)
        compiler_params=pltpu.CompilerParams(
            dimension_semantics=dims, vmem_limit_bytes=vmem_limit),
    )

    acc = emb_pad                        # E^0 contribution (f32), no jnp.copy
    e = emb_pad.astype(jnp.bfloat16)     # E^0 as the bf16 MXU operand
    for _ in range(n_layers):            # n_layers is small and static
        e, acc = prop_layer(graph_pad, e, acc)
    return acc                           # un-normalized; scaled post-gather


# ----------------------------------------------------------------------------
# Kernel 2: forward() scoring — lane-dense elementwise product + reduction
# ----------------------------------------------------------------------------
def _score_kernel(ut_ref, it_ref, o_ref):
    # (D, BT) operands -> lane-dense (1, BT) output (sublane reduction).
    o_ref[...] = jnp.sum(ut_ref[...] * it_ref[...], axis=0, keepdims=True)


def lightgcn_score(users_emb, items_emb, *, bt=128):
    # TODO(synk): for tiny batches the launch overhead exceeds the work; either
    # use plain jnp.sum(u*i, -1) or fuse the row gathers here via scalar prefetch.
    b, d = users_emb.shape
    b_pad = _round_up(b, bt)
    pad = ((0, b_pad - b), (0, 0))
    ut = jnp.pad(users_emb, pad).T       # (D, Bpad): only B is padded
    it = jnp.pad(items_emb, pad).T
    out = pl.pallas_call(
        _score_kernel,
        out_shape=jax.ShapeDtypeStruct((1, b_pad), jnp.float32),
        grid_spec=pltpu.PrefetchScalarGridSpec(
            num_scalar_prefetch=0, grid=(b_pad // bt,),
            in_specs=[pl.BlockSpec((d, bt), lambda j: (0, j)),
                      pl.BlockSpec((d, bt), lambda j: (0, j))],
            out_specs=pl.BlockSpec((1, bt), lambda j: (0, j))),
        compiler_params=pltpu.CompilerParams(dimension_semantics=("parallel",)),
    )(ut, it)
    return out[0, :b]


# ----------------------------------------------------------------------------
# Wrapper reproducing LightGCN.forward(users, items)
# ----------------------------------------------------------------------------
@functools.partial(
    jax.jit, static_argnames=("n_layers", "resident", "tm", "tk", "vmem_limit"))
def lightgcn_forward(graph_pad, user_table, item_table, users, items, *,
                     n_layers, resident, tm, tk, vmem_limit):
    num_users, d = user_table.shape
    num_items = item_table.shape[0]
    n = num_users + num_items
    n_pad = graph_pad.shape[0]

    all_emb = jnp.concatenate([user_table, item_table], axis=0).astype(jnp.float32)
    emb_pad = jnp.pad(all_emb, ((0, n_pad - n), (0, 0)))

    light_sum = lightgcn_propagate(graph_pad, emb_pad, n_layers,
                                   resident=resident, tm=tm, tk=tk,
                                   vmem_limit=vmem_limit)
    users_emb = light_sum[users]                   # tiny gathers: glue in JAX
    items_emb = light_sum[num_users + items]
    gamma = lightgcn_score(users_emb, items_emb)
    scale = 1.0 / float(n_layers + 1)              # applied to O(B), not O(N*D)
    return gamma * (scale * scale)


# ----------------------------------------------------------------------------
# References
# ----------------------------------------------------------------------------
def lightgcn_forward_ref(graph, user_table, item_table, users, items, n_layers):
    """Pure-f32 reference (mirrors the torch semantics)."""
    num_users = user_table.shape[0]
    all_emb = jnp.concatenate([user_table, item_table], axis=0)
    embs = [all_emb]
    cur = all_emb
    for _ in range(n_layers):
        cur = jnp.matmul(graph, cur, precision=jax.lax.Precision.HIGHEST)
        embs.append(cur)
    light_out = jnp.mean(jnp.stack(embs, axis=1), axis=1)
    u = light_out[:num_users][users]
    it = light_out[num_users:][items]
    return jnp.sum(u * it, axis=1)


def lightgcn_forward_ref_bf16(graph, user_table, item_table, users, items,
                              n_layers):
    """Reference replicating the kernel's bf16 operand rounding (f32 accum)."""
    num_users = user_table.shape[0]
    g = graph.astype(jnp.bfloat16).astype(jnp.float32)
    all_emb = jnp.concatenate([user_table, item_table], axis=0).astype(jnp.float32)
    acc = all_emb
    e_bf = all_emb.astype(jnp.bfloat16)
    for _ in range(n_layers):
        s = jnp.matmul(g, e_bf.astype(jnp.float32),
                       precision=jax.lax.Precision.HIGHEST)
        acc = acc + s
        e_bf = s.astype(jnp.bfloat16)
    light_out = acc / float(n_layers + 1)
    u = light_out[:num_users][users]
    it = light_out[num_users:][items]
    return jnp.sum(u * it, axis=1)


if __name__ == "__main__":
    # Small deterministic config (mirrors __init_weight).
    num_users = 192
    num_items = 320
    latent_dim = 64            # config['latent_dim_rec']
    n_layers = 3               # config['lightGCN_n_layers']
    batch = 8

    key = jax.random.PRNGKey(0)
    k_u, k_i, k_r, k_us, k_it = jax.random.split(key, 5)

    # nn.init.normal_(weight, std=0.1)
    user_table = 0.1 * jax.random.normal(k_u, (num_users, latent_dim), jnp.float32)
    item_table = 0.1 * jax.random.normal(k_i, (num_items, latent_dim), jnp.float32)

    # Deterministic synthetic interactions -> symmetric-normalized bipartite
    # adjacency (dense stand-in for dataset.getSparseGraph()).
    r = (jax.random.uniform(k_r, (num_users, num_items)) < 0.08).astype(jnp.float32)
    n_total = num_users + num_items
    adj = jnp.zeros((n_total, n_total), jnp.float32)
    adj = adj.at[:num_users, num_users:].set(r)
    adj = adj.at[num_users:, :num_users].set(r.T)
    deg = jnp.sum(adj, axis=1)
    d_inv_sqrt = jnp.where(deg > 0, 1.0 / jnp.sqrt(deg), 0.0)
    graph = adj * d_inv_sqrt[:, None] * d_inv_sqrt[None, :]

    users = jax.random.randint(k_us, (batch,), 0, num_users)
    items = jax.random.randint(k_it, (batch,), 0, num_items)

    gamma_ref_bf16 = lightgcn_forward_ref_bf16(graph, user_table, item_table,
                                               users, items, n_layers)
    gamma_ref_f32 = lightgcn_forward_ref(graph, user_table, item_table,
                                         users, items, n_layers)

    # Primary (VMEM-resident E) plan; graph prep is one-time, outside the jit.
    plan = plan_propagation(n_total, latent_dim)
    graph_pad = prepare_graph(graph, plan["n_pad"])
    gamma = lightgcn_forward(graph_pad, user_table, item_table, users, items,
                             n_layers=n_layers, resident=plan["resident"],
                             tm=plan["tm"], tk=plan["tk"],
                             vmem_limit=plan["vmem_limit"])
    gamma = jax.block_until_ready(gamma)
    assert gamma.shape == (batch,)
    # Tight check vs a reference with the same bf16 operand rounding.
    assert jnp.allclose(gamma, gamma_ref_bf16, atol=1e-4, rtol=1e-3)
    # Loose check vs the pure-f32 torch-equivalent semantics.
    assert jnp.allclose(gamma, gamma_ref_f32, atol=5e-3, rtol=5e-2)

    # Also exercise the streamed (row, K)-tiled fallback path (used when E^l
    # does not fit the per-generation VMEM budget).
    plan_kt = plan_propagation(n_total, latent_dim, force_ktiled=True)
    graph_pad_kt = prepare_graph(graph, plan_kt["n_pad"])
    gamma_kt = lightgcn_forward(graph_pad_kt, user_table, item_table, users,
                                items, n_layers=n_layers,
                                resident=plan_kt["resident"],
                                tm=plan_kt["tm"], tk=plan_kt["tk"],
                                vmem_limit=plan_kt["vmem_limit"])
    gamma_kt = jax.block_until_ready(gamma_kt)
    assert jnp.allclose(gamma_kt, gamma_ref_bf16, atol=1e-4, rtol=1e-3)

    print("KERNEL_OK")
</pallas_src>

<mosaic_0001>
module attributes {stable_mosaic.version = 11 : i64} {
  func.func @_prop_resident_kernel(%arg0: i32, %arg1: memref<512x512xbf16, #tpu.memory_space<vmem>>, %arg2: memref<512x64xbf16, #tpu.memory_space<vmem>>, %arg3: memref<512x64xf32, #tpu.memory_space<vmem>>, %arg4: memref<512x64xbf16, #tpu.memory_space<vmem>>, %arg5: memref<512x64xf32, #tpu.memory_space<vmem>>) attributes {dimension_semantics = [#tpu.dimension_semantics<parallel>], iteration_bounds = array<i64: 1>, scalar_prefetch = 0 : i64, scratch_operands = 0 : i64, tpu.core_type = #tpu.core_type<tc>, window_params = [{transform_indices = @transform_0, window_bounds = array<i64: 512, 512>}, {pipeline_mode = #tpu.pipeline_mode<synchronous>, transform_indices = @transform_1, window_bounds = array<i64: 512, 64>}, {transform_indices = @transform_2, window_bounds = array<i64: 512, 64>}, {transform_indices = @transform_3, window_bounds = array<i64: 512, 64>}, {transform_indices = @transform_4, window_bounds = array<i64: 512, 64>}]} {
    %c0 = arith.constant 0 : index
    %c0_0 = arith.constant 0 : index
    %0 = vector.load %arg1[%c0, %c0_0] : memref<512x512xbf16, #tpu.memory_space<vmem>>, vector<512x512xbf16>
    %c0_1 = arith.constant 0 : index
    %c0_2 = arith.constant 0 : index
    %1 = vector.load %arg2[%c0_1, %c0_2] : memref<512x64xbf16, #tpu.memory_space<vmem>>, vector<512x64xbf16>
    %cst = arith.constant dense<0.000000e+00> : vector<512x64xf32>
    %2 = tpu.matmul %0, %1, %cst {dimension_numbers = #tpu.dot_dimension_numbers<[1], [0], [0], [1], [0, 0, 1, 1], [], []>} : vector<512x512xbf16>, vector<512x64xbf16>, vector<512x64xf32> -> vector<512x64xf32>
    %3 = arith.truncf %2 : vector<512x64xf32> to vector<512x64xbf16>
    %c0_3 = arith.constant 0 : index
    %c0_4 = arith.constant 0 : index
    %4 = vector.load %arg4[%c0_3, %c0_4] : memref<512x64xbf16, #tpu.memory_space<vmem>>, vector<512x64xbf16>
    tpu.vector_store %arg4[%c0_3, %c0_4], %3 {strides = array<i32>} : memref<512x64xbf16, #tpu.memory_space<vmem>>, vector<512x64xbf16>,
    %c0_5 = arith.constant 0 : index
    %c0_6 = arith.constant 0 : index
    %5 = vector.load %arg3[%c0_5, %c0_6] : memref<512x64xf32, #tpu.memory_space<vmem>>, vector<512x64xf32>
    %6 = arith.addf %5, %2 : vector<512x64xf32>
    %c0_7 = arith.constant 0 : index
    %c0_8 = arith.constant 0 : index
    %7 = vector.load %arg5[%c0_7, %c0_8] : memref<512x64xf32, #tpu.memory_space<vmem>>, vector<512x64xf32>
    tpu.vector_store %arg5[%c0_7, %c0_8], %6 {strides = array<i32>} : memref<512x64xf32, #tpu.memory_space<vmem>>, vector<512x64xf32>,
    return
  }
  func.func @transform_0(%arg0: i32) -> (i32, i32) {
    %c0_i32 = arith.constant 0 : i32
    %c0_i32_0 = arith.constant 0 : i32
    return %arg0, %c0_i32 : i32, i32
  }
  func.func @transform_1(%arg0: i32) -> (i32, i32) {
    %c0_i32 = arith.constant 0 : i32
    %c0_i32_0 = arith.constant 0 : i32
    %c0_i32_1 = arith.constant 0 : i32
    return %c0_i32, %c0_i32_0 : i32, i32
  }
  func.func @transform_2(%arg0: i32) -> (i32, i32) {
    %c0_i32 = arith.constant 0 : i32
    %c0_i32_0 = arith.constant 0 : i32
    return %arg0, %c0_i32 : i32, i32
  }
  func.func @transform_3(%arg0: i32) -> (i32, i32) {
    %c0_i32 = arith.constant 0 : i32
    %c0_i32_0 = arith.constant 0 : i32
    return %arg0, %c0_i32 : i32, i32
  }
  func.func @transform_4(%arg0: i32) -> (i32, i32) {
    %c0_i32 = arith.constant 0 : i32
    %c0_i32_0 = arith.constant 0 : i32
    return %arg0, %c0_i32 : i32, i32
  }
}

module attributes {stable_mosaic.version = 11 : i64} {
  func.func @_prop_resident_kernel(%arg0: i32, %arg1: memref<512x512xbf16, #tpu.memory_space<vmem>>, %arg2: memref<512x64xbf16, #tpu.memory_space<vmem>>, %arg3: memref<512x64xf32, #tpu.memory_space<vmem>>, %arg4: memref<512x64xbf16, #tpu.memory_space<vmem>>, %arg5: memref<512x64xf32, #tpu.memory_space<vmem>>) attributes {dimension_semantics = [#tpu.dimension_semantics<parallel>], iteration_bounds = array<i64: 1>, scalar_prefetch = 0 : i64, scratch_operands = 0 : i64, tpu.core_type = #tpu.core_type<tc>, window_params = [{transform_indices = @transform_0, window_bounds = array<i64: 512, 512>}, {pipeline_mode = #tpu.pipeline_mode<synchronous>, transform_indices = @transform_1, window_bounds = array<i64: 512, 64>}, {transform_indices = @transform_2, window_bounds = array<i64: 512, 64>}, {transform_indices = @transform_3, window_bounds = array<i64: 512, 64>}, {transform_indices = @transform_4, window_bounds = array<i64: 512, 64>}]} {
    %c0 = arith.constant 0 : index
    %c0_0 = arith.constant 0 : index
    %0 = vector.load %arg1[%c0, %c0_0] : memref<512x512xbf16, #tpu.memory_space<vmem>>, vector<512x512xbf16>
    %c0_1 = arith.constant 0 : index
    %c0_2 = arith.constant 0 : index
    %1 = vector.load %arg2[%c0_1, %c0_2] : memref<512x64xbf16, #tpu.memory_space<vmem>>, vector<512x64xbf16>
    %cst = arith.constant dense<0.000000e+00> : vector<512x64xf32>
    %2 = tpu.matmul %0, %1, %cst {dimension_numbers = #tpu.dot_dimension_numbers<[1], [0], [0], [1], [0, 0, 1, 1], [], []>} : vector<512x512xbf16>, vector<512x64xbf16>, vector<512x64xf32> -> vector<512x64xf32>
    %3 = arith.truncf %2 : vector<512x64xf32> to vector<512x64xbf16>
    %c0_3 = arith.constant 0 : index
    %c0_4 = arith.constant 0 : index
    %4 = vector.load %arg4[%c0_3, %c0_4] : memref<512x64xbf16, #tpu.memory_space<vmem>>, vector<512x64xbf16>
    tpu.vector_store %arg4[%c0_3, %c0_4], %3 {strides = array<i32>} : memref<512x64xbf16, #tpu.memory_space<vmem>>, vector<512x64xbf16>,
    %c0_5 = arith.constant 0 : index
    %c0_6 = arith.constant 0 : index
    %5 = vector.load %arg3[%c0_5, %c0_6] : memref<512x64xf32, #tpu.memory_space<vmem>>, vector<512x64xf32>
    %6 = arith.addf %5, %2 : vector<512x64xf32>
    %c0_7 = arith.constant 0 : index
    %c0_8 = arith.constant 0 : index
    %7 = vector.load %arg5[%c0_7, %c0_8] : memref<512x64xf32, #tpu.memory_space<vmem>>, vector<512x64xf32>
    tpu.vector_store %arg5[%c0_7, %c0_8], %6 {strides = array<i32>} : memref<512x64xf32, #tpu.memory_space<vmem>>, vector<512x64xf32>,
    return
  }
  func.func @transform_0(%arg0: i32) -> (i32, i32) {
    %c0_i32 = arith.constant 0 : i32
    %c0_i32_0 = arith.constant 0 : i32
    return %arg0, %c0_i32 : i32, i32
  }
  func.func @transform_1(%arg0: i32) -> (i32, i32) {
    %c0_i32 = arith.constant 0 : i32
    %c0_i32_0 = arith.constant 0 : i32
    %c0_i32_1 = arith.constant 0 : i32
    return %c0_i32, %c0_i32_0 : i32, i32
  }
  func.func @transform_2(%arg0: i32) -> (i32, i32) {
    %c0_i32 = arith.constant 0 : i32
    %c0_i32_0 = arith.constant 0 : i32
    return %arg0, %c0_i32 : i32, i32
  }
  func.func @transform_3(%arg0: i32) -> (i32, i32) {
    %c0_i32 = arith.constant 0 : i32
    %c0_i32_0 = arith.constant 0 : i32
    return %arg0, %c0_i32 : i32, i32
  }
  func.func @transform_4(%arg0: i32) -> (i32, i32) {
    %c0_i32 = arith.constant 0 : i32
    %c0_i32_0 = arith.constant 0 : i32
    return %arg0, %c0_i32 : i32, i32
  }
}

module attributes {stable_mosaic.version = 11 : i64} {
  func.func @_score_kernel(%arg0: i32, %arg1: memref<64x128xf32, #tpu.memory_space<vmem>>, %arg2: memref<64x128xf32, #tpu.memory_space<vmem>>, %arg3: memref<1x128xf32, #tpu.memory_space<vmem>>) attributes {dimension_semantics = [#tpu.dimension_semantics<parallel>], iteration_bounds = array<i64: 1>, scalar_prefetch = 0 : i64, scratch_operands = 0 : i64, tpu.core_type = #tpu.core_type<tc>, window_params = [{transform_indices = @transform_0, window_bounds = array<i64: 64, 128>}, {transform_indices = @transform_1, window_bounds = array<i64: 64, 128>}, {transform_indices = @transform_2, window_bounds = array<i64: 1, 128>}]} {
    %c0 = arith.constant 0 : index
    %c0_0 = arith.constant 0 : index
    %0 = vector.load %arg1[%c0, %c0_0] : memref<64x128xf32, #tpu.memory_space<vmem>>, vector<64x128xf32>
    %c0_1 = arith.constant 0 : index
    %c0_2 = arith.constant 0 : index
    %1 = vector.load %arg2[%c0_1, %c0_2] : memref<64x128xf32, #tpu.memory_space<vmem>>, vector<64x128xf32>
    %2 = arith.mulf %0, %1 : vector<64x128xf32>
    %cst = arith.constant dense<0.000000e+00> : vector<128xf32>
    %3 = vector.multi_reduction <add>, %2, %cst [0] : vector<64x128xf32> to vector<128xf32>
    %4 = vector.shape_cast %3 : vector<128xf32> to vector<1x128xf32>
    %c0_3 = arith.constant 0 : index
    %c0_4 = arith.constant 0 : index
    %5 = vector.load %arg3[%c0_3, %c0_4] : memref<1x128xf32, #tpu.memory_space<vmem>>, vector<1x128xf32>
    tpu.vector_store %arg3[%c0_3, %c0_4], %4 {strides = array<i32>} : memref<1x128xf32, #tpu.memory_space<vmem>>, vector<1x128xf32>,
    return
  }
  func.func @transform_0(%arg0: i32) -> (i32, i32) {
    %c0_i32 = arith.constant 0 : i32
    %c0_i32_0 = arith.constant 0 : i32
    return %c0_i32, %arg0 : i32, i32
  }
  func.func @transform_1(%arg0: i32) -> (i32, i32) {
    %c0_i32 = arith.constant 0 : i32
    %c0_i32_0 = arith.constant 0 : i32
    return %c0_i32, %arg0 : i32, i32
  }
  func.func @transform_2(%arg0: i32) -> (i32, i32) {
    %c0_i32 = arith.constant 0 : i32
    %c0_i32_0 = arith.constant 0 : i32
    return %c0_i32, %arg0 : i32, i32
  }
}

</mosaic_0001>

<llo_original>
// kernel: lightgcn_forward.7
$region0: #{lightgcn_forward.7}
  #allocation0 [shape = 'u32[]', space=smem, size = 0x4, offset = 0x4, fixed_abs, tag = 'smem constant byte address 0x4 - core index']
  #allocation1 [shape = 'u32[144,128]{1,0:T(1,128)}', space=vmem, size = 0x12000, scoped, tag = 'internal scratch']
  %s0 = inlined_call_operand.vmem [shape: f32[64,128], index: 0, kind: input, shape index: {}]
  %s1 = inlined_call_operand.vmem [shape: f32[64,128], index: 1, kind: input, shape index: {}]
  %s2 = inlined_call_operand.vmem [shape: f32[1,128], index: 2, kind: output, shape index: {}]
  %s3 = sld [smem:[#allocation0]]
  $region18: #{lightgcn_forward.7} parent=0
    _
  %s5 = ssub.s32 1, %s3
  %s6 = scalar_select 0, %s5, %s3
  // Predicated region
  $region2: #{lightgcn_forward.7} parent=0 // pred_check
    _
  $region3: #{lightgcn_forward.7} parent=0 // pred_check_branch
    %8 = sbr.rel (0) target = $region5
  $region4: #{lightgcn_forward.7} parent=0 // pred_region
    _
  $region5: #{lightgcn_forward.7} parent=0 // pred_fallthru
    _
  // Predicated region
  $region6: #{lightgcn_forward.7} parent=0 // pred_check
    _
  $region7: #{lightgcn_forward.7} parent=0 // pred_check_branch
    %10 = sbr.rel (0) target = $region9
  $region8: #{lightgcn_forward.7} parent=0 // pred_region
    _
  $region9: #{lightgcn_forward.7} parent=0 // pred_fallthru
    _
  %v11 = vld [vmem:[%s0] sm:$0xff]
  %v12 = vld [vmem:[%s0 + $0x8] sm:$0xff]
  %v13 = vld [vmem:[%s0 + $0x10] sm:$0xff]
  %v14 = vld [vmem:[%s0 + $0x18] sm:$0xff]
  %v15 = vld [vmem:[%s0 + $0x20] sm:$0xff]
  %v16 = vld [vmem:[%s0 + $0x28] sm:$0xff]
  %v17 = vld [vmem:[%s0 + $0x30] sm:$0xff]
  %v18 = vld [vmem:[%s0 + $0x38] sm:$0xff]
  %v19 = vld [vmem:[%s1] sm:$0xff]
  %v20 = vld [vmem:[%s1 + $0x8] sm:$0xff]
  %v21 = vld [vmem:[%s1 + $0x10] sm:$0xff]
  %v22 = vld [vmem:[%s1 + $0x18] sm:$0xff]
  %v23 = vld [vmem:[%s1 + $0x20] sm:$0xff]
  %v24 = vld [vmem:[%s1 + $0x28] sm:$0xff]
  %v25 = vld [vmem:[%s1 + $0x30] sm:$0xff]
  %v26 = vld [vmem:[%s1 + $0x38] sm:$0xff]
  %v27 = vmul.f32 %v11, %v19
  %v28 = vmul.f32 %v12, %v20
  %v29 = vmul.f32 %v13, %v21
  %v30 = vmul.f32 %v14, %v22
  %v31 = vmul.f32 %v15, %v23
  %v32 = vmul.f32 %v16, %v24
  %v33 = vmul.f32 %v17, %v25
  %v34 = vmul.f32 %v18, %v26
  %v35 = vadd.f32 %v27, %v28
  %v36 = vadd.f32 %v35, %v29
  %v37 = vadd.f32 %v36, %v30
  %v38 = vadd.f32 %v37, %v31
  %v39 = vadd.f32 %v38, %v32
  %v40 = vadd.f32 %v39, %v33
  %v41 = vadd.f32 %v40, %v34
  %v42 = vrot.slane %v41, 4
  %v43 = vadd.f32 %v41, %v42
  %v44 = vrot.slane %v43, 2
  %v45 = vadd.f32 %v43, %v44
  %v46 = vrot.slane %v45, 1
  %v47 = vadd.f32 %v45, %v46
  %48 = vst [vmem:[%s2] sm:$0x1] %v47
  // Predicated region
  $region10: #{lightgcn_forward.7} parent=0 // pred_check
    _
  $region11: #{lightgcn_forward.7} parent=0 // pred_check_branch
    %50 = sbr.rel (0) target = $region13
  $region12: #{lightgcn_forward.7} parent=0 // pred_region
    _
  $region13: #{lightgcn_forward.7} parent=0 // pred_fallthru
    _
  // Predicated region
  $region14: #{lightgcn_forward.7} parent=0 // pred_check
    _
  $region15: #{lightgcn_forward.7} parent=0 // pred_check_branch
    %52 = sbr.rel (0) target = $region17
  $region16: #{lightgcn_forward.7} parent=0 // pred_region
    _
  $region17: #{lightgcn_forward.7} parent=0 // pred_fallthru
    _

// kernel: lightgcn_forward.4
$region0: #{lightgcn_forward.4}
  #allocation0 [shape = 'u32[]', space=smem, size = 0x4, offset = 0x4, fixed_abs, tag = 'smem constant byte address 0x4 - core index']
  #allocation1 [shape = 'u32[144,128]{1,0:T(1,128)}', space=vmem, size = 0x12000, scoped, tag = 'internal scratch']
  %s0 = inlined_call_operand.vmem [shape: bf16[512,512], index: 0, kind: input, shape index: {}]
  %s1 = inlined_call_operand.vmem [shape: bf16[512,64], index: 1, kind: input, shape index: {}]
  %s2 = inlined_call_operand.vmem [shape: f32[512,64], index: 2, kind: input, shape index: {}, may-alias: {2,4}]
  %s3 = inlined_call_operand.vmem [shape: bf16[512,64], index: 3, kind: output, shape index: {0}]
  %s4 = inlined_call_operand.vmem [shape: f32[512,64], index: 4, kind: output, shape index: {1}, may-alias: {2,4}]
  %5 = xla_tuple %s3, %s4
  %s6 = sld [smem:[#allocation0]]
  $region30: #{lightgcn_forward.4} parent=0
    _
  %s8 = ssub.s32 1, %s6
  %s9 = scalar_select 0, %s8, %s6
  // Predicated region
  $region2: #{lightgcn_forward.4} parent=0 // pred_check
    _
  $region3: #{lightgcn_forward.4} parent=0 // pred_check_branch
    %11 = sbr.rel (0) target = $region5
  $region4: #{lightgcn_forward.4} parent=0 // pred_region
    _
  $region5: #{lightgcn_forward.4} parent=0 // pred_fallthru
    _
  // Predicated region
  $region6: #{lightgcn_forward.4} parent=0 // pred_check
    _
  $region7: #{lightgcn_forward.4} parent=0 // pred_check_branch
    %13 = sbr.rel (0) target = $region9
  $region8: #{lightgcn_forward.4} parent=0 // pred_region
    _
  $region9: #{lightgcn_forward.4} parent=0 // pred_fallthru
    _
  // Predicated region
  $region10: #{lightgcn_forward.4} parent=0 // pred_check
    _
  $region11: #{lightgcn_forward.4} parent=0 // pred_check_branch
    %15 = sbr.rel (0) target = $region13
  $region12: #{lightgcn_forward.4} parent=0 // pred_region
    _
  $region13: #{lightgcn_forward.4} parent=0 // pred_fallthru
    _
  %v17 = vld [vmem:[%s0] sm:$0xff]
  %v18 = vld [vmem:[%s0 + $0x8] sm:$0xff]
  %v19 = vld [vmem:[%s0 + $0x10] sm:$0xff]
  %v20 = vld [vmem:[%s0 + $0x18] sm:$0xff]
  %v21 = vld [vmem:[%s0 + $0x20] sm:$0xff]
  %v22 = vld [vmem:[%s0 + $0x28] sm:$0xff]
  %v23 = vld [vmem:[%s0 + $0x30] sm:$0xff]
  %v24 = vld [vmem:[%s0 + $0x38] sm:$0xff]
  %v25 = vld [vmem:[%s0 + $0x40] sm:$0xff]
  %v26 = vld [vmem:[%s0 + $0x48] sm:$0xff]
  %v27 = vld [vmem:[%s0 + $0x50] sm:$0xff]
  %v28 = vld [vmem:[%s0 + $0x58] sm:$0xff]
  %v29 = vld [vmem:[%s0 + $0x60] sm:$0xff]
  %v30 = vld [vmem:[%s0 + $0x68] sm:$0xff]
  %v31 = vld [vmem:[%s0 + $0x70] sm:$0xff]
  %v32 = vld [vmem:[%s0 + $0x78] sm:$0xff]
  %v33 = vld [vmem:[%s0 + $0x80] sm:$0xff]
  %v34 = vld [vmem:[%s0 + $0x88] sm:$0xff]
  %v35 = vld [vmem:[%s0 + $0x90] sm:$0xff]
  %v36 = vld [vmem:[%s0 + $0x98] sm:$0xff]
  %v37 = vld [vmem:[%s0 + $0xa0] sm:$0xff]
  %v38 = vld [vmem:[%s0 + $0xa8] sm:$0xff]
  %v39 = vld [vmem:[%s0 + $0xb0] sm:$0xff]
  %v40 = vld [vmem:[%s0 + $0xb8] sm:$0xff]
  %v41 = vld [vmem:[%s0 + $0xc0] sm:$0xff]
  %v42 = vld [vmem:[%s0 + $0xc8] sm:$0xff]
  %v43 = vld [vmem:[%s0 + $0xd0] sm:$0xff]
  %v44 = vld [vmem:[%s0 + $0xd8] sm:$0xff]
  %v45 = vld [vmem:[%s0 + $0xe0] sm:$0xff]
  %v46 = vld [vmem:[%s0 + $0xe8] sm:$0xff]
  %v47 = vld [vmem:[%s0 + $0xf0] sm:$0xff]
  %v48 = vld [vmem:[%s0 + $0xf8] sm:$0xff]
  %v49 = vld [vmem:[%s0 + $0x100] sm:$0xff]
  %v50 = vld [vmem:[%s0 + $0x108] sm:$0xff]
  %v51 = vld [vmem:[%s0 + $0x110] sm:$0xff]
  %v52 = vld [vmem:[%s0 + $0x118] sm:$0xff]
  %v53 = vld [vmem:[%s0 + $0x120] sm:$0xff]
  %v54 = vld [vmem:[%s0 + $0x128] sm:$0xff]
  %v55 = vld [vmem:[%s0 + $0x130] sm:$0xff]
  %v56 = vld [vmem:[%s0 + $0x138] sm:$0xff]
  %v57 = vld [vmem:[%s0 + $0x140] sm:$0xff]
  %v58 = vld [vmem:[%s0 + $0x148] sm:$0xff]
  %v59 = vld [vmem:[%s0 + $0x150] sm:$0xff]
  %v60 = vld [vmem:[%s0 + $0x158] sm:$0xff]
  %v61 = vld [vmem:[%s0 + $0x160] sm:$0xff]
  %v62 = vld [vmem:[%s0 + $0x168] sm:$0xff]
  %v63 = vld [vmem:[%s0 + $0x170] sm:$0xff]
  %v64 = vld [vmem:[%s0 + $0x178] sm:$0xff]
  %v65 = vld [vmem:[%s0 + $0x180] sm:$0xff]
  %v66 = vld [vmem:[%s0 + $0x188] sm:$0xff]
  %v67 = vld [vmem:[%s0 + $0x190] sm:$0xff]
  %v68 = vld [vmem:[%s0 + $0x198] sm:$0xff]
  %v69 = vld [vmem:[%s0 + $0x1a0] sm:$0xff]
  %v70 = vld [vmem:[%s0 + $0x1a8] sm:$0xff]
  %v71 = vld [vmem:[%s0 + $0x1b0] sm:$0xff]
  %v72 = vld [vmem:[%s0 + $0x1b8] sm:$0xff]
  %v73 = vld [vmem:[%s0 + $0x1c0] sm:$0xff]
  %v74 = vld [vmem:[%s0 + $0x1c8] sm:$0xff]
  %v75 = vld [vmem:[%s0 + $0x1d0] sm:$0xff]
  %v76 = vld [vmem:[%s0 + $0x1d8] sm:$0xff]
  %v77 = vld [vmem:[%s0 + $0x1e0] sm:$0xff]
  %v78 = vld [vmem:[%s0 + $0x1e8] sm:$0xff]
  %v79 = vld [vmem:[%s0 + $0x1f0] sm:$0xff]
  %v80 = vld [vmem:[%s0 + $0x1f8] sm:$0xff]
  %v81 = vld [vmem:[%s0 + $0x200] sm:$0xff]
  %v82 = vld [vmem:[%s0 + $0x208] sm:$0xff]
  %v83 = vld [vmem:[%s0 + $0x210] sm:$0xff]
  %v84 = vld [vmem:[%s0 + $0x218] sm:$0xff]
  %v85 = vld [vmem:[%s0 + $0x220] sm:$0xff]
  %v86 = vld [vmem:[%s0 + $0x228] sm:$0xff]
  %v87 = vld [vmem:[%s0 + $0x230] sm:$0xff]
  %v88 = vld [vmem:[%s0 + $0x238] sm:$0xff]
  %v89 = vld [vmem:[%s0 + $0x240] sm:$0xff]
  %v90 = vld [vmem:[%s0 + $0x248] sm:$0xff]
  %v91 = vld [vmem:[%s0 + $0x250] sm:$0xff]
  %v92 = vld [vmem:[%s0 + $0x258] sm:$0xff]
  %v93 = vld [vmem:[%s0 + $0x260] sm:$0xff]
  %v94 = vld [vmem:[%s0 + $0x268] sm:$0xff]
  %v95 = vld [vmem:[%s0 + $0x270] sm:$0xff]
  %v96 = vld [vmem:[%s0 + $0x278] sm:$0xff]
  %v97 = vld [vmem:[%s0 + $0x280] sm:$0xff]
  %v98 = vld [vmem:[%s0 + $0x288] sm:$0xff]
  %v99 = vld [vmem:[%s0 + $0x290] sm:$0xff]
  %v100 = vld [vmem:[%s0 + $0x298] sm:$0xff]
  %v101 = vld [vmem:[%s0 + $0x2a0] sm:$0xff]
  %v102 = vld [vmem:[%s0 + $0x2a8] sm:$0xff]
  %v103 = vld [vmem:[%s0 + $0x2b0] sm:$0xff]
  %v104 = vld [vmem:[%s0 + $0x2b8] sm:$0xff]
  %v105 = vld [vmem:[%s0 + $0x2c0] sm:$0xff]
  %v106 = vld [vmem:[%s0 + $0x2c8] sm:$0xff]
  %v107 = vld [vmem:[%s0 + $0x2d0] sm:$0xff]
  %v108 = vld [vmem:[%s0 + $0x2d8] sm:$0xff]
  %v109 = vld [vmem:[%s0 + $0x2e0] sm:$0xff]
  %v110 = vld [vmem:[%s0 + $0x2e8] sm:$0xff]
  %v111 = vld [vmem:[%s0 + $0x2f0] sm:$0xff]
  %v112 = vld [vmem:[%s0 + $0x2f8] sm:$0xff]
  %v113 = vld [vmem:[%s0 + $0x300] sm:$0xff]
  %v114 = vld [vmem:[%s0 + $0x308] sm:$0xff]
  %v115 = vld [vmem:[%s0 + $0x310] sm:$0xff]
  %v116 = vld [vmem:[%s0 + $0x318] sm:$0xff]
  %v117 = vld [vmem:[%s0 + $0x320] sm:$0xff]
  %v118 = vld [vmem:[%s0 + $0x328] sm:$0xff]
  %v119 = vld [vmem:[%s0 + $0x330] sm:$0xff]
  %v120 = vld [vmem:[%s0 + $0x338] sm:$0xff]
  %v121 = vld [vmem:[%s0 + $0x340] sm:$0xff]
  %v122 = vld [vmem:[%s0 + $0x348] sm:$0xff]
  %v123 = vld [vmem:[%s0 + $0x350] sm:$0xff]
  %v124 = vld [vmem:[%s0 + $0x358] sm:$0xff]
  %v125 = vld [vmem:[%s0 + $0x360] sm:$0xff]
  %v126 = vld [vmem:[%s0 + $0x368] sm:$0xff]
  %v127 = vld [vmem:[%s0 + $0x370] sm:$0xff]
  %v128 = vld [vmem:[%s0 + $0x378] sm:$0xff]
  %v129 = vld [vmem:[%s0 + $0x380] sm:$0xff]
  %v130 = vld [vmem:[%s0 + $0x388] sm:$0xff]
  %v131 = vld [vmem:[%s0 + $0x390] sm:$0xff]
  %v132 = vld [vmem:[%s0 + $0x398] sm:$0xff]
  %v133 = vld [vmem:[%s0 + $0x3a0] sm:$0xff]
  %v134 = vld [vmem:[%s0 + $0x3a8] sm:$0xff]
  %v135 = vld [vmem:[%s0 + $0x3b0] sm:$0xff]
  %v136 = vld [vmem:[%s0 + $0x3b8] sm:$0xff]
  %v137 = vld [vmem:[%s0 + $0x3c0] sm:$0xff]
  %v138 = vld [vmem:[%s0 + $0x3c8] sm:$0xff]
  %v139 = vld [vmem:[%s0 + $0x3d0] sm:$0xff]
  %v140 = vld [vmem:[%s0 + $0x3d8] sm:$0xff]
  %v141 = vld [vmem:[%s0 + $0x3e0] sm:$0xff]
  %v142 = vld [vmem:[%s0 + $0x3e8] sm:$0xff]
  %v143 = vld [vmem:[%s0 + $0x3f0] sm:$0xff]
  %v144 = vld [vmem:[%s0 + $0x3f8] sm:$0xff]
  %v145 = vld [vmem:[%s1] sm:$0xf]
  %v146 = vld [vmem:[%s1 + $0x4] sm:$0xf]
  %v147 = vld [vmem:[%s1 + $0x8] sm:$0xf]
  %v148 = vld [vmem:[%s1 + $0xc] sm:$0xf]
  %v149 = vld [vmem:[%s1 + $0x10] sm:$0xf]
  %v150 = vld [vmem:[%s1 + $0x14] sm:$0xf]
  %v151 = vld [vmem:[%s1 + $0x18] sm:$0xf]
  %v152 = vld [vmem:[%s1 + $0x1c] sm:$0xf]
  %v153 = vld [vmem:[%s1 + $0x20] sm:$0xf]
  %v154 = vld [vmem:[%s1 + $0x24] sm:$0xf]
  %v155 = vld [vmem:[%s1 + $0x28] sm:$0xf]
  %v156 = vld [vmem:[%s1 + $0x2c] sm:$0xf]
  %v157 = vld [vmem:[%s1 + $0x30] sm:$0xf]
  %v158 = vld [vmem:[%s1 + $0x34] sm:$0xf]
  %v159 = vld [vmem:[%s1 + $0x38] sm:$0xf]
  %v160 = vld [vmem:[%s1 + $0x3c] sm:$0xf]
  %v161 = vld [vmem:[%s1 + $0x40] sm:$0xf]
  %v162 = vld [vmem:[%s1 + $0x44] sm:$0xf]
  %v163 = vld [vmem:[%s1 + $0x48] sm:$0xf]
  %v164 = vld [vmem:[%s1 + $0x4c] sm:$0xf]
  %v165 = vld [vmem:[%s1 + $0x50] sm:$0xf]
  %v166 = vld [vmem:[%s1 + $0x54] sm:$0xf]
  %v167 = vld [vmem:[%s1 + $0x58] sm:$0xf]
  %v168 = vld [vmem:[%s1 + $0x5c] sm:$0xf]
  %v169 = vld [vmem:[%s1 + $0x60] sm:$0xf]
  %v170 = vld [vmem:[%s1 + $0x64] sm:$0xf]
  %v171 = vld [vmem:[%s1 + $0x68] sm:$0xf]
  %v172 = vld [vmem:[%s1 + $0x6c] sm:$0xf]
  %v173 = vld [vmem:[%s1 + $0x70] sm:$0xf]
  %v174 = vld [vmem:[%s1 + $0x74] sm:$0xf]
  %v175 = vld [vmem:[%s1 + $0x78] sm:$0xf]
  %v176 = vld [vmem:[%s1 + $0x7c] sm:$0xf]
  %v177 = vld [vmem:[%s1 + $0x80] sm:$0xf]
  %v178 = vld [vmem:[%s1 + $0x84] sm:$0xf]
  %v179 = vld [vmem:[%s1 + $0x88] sm:$0xf]
  %v180 = vld [vmem:[%s1 + $0x8c] sm:$0xf]
  %v181 = vld [vmem:[%s1 + $0x90] sm:$0xf]
  %v182 = vld [vmem:[%s1 + $0x94] sm:$0xf]
  %v183 = vld [vmem:[%s1 + $0x98] sm:$0xf]
  %v184 = vld [vmem:[%s1 + $0x9c] sm:$0xf]
  %v185 = vld [vmem:[%s1 + $0xa0] sm:$0xf]
  %v186 = vld [vmem:[%s1 + $0xa4] sm:$0xf]
  %v187 = vld [vmem:[%s1 + $0xa8] sm:$0xf]
  %v188 = vld [vmem:[%s1 + $0xac] sm:$0xf]
  %v189 = vld [vmem:[%s1 + $0xb0] sm:$0xf]
  %v190 = vld [vmem:[%s1 + $0xb4] sm:$0xf]
  %v191 = vld [vmem:[%s1 + $0xb8] sm:$0xf]
  %v192 = vld [vmem:[%s1 + $0xbc] sm:$0xf]
  %v193 = vld [vmem:[%s1 + $0xc0] sm:$0xf]
  %v194 = vld [vmem:[%s1 + $0xc4] sm:$0xf]
  %v195 = vld [vmem:[%s1 + $0xc8] sm:$0xf]
  %v196 = vld [vmem:[%s1 + $0xcc] sm:$0xf]
  %v197 = vld [vmem:[%s1 + $0xd0] sm:$0xf]
  %v198 = vld [vmem:[%s1 + $0xd4] sm:$0xf]
  %v199 = vld [vmem:[%s1 + $0xd8] sm:$0xf]
  %v200 = vld [vmem:[%s1 + $0xdc] sm:$0xf]
  %v201 = vld [vmem:[%s1 + $0xe0] sm:$0xf]
  %v202 = vld [vmem:[%s1 + $0xe4] sm:$0xf]
  %v203 = vld [vmem:[%s1 + $0xe8] sm:$0xf]
  %v204 = vld [vmem:[%s1 + $0xec] sm:$0xf]
  %v205 = vld [vmem:[%s1 + $0xf0] sm:$0xf]
  %v206 = vld [vmem:[%s1 + $0xf4] sm:$0xf]
  %v207 = vld [vmem:[%s1 + $0xf8] sm:$0xf]
  %v208 = vld [vmem:[%s1 + $0xfc] sm:$0xf]
  %v337 = vunpack.c.l.b16 %v17
  %v338 = vunpack.c.h.b16 %v17
  %v339 = vunpack.c.l.b16 %v18
  %v340 = vunpack.c.h.b16 %v18
  %v341 = vunpack.c.l.b16 %v19
  %v342 = vunpack.c.h.b16 %v19
  %v343 = vunpack.c.l.b16 %v20
  %v344 = vunpack.c.h.b16 %v20
  %v345 = vunpack.c.l.b16 %v21
  %v346 = vunpack.c.h.b16 %v21
  %v347 = vunpack.c.l.b16 %v22
  %v348 = vunpack.c.h.b16 %v22
  %v349 = vunpack.c.l.b16 %v23
  %v350 = vunpack.c.h.b16 %v23
  %v351 = vunpack.c.l.b16 %v24
  %v352 = vunpack.c.h.b16 %v24
  %v353 = vunpack.c.l.b16 %v25
  %v354 = vunpack.c.h.b16 %v25
  %v355 = vunpack.c.l.b16 %v26
  %v356 = vunpack.c.h.b16 %v26
  %v357 = vunpack.c.l.b16 %v27
  %v358 = vunpack.c.h.b16 %v27
  %v359 = vunpack.c.l.b16 %v28
  %v360 = vunpack.c.h.b16 %v28
  %v361 = vunpack.c.l.b16 %v29
  %v362 = vunpack.c.h.b16 %v29
  %v363 = vunpack.c.l.b16 %v30
  %v364 = vunpack.c.h.b16 %v30
  %v365 = vunpack.c.l.b16 %v31
  %v366 = vunpack.c.h.b16 %v31
  %v367 = vunpack.c.l.b16 %v32
  %v368 = vunpack.c.h.b16 %v32
  %v369 = vunpack.c.l.b16 %v33
  %v370 = vunpack.c.h.b16 %v33
  %v371 = vunpack.c.l.b16 %v34
  %v372 = vunpack.c.h.b16 %v34
  %v373 = vunpack.c.l.b16 %v35
  %v374 = vunpack.c.h.b16 %v35
  %v375 = vunpack.c.l.b16 %v36
  %v376 = vunpack.c.h.b16 %v36
  %v377 = vunpack.c.l.b16 %v37
  %v378 = vunpack.c.h.b16 %v37
  %v379 = vunpack.c.l.b16 %v38
  %v380 = vunpack.c.h.b16 %v38
  %v381 = vunpack.c.l.b16 %v39
  %v382 = vunpack.c.h.b16 %v39
  %v383 = vunpack.c.l.b16 %v40
  %v384 = vunpack.c.h.b16 %v40
  %v385 = vunpack.c.l.b16 %v41
  %v386 = vunpack.c.h.b16 %v41
  %v387 = vunpack.c.l.b16 %v42
  %v388 = vunpack.c.h.b16 %v42
  %v389 = vunpack.c.l.b16 %v43
  %v390 = vunpack.c.h.b16 %v43
  %v391 = vunpack.c.l.b16 %v44
  %v392 = vunpack.c.h.b16 %v44
  %v393 = vunpack.c.l.b16 %v45
  %v394 = vunpack.c.h.b16 %v45
  %v395 = vunpack.c.l.b16 %v46
  %v396 = vunpack.c.h.b16 %v46
  %v397 = vunpack.c.l.b16 %v47
  %v398 = vunpack.c.h.b16 %v47
  %v399 = vunpack.c.l.b16 %v48
  %v400 = vunpack.c.h.b16 %v48
  %v401 = vunpack.c.l.b16 %v49
  %v402 = vunpack.c.h.b16 %v49
  %v403 = vunpack.c.l.b16 %v50
  %v404 = vunpack.c.h.b16 %v50
  %v405 = vunpack.c.l.b16 %v51
  %v406 = vunpack.c.h.b16 %v51
  %v407 = vunpack.c.l.b16 %v52
  %v408 = vunpack.c.h.b16 %v52
  %v409 = vunpack.c.l.b16 %v53
  %v410 = vunpack.c.h.b16 %v53
  %v411 = vunpack.c.l.b16 %v54
  %v412 = vunpack.c.h.b16 %v54
  %v413 = vunpack.c.l.b16 %v55
  %v414 = vunpack.c.h.b16 %v55
  %v415 = vunpack.c.l.b16 %v56
  %v416 = vunpack.c.h.b16 %v56
  %v417 = vunpack.c.l.b16 %v57
  %v418 = vunpack.c.h.b16 %v57
  %v419 = vunpack.c.l.b16 %v58
  %v420 = vunpack.c.h.b16 %v58
  %v421 = vunpack.c.l.b16 %v59
  %v422 = vunpack.c.h.b16 %v59
  %v423 = vunpack.c.l.b16 %v60
  %v424 = vunpack.c.h.b16 %v60
  %v425 = vunpack.c.l.b16 %v61
  %v426 = vunpack.c.h.b16 %v61
  %v427 = vunpack.c.l.b16 %v62
  %v428 = vunpack.c.h.b16 %v62
  %v429 = vunpack.c.l.b16 %v63
  %v430 = vunpack.c.h.b16 %v63
  %v431 = vunpack.c.l.b16 %v64
  %v432 = vunpack.c.h.b16 %v64
  %v433 = vunpack.c.l.b16 %v65
  %v434 = vunpack.c.h.b16 %v65
  %v435 = vunpack.c.l.b16 %v66
  %v436 = vunpack.c.h.b16 %v66
  %v437 = vunpack.c.l.b16 %v67
  %v438 = vunpack.c.h.b16 %v67
  %v439 = vunpack.c.l.b16 %v68
  %v440 = vunpack.c.h.b16 %v68
  %v441 = vunpack.c.l.b16 %v69
  %v442 = vunpack.c.h.b16 %v69
  %v443 = vunpack.c.l.b16 %v70
  %v444 = vunpack.c.h.b16 %v70
  %v445 = vunpack.c.l.b16 %v71
  %v446 = vunpack.c.h.b16 %v71
  %v447 = vunpack.c.l.b16 %v72
  %v448 = vunpack.c.h.b16 %v72
  %v449 = vunpack.c.l.b16 %v73
  %v450 = vunpack.c.h.b16 %v73
  %v451 = vunpack.c.l.b16 %v74
  %v452 = vunpack.c.h.b16 %v74
  %v453 = vunpack.c.l.b16 %v75
  %v454 = vunpack.c.h.b16 %v75
  %v455 = vunpack.c.l.b16 %v76
  %v456 = vunpack.c.h.b16 %v76
  %v457 = vunpack.c.l.b16 %v77
  %v458 = vunpack.c.h.b16 %v77
  %v459 = vunpack.c.l.b16 %v78
  %v460 = vunpack.c.h.b16 %v78
  %v461 = vunpack.c.l.b16 %v79
  %v462 = vunpack.c.h.b16 %v79
  %v463 = vunpack.c.l.b16 %v80
  %v464 = vunpack.c.h.b16 %v80
  %v465 = vunpack.c.l.b16 %v81
  %v466 = vunpack.c.h.b16 %v81
  %v467 = vunpack.c.l.b16 %v82
  %v468 = vunpack.c.h.b16 %v82
  %v469 = vunpack.c.l.b16 %v83
  %v470 = vunpack.c.h.b16 %v83
  %v471 = vunpack.c.l.b16 %v84
  %v472 = vunpack.c.h.b16 %v84
  %v473 = vunpack.c.l.b16 %v85
  %v474 = vunpack.c.h.b16 %v85
  %v475 = vunpack.c.l.b16 %v86
  %v476 = vunpack.c.h.b16 %v86
  %v477 = vunpack.c.l.b16 %v87
  %v478 = vunpack.c.h.b16 %v87
  %v479 = vunpack.c.l.b16 %v88
  %v480 = vunpack.c.h.b16 %v88
  %v481 = vunpack.c.l.b16 %v89
  %v482 = vunpack.c.h.b16 %v89
  %v483 = vunpack.c.l.b16 %v90
  %v484 = vunpack.c.h.b16 %v90
  %v485 = vunpack.c.l.b16 %v91
  %v486 = vunpack.c.h.b16 %v91
  %v487 = vunpack.c.l.b16 %v92
  %v488 = vunpack.c.h.b16 %v92
  %v489 = vunpack.c.l.b16 %v93
  %v490 = vunpack.c.h.b16 %v93
  %v491 = vunpack.c.l.b16 %v94
  %v492 = vunpack.c.h.b16 %v94
  %v493 = vunpack.c.l.b16 %v95
  %v494 = vunpack.c.h.b16 %v95
  %v495 = vunpack.c.l.b16 %v96
  %v496 = vunpack.c.h.b16 %v96
  %v497 = vunpack.c.l.b16 %v97
  %v498 = vunpack.c.h.b16 %v97
  %v499 = vunpack.c.l.b16 %v98
  %v500 = vunpack.c.h.b16 %v98
  %v501 = vunpack.c.l.b16 %v99
  %v502 = vunpack.c.h.b16 %v99
  %v503 = vunpack.c.l.b16 %v100
  %v504 = vunpack.c.h.b16 %v100
  %v505 = vunpack.c.l.b16 %v101
  %v506 = vunpack.c.h.b16 %v101
  %v507 = vunpack.c.l.b16 %v102
  %v508 = vunpack.c.h.b16 %v102
  %v509 = vunpack.c.l.b16 %v103
  %v510 = vunpack.c.h.b16 %v103
  %v511 = vunpack.c.l.b16 %v104
  %v512 = vunpack.c.h.b16 %v104
  %v513 = vunpack.c.l.b16 %v105
  %v514 = vunpack.c.h.b16 %v105
  %v515 = vunpack.c.l.b16 %v106
  %v516 = vunpack.c.h.b16 %v106
  %v517 = vunpack.c.l.b16 %v107
  %v518 = vunpack.c.h.b16 %v107
  %v519 = vunpack.c.l.b16 %v108
  %v520 = vunpack.c.h.b16 %v108
  %v521 = vunpack.c.l.b16 %v109
  %v522 = vunpack.c.h.b16 %v109
  %v523 = vunpack.c.l.b16 %v110
  %v524 = vunpack.c.h.b16 %v110
  %v525 = vunpack.c.l.b16 %v111
  %v526 = vunpack.c.h.b16 %v111
  %v527 = vunpack.c.l.b16 %v112
  %v528 = vunpack.c.h.b16 %v112
  %v529 = vunpack.c.l.b16 %v113
  %v530 = vunpack.c.h.b16 %v113
  %v531 = vunpack.c.l.b16 %v114
  %v532 = vunpack.c.h.b16 %v114
  %v533 = vunpack.c.l.b16 %v115
  %v534 = vunpack.c.h.b16 %v115
  %v535 = vunpack.c.l.b16 %v116
  %v536 = vunpack.c.h.b16 %v116
  %v537 = vunpack.c.l.b16 %v117
  %v538 = vunpack.c.h.b16 %v117
  %v539 = vunpack.c.l.b16 %v118
  %v540 = vunpack.c.h.b16 %v118
  %v541 = vunpack.c.l.b16 %v119
  %v542 = vunpack.c.h.b16 %v119
  %v543 = vunpack.c.l.b16 %v120
  %v544 = vunpack.c.h.b16 %v120
  %v545 = vunpack.c.l.b16 %v121
  %v546 = vunpack.c.h.b16 %v121
  %v547 = vunpack.c.l.b16 %v122
  %v548 = vunpack.c.h.b16 %v122
  %v549 = vunpack.c.l.b16 %v123
  %v550 = vunpack.c.h.b16 %v123
  %v551 = vunpack.c.l.b16 %v124
  %v552 = vunpack.c.h.b16 %v124
  %v553 = vunpack.c.l.b16 %v125
  %v554 = vunpack.c.h.b16 %v125
  %v555 = vunpack.c.l.b16 %v126
  %v556 = vunpack.c.h.b16 %v126
  %v557 = vunpack.c.l.b16 %v127
  %v558 = vunpack.c.h.b16 %v127
  %v559 = vunpack.c.l.b16 %v128
  %v560 = vunpack.c.h.b16 %v128
  %v561 = vunpack.c.l.b16 %v129
  %v562 = vunpack.c.h.b16 %v129
  %v563 = vunpack.c.l.b16 %v130
  %v564 = vunpack.c.h.b16 %v130
  %v565 = vunpack.c.l.b16 %v131
  %v566 = vunpack.c.h.b16 %v131
  %v567 = vunpack.c.l.b16 %v132
  %v568 = vunpack.c.h.b16 %v132
  %v569 = vunpack.c.l.b16 %v133
  %v570 = vunpack.c.h.b16 %v133
  %v571 = vunpack.c.l.b16 %v134
  %v572 = vunpack.c.h.b16 %v134
  %v573 = vunpack.c.l.b16 %v135
  %v574 = vunpack.c.h.b16 %v135
  %v575 = vunpack.c.l.b16 %v136
  %v576 = vunpack.c.h.b16 %v136
  %v577 = vunpack.c.l.b16 %v137
  %v578 = vunpack.c.h.b16 %v137
  %v579 = vunpack.c.l.b16 %v138
  %v580 = vunpack.c.h.b16 %v138
  %v581 = vunpack.c.l.b16 %v139
  %v582 = vunpack.c.h.b16 %v139
  %v583 = vunpack.c.l.b16 %v140
  %v584 = vunpack.c.h.b16 %v140
  %v585 = vunpack.c.l.b16 %v141
  %v586 = vunpack.c.h.b16 %v141
  %v587 = vunpack.c.l.b16 %v142
  %v588 = vunpack.c.h.b16 %v142
  %v589 = vunpack.c.l.b16 %v143
  %v590 = vunpack.c.h.b16 %v143
  %v591 = vunpack.c.l.b16 %v144
  %v592 = vunpack.c.h.b16 %v144
  %v593 = vpack.c.b16 %v341, %v337
  %v594 = vpack.c.b16 %v342, %v338
  %v595 = vpack.c.b16 %v343, %v339
  %v596 = vpack.c.b16 %v344, %v340
  %v597 = vpack.c.b16 %v349, %v345
  %v598 = vpack.c.b16 %v350, %v346
  %v599 = vpack.c.b16 %v351, %v347
  %v600 = vpack.c.b16 %v352, %v348
  %v601 = vpack.c.b16 %v357, %v353
  %v602 = vpack.c.b16 %v358, %v354
  %v603 = vpack.c.b16 %v359, %v355
  %v604 = vpack.c.b16 %v360, %v356
  %v605 = vpack.c.b16 %v365, %v361
  %v606 = vpack.c.b16 %v366, %v362
  %v607 = vpack.c.b16 %v367, %v363
  %v608 = vpack.c.b16 %v368, %v364
  %v609 = vpack.c.b16 %v373, %v369
  %v610 = vpack.c.b16 %v374, %v370
  %v611 = vpack.c.b16 %v375, %v371
  %v612 = vpack.c.b16 %v376, %v372
  %v613 = vpack.c.b16 %v381, %v377
  %v614 = vpack.c.b16 %v382, %v378
  %v615 = vpack.c.b16 %v383, %v379
  %v616 = vpack.c.b16 %v384, %v380
  %v617 = vpack.c.b16 %v389, %v385
  %v618 = vpack.c.b16 %v390, %v386
  %v619 = vpack.c.b16 %v391, %v387
  %v620 = vpack.c.b16 %v392, %v388
  %v621 = vpack.c.b16 %v397, %v393
  %v622 = vpack.c.b16 %v398, %v394
  %v623 = vpack.c.b16 %v399, %v395
  %v624 = vpack.c.b16 %v400, %v396
  %v625 = vpack.c.b16 %v405, %v401
  %v626 = vpack.c.b16 %v406, %v402
  %v627 = vpack.c.b16 %v407, %v403
  %v628 = vpack.c.b16 %v408, %v404
  %v629 = vpack.c.b16 %v413, %v409
  %v630 = vpack.c.b16 %v414, %v410
  %v631 = vpack.c.b16 %v415, %v411
  %v632 = vpack.c.b16 %v416, %v412
  %v633 = vpack.c.b16 %v421, %v417
  %v634 = vpack.c.b16 %v422, %v418
  %v635 = vpack.c.b16 %v423, %v419
  %v636 = vpack.c.b16 %v424, %v420
  %v637 = vpack.c.b16 %v429, %v425
  %v638 = vpack.c.b16 %v430, %v426
  %v639 = vpack.c.b16 %v431, %v427
  %v640 = vpack.c.b16 %v432, %v428
  %v641 = vpack.c.b16 %v437, %v433
  %v642 = vpack.c.b16 %v438, %v434
  %v643 = vpack.c.b16 %v439, %v435
  %v644 = vpack.c.b16 %v440, %v436
  %v645 = vpack.c.b16 %v445, %v441
  %v646 = vpack.c.b16 %v446, %v442
  %v647 = vpack.c.b16 %v447, %v443
  %v648 = vpack.c.b16 %v448, %v444
  %v649 = vpack.c.b16 %v453, %v449
  %v650 = vpack.c.b16 %v454, %v450
  %v651 = vpack.c.b16 %v455, %v451
  %v652 = vpack.c.b16 %v456, %v452
  %v653 = vpack.c.b16 %v461, %v457
  %v654 = vpack.c.b16 %v462, %v458
  %v655 = vpack.c.b16 %v463, %v459
  %v656 = vpack.c.b16 %v464, %v460
  %v657 = vpack.c.b16 %v469, %v465
  %v658 = vpack.c.b16 %v470, %v466
  %v659 = vpack.c.b16 %v471, %v467
  %v660 = vpack.c.b16 %v472, %v468
  %v661 = vpack.c.b16 %v477, %v473
  %v662 = vpack.c.b16 %v478, %v474
  %v663 = vpack.c.b16 %v479, %v475
  %v664 = vpack.c.b16 %v480, %v476
  %v665 = vpack.c.b16 %v485, %v481
  %v666 = vpack.c.b16 %v486, %v482
  %v667 = vpack.c.b16 %v487, %v483
  %v668 = vpack.c.b16 %v488, %v484
  %v669 = vpack.c.b16 %v493, %v489
  %v670 = vpack.c.b16 %v494, %v490
  %v671 = vpack.c.b16 %v495, %v491
  %v672 = vpack.c.b16 %v496, %v492
  %v673 = vpack.c.b16 %v501, %v497
  %v674 = vpack.c.b16 %v502, %v498
  %v675 = vpack.c.b16 %v503, %v499
  %v676 = vpack.c.b16 %v504, %v500
  %v677 = vpack.c.b16 %v509, %v505
  %v678 = vpack.c.b16 %v510, %v506
  %v679 = vpack.c.b16 %v511, %v507
  %v680 = vpack.c.b16 %v512, %v508
  %v681 = vpack.c.b16 %v517, %v513
  %v682 = vpack.c.b16 %v518, %v514
  %v683 = vpack.c.b16 %v519, %v515
  %v684 = vpack.c.b16 %v520, %v516
  %v685 = vpack.c.b16 %v525, %v521
  %v686 = vpack.c.b16 %v526, %v522
  %v687 = vpack.c.b16 %v527, %v523
  %v688 = vpack.c.b16 %v528, %v524
  %v689 = vpack.c.b16 %v533, %v529
  %v690 = vpack.c.b16 %v534, %v530
  %v691 = vpack.c.b16 %v535, %v531
  %v692 = vpack.c.b16 %v536, %v532
  %v693 = vpack.c.b16 %v541, %v537
  %v694 = vpack.c.b16 %v542, %v538
  %v695 = vpack.c.b16 %v543, %v539
  %v696 = vpack.c.b16 %v544, %v540
  %v697 = vpack.c.b16 %v549, %v545
  %v698 = vpack.c.b16 %v550, %v546
  %v699 = vpack.c.b16 %v551, %v547
  %v700 = vpack.c.b16 %v552, %v548
  %v701 = vpack.c.b16 %v557, %v553
  %v702 = vpack.c.b16 %v558, %v554
  %v703 = vpack.c.b16 %v559, %v555
  %v704 = vpack.c.b16 %v560, %v556
  %v705 = vpack.c.b16 %v565, %v561
  %v706 = vpack.c.b16 %v566, %v562
  %v707 = vpack.c.b16 %v567, %v563
  %v708 = vpack.c.b16 %v568, %v564
  %v709 = vpack.c.b16 %v573, %v569
  %v710 = vpack.c.b16 %v574, %v570
  %v711 = vpack.c.b16 %v575, %v571
  %v712 = vpack.c.b16 %v576, %v572
  %v713 = vpack.c.b16 %v581, %v577
  %v714 = vpack.c.b16 %v582, %v578
  %v715 = vpack.c.b16 %v583, %v579
  %v716 = vpack.c.b16 %v584, %v580
  %v717 = vpack.c.b16 %v589, %v585
  %v718 = vpack.c.b16 %v590, %v586
  %v719 = vpack.c.b16 %v591, %v587
  %v720 = vpack.c.b16 %v592, %v588
  %v913 = vunpack.c.l.b16 %v145
  %v914 = vunpack.c.l.b16 %v146
  %v915 = vunpack.c.l.b16 %v147
  %v916 = vunpack.c.l.b16 %v148
  %v917 = vunpack.c.l.b16 %v149
  %v918 = vunpack.c.l.b16 %v150
  %v919 = vunpack.c.l.b16 %v151
  %v920 = vunpack.c.l.b16 %v152
  %v921 = vunpack.c.l.b16 %v153
  %v922 = vunpack.c.l.b16 %v154
  %v923 = vunpack.c.l.b16 %v155
  %v924 = vunpack.c.l.b16 %v156
  %v925 = vunpack.c.l.b16 %v157
  %v926 = vunpack.c.l.b16 %v158
  %v927 = vunpack.c.l.b16 %v159
  %v928 = vunpack.c.l.b16 %v160
  %v929 = vunpack.c.l.b16 %v161
  %v930 = vunpack.c.l.b16 %v162
  %v931 = vunpack.c.l.b16 %v163
  %v932 = vunpack.c.l.b16 %v164
  %v933 = vunpack.c.l.b16 %v165
  %v934 = vunpack.c.l.b16 %v166
  %v935 = vunpack.c.l.b16 %v167
  %v936 = vunpack.c.l.b16 %v168
  %v937 = vunpack.c.l.b16 %v169
  %v938 = vunpack.c.l.b16 %v170
  %v939 = vunpack.c.l.b16 %v171
  %v940 = vunpack.c.l.b16 %v172
  %v941 = vunpack.c.l.b16 %v173
  %v942 = vunpack.c.l.b16 %v174
  %v943 = vunpack.c.l.b16 %v175
  %v944 = vunpack.c.l.b16 %v176
  %v945 = vunpack.c.l.b16 %v177
  %v946 = vunpack.c.l.b16 %v178
  %v947 = vunpack.c.l.b16 %v179
  %v948 = vunpack.c.l.b16 %v180
  %v949 = vunpack.c.l.b16 %v181
  %v950 = vunpack.c.l.b16 %v182
  %v951 = vunpack.c.l.b16 %v183
  %v952 = vunpack.c.l.b16 %v184
  %v953 = vunpack.c.l.b16 %v185
  %v954 = vunpack.c.l.b16 %v186
  %v955 = vunpack.c.l.b16 %v187
  %v956 = vunpack.c.l.b16 %v188
  %v957 = vunpack.c.l.b16 %v189
  %v958 = vunpack.c.l.b16 %v190
  %v959 = vunpack.c.l.b16 %v191
  %v960 = vunpack.c.l.b16 %v192
  %v961 = vunpack.c.l.b16 %v193
  %v962 = vunpack.c.l.b16 %v194
  %v963 = vunpack.c.l.b16 %v195
  %v964 = vunpack.c.l.b16 %v196
  %v965 = vunpack.c.l.b16 %v197
  %v966 = vunpack.c.l.b16 %v198
  %v967 = vunpack.c.l.b16 %v199
  %v968 = vunpack.c.l.b16 %v200
  %v969 = vunpack.c.l.b16 %v201
  %v970 = vunpack.c.l.b16 %v202
  %v971 = vunpack.c.l.b16 %v203
  %v972 = vunpack.c.l.b16 %v204
  %v973 = vunpack.c.l.b16 %v205
  %v974 = vunpack.c.l.b16 %v206
  %v975 = vunpack.c.l.b16 %v207
  %v976 = vunpack.c.l.b16 %v208
  %v977 = vpack.c.b16 %v914, %v913
  %v978 = vpack.c.b16 %v916, %v915
  %v979 = vpack.c.b16 %v918, %v917
  %v980 = vpack.c.b16 %v920, %v919
  %v981 = vpack.c.b16 %v922, %v921
  %v982 = vpack.c.b16 %v924, %v923
  %v983 = vpack.c.b16 %v926, %v925
  %v984 = vpack.c.b16 %v928, %v927
  %v985 = vpack.c.b16 %v930, %v929
  %v986 = vpack.c.b16 %v932, %v931
  %v987 = vpack.c.b16 %v934, %v933
  %v988 = vpack.c.b16 %v936, %v935
  %v989 = vpack.c.b16 %v938, %v937
  %v990 = vpack.c.b16 %v940, %v939
  %v991 = vpack.c.b16 %v942, %v941
  %v992 = vpack.c.b16 %v944, %v943
  %v993 = vpack.c.b16 %v946, %v945
  %v994 = vpack.c.b16 %v948, %v947
  %v995 = vpack.c.b16 %v950, %v949
  %v996 = vpack.c.b16 %v952, %v951
  %v997 = vpack.c.b16 %v954, %v953
  %v998 = vpack.c.b16 %v956, %v955
  %v999 = vpack.c.b16 %v958, %v957
  %v1000 = vpack.c.b16 %v960, %v959
  %v1001 = vpack.c.b16 %v962, %v961
  %v1002 = vpack.c.b16 %v964, %v963
  %v1003 = vpack.c.b16 %v966, %v965
  %v1004 = vpack.c.b16 %v968, %v967
  %v1005 = vpack.c.b16 %v970, %v969
  %v1006 = vpack.c.b16 %v972, %v971
  %v1007 = vpack.c.b16 %v974, %v973
  %v1008 = vpack.c.b16 %v976, %v975
  %1041 = vmatprep.subr.bf16.mxu0 0
  %1042 = vmatpush1.bf16.msra.mxu0 %v977
  %1043 = vmatprep.subr.bf16.mxu0 0
  %1044 = vmatpush1.bf16.msra.mxu0 %v978
  %1045 = vmatprep.subr.bf16.mxu0 0
  %1046 = vmatpush1.bf16.msra.mxu0 %v979
  %1047 = vmatprep.subr.bf16.mxu0 0
  %1048 = vmatpush1.bf16.msra.mxu0 %v980
  %1049 = vmatprep.subr.bf16.mxu0 0
  %1050 = vmatpush1.bf16.msra.mxu0 %v981
  %1051 = vmatprep.subr.bf16.mxu0 0
  %1052 = vmatpush1.bf16.msra.mxu0 %v982
  %1053 = vmatprep.subr.bf16.mxu0 0
  %1054 = vmatpush1.bf16.msra.mxu0 %v983
  %1055 = vmatprep.subr.bf16.mxu0 0
  %1056 = vmatpush1.bf16.msra.mxu0 %v984
  %1057 = vmatprep.subr.bf16.mxu0 0
  %1058 = vmatpush1.bf16.msra.mxu0 %v985
  %1059 = vmatprep.subr.bf16.mxu0 0
  %1060 = vmatpush1.bf16.msra.mxu0 %v986
  %1061 = vmatprep.subr.bf16.mxu0 0
  %1062 = vmatpush1.bf16.msra.mxu0 %v987
  %1063 = vmatprep.subr.bf16.mxu0 0
  %1064 = vmatpush1.bf16.msra.mxu0 %v988
  %1065 = vmatprep.subr.bf16.mxu0 0
  %1066 = vmatpush1.bf16.msra.mxu0 %v989
  %1067 = vmatprep.subr.bf16.mxu0 0
  %1068 = vmatpush1.bf16.msra.mxu0 %v990
  %1069 = vmatprep.subr.bf16.mxu0 0
  %1070 = vmatpush1.bf16.msra.mxu0 %v991
  %1071 = vmatprep.subr.bf16.mxu0 0
  %1072 = vmatpush1.bf16.msra.mxu0 %v992
  %1073 = vmatprep.mubr.bf16.mxu0 %v594
  %1074 = vmatmul.mubr.bf16.gmra.mrb[0].mxu0 %v593
  %v1075 = vpop.f32.mrb[0].mxu0
  %v1076 = vadd.f32 0.0, %v1075
  %v1077 = vpop.f32.mrb[0].mxu0
  %v1078 = vpop.f32.mrb[0].mxu0
  %v1079 = vadd.f32 0.0, %v1078
  %v1080 = vpop.f32.mrb[0].mxu0
  %1081 = vmatprep.mubr.bf16.mxu0 %v598
  %1082 = vmatmul.mubr.bf16.gmra.mrb[0].mxu0 %v597
  %v1083 = vpop.f32.mrb[0].mxu0
  %v1084 = vadd.f32 0.0, %v1083
  %v1085 = vpop.f32.mrb[0].mxu0
  %v1086 = vpop.f32.mrb[0].mxu0
  %v1087 = vadd.f32 0.0, %v1086
  %v1088 = vpop.f32.mrb[0].mxu0
  %1089 = vmatprep.mubr.bf16.mxu0 %v602
  %1090 = vmatmul.mubr.bf16.gmra.mrb[0].mxu0 %v601
  %v1091 = vpop.f32.mrb[0].mxu0
  %v1092 = vadd.f32 0.0, %v1091
  %v1093 = vpop.f32.mrb[0].mxu0
  %v1094 = vpop.f32.mrb[0].mxu0
  %v1095 = vadd.f32 0.0, %v1094
  %v1096 = vpop.f32.mrb[0].mxu0
  %1097 = vmatprep.mubr.bf16.mxu0 %v606
  %1098 = vmatmul.mubr.bf16.gmra.mrb[0].mxu0 %v605
  %v1099 = vpop.f32.mrb[0].mxu0
  %v1100 = vadd.f32 0.0, %v1099
  %v1101 = vpop.f32.mrb[0].mxu0
  %v1102 = vpop.f32.mrb[0].mxu0
  %v1103 = vadd.f32 0.0, %v1102
  %v1104 = vpop.f32.mrb[0].mxu0
  %1105 = vmatprep.mubr.bf16.mxu0 %v610
  %1106 = vmatmul.mubr.bf16.gmra.mrb[0].mxu0 %v609
  %v1107 = vpop.f32.mrb[0].mxu0
  %v1108 = vadd.f32 0.0, %v1107
  %v1109 = vpop.f32.mrb[0].mxu0
  %v1110 = vpop.f32.mrb[0].mxu0
  %v1111 = vadd.f32 0.0, %v1110
  %v1112 = vpop.f32.mrb[0].mxu0
  %1113 = vmatprep.mubr.bf16.mxu0 %v614
  %1114 = vmatmul.mubr.bf16.gmra.mrb[0].mxu0 %v613
  %v1115 = vpop.f32.mrb[0].mxu0
  %v1116 = vadd.f32 0.0, %v1115
  %v1117 = vpop.f32.mrb[0].mxu0
  %v1118 = vpop.f32.mrb[0].mxu0
  %v1119 = vadd.f32 0.0, %v1118
  %v1120 = vpop.f32.mrb[0].mxu0
  %1121 = vmatprep.mubr.bf16.mxu0 %v618
  %1122 = vmatmul.mubr.bf16.gmra.mrb[0].mxu0 %v617
  %v1123 = vpop.f32.mrb[0].mxu0
  %v1124 = vadd.f32 0.0, %v1123
  %v1125 = vpop.f32.mrb[0].mxu0
  %v1126 = vpop.f32.mrb[0].mxu0
  %v1127 = vadd.f32 0.0, %v1126
  %v1128 = vpop.f32.mrb[0].mxu0
  %1129 = vmatprep.mubr.bf16.mxu0 %v622
  %1130 = vmatmul.mubr.bf16.gmra.mrb[0].mxu0 %v621
  %v1131 = vpop.f32.mrb[0].mxu0
  %v1132 = vadd.f32 0.0, %v1131
  %v1133 = vpop.f32.mrb[0].mxu0
  %v1134 = vpop.f32.mrb[0].mxu0
  %v1135 = vadd.f32 0.0, %v1134
  %v1136 = vpop.f32.mrb[0].mxu0
  %1137 = vmatprep.mubr.bf16.mxu0 %v626
  %1138 = vmatmul.mubr.bf16.gmra.mrb[0].mxu0 %v625
  %v1139 = vpop.f32.mrb[0].mxu0
  %v1140 = vadd.f32 0.0, %v1139
  %v1141 = vpop.f32.mrb[0].mxu0
  %v1142 = vpop.f32.mrb[0].mxu0
  %v1143 = vadd.f32 0.0, %v1142
  %v1144 = vpop.f32.mrb[0].mxu0
  %1145 = vmatprep.mubr.bf16.mxu0 %v630
  %1146 = vmatmul.mubr.bf16.gmra.mrb[0].mxu0 %v629
  %v1147 = vpop.f32.mrb[0].mxu0
  %v1148 = vadd.f32 0.0, %v1147
  %v1149 = vpop.f32.mrb[0].mxu0
  %v1150 = vpop.f32.mrb[0].mxu0
  %v1151 = vadd.f32 0.0, %v1150
  %v1152 = vpop.f32.mrb[0].mxu0
  %1153 = vmatprep.mubr.bf16.mxu0 %v634
  %1154 = vmatmul.mubr.bf16.gmra.mrb[0].mxu0 %v633
  %v1155 = vpop.f32.mrb[0].mxu0
  %v1156 = vadd.f32 0.0, %v1155
  %v1157 = vpop.f32.mrb[0].mxu0
  %v1158 = vpop.f32.mrb[0].mxu0
  %v1159 = vadd.f32 0.0, %v1158
  %v1160 = vpop.f32.mrb[0].mxu0
  %1161 = vmatprep.mubr.bf16.mxu0 %v638
  %1162 = vmatmul.mubr.bf16.gmra.mrb[0].mxu0 %v637
  %v1163 = vpop.f32.mrb[0].mxu0
  %v1164 = vadd.f32 0.0, %v1163
  %v1165 = vpop.f32.mrb[0].mxu0
  %v1166 = vpop.f32.mrb[0].mxu0
  %v1167 = vadd.f32 0.0, %v1166
  %v1168 = vpop.f32.mrb[0].mxu0
  %1169 = vmatprep.mubr.bf16.mxu0 %v642
  %1170 = vmatmul.mubr.bf16.gmra.mrb[0].mxu0 %v641
  %v1171 = vpop.f32.mrb[0].mxu0
  %v1172 = vadd.f32 0.0, %v1171
  %v1173 = vpop.f32.mrb[0].mxu0
  %v1174 = vpop.f32.mrb[0].mxu0
  %v1175 = vadd.f32 0.0, %v1174
  %v1176 = vpop.f32.mrb[0].mxu0
  %1177 = vmatprep.mubr.bf16.mxu0 %v646
  %1178 = vmatmul.mubr.bf16.gmra.mrb[0].mxu0 %v645
  %v1179 = vpop.f32.mrb[0].mxu0
  %v1180 = vadd.f32 0.0, %v1179
  %v1181 = vpop.f32.mrb[0].mxu0
  %v1182 = vpop.f32.mrb[0].mxu0
  %v1183 = vadd.f32 0.0, %v1182
  %v1184 = vpop.f32.mrb[0].mxu0
  %1185 = vmatprep.mubr.bf16.mxu0 %v650
  %1186 = vmatmul.mubr.bf16.gmra.mrb[0].mxu0 %v649
  %v1187 = vpop.f32.mrb[0].mxu0
  %v1188 = vadd.f32 0.0, %v1187
  %v1189 = vpop.f32.mrb[0].mxu0
  %v1190 = vpop.f32.mrb[0].mxu0
  %v1191 = vadd.f32 0.0, %v1190
  %v1192 = vpop.f32.mrb[0].mxu0
  %1193 = vmatprep.mubr.bf16.mxu0 %v654
  %1194 = vmatmul.mubr.bf16.gmra.mrb[0].mxu0 %v653
  %v1195 = vpop.f32.mrb[0].mxu0
  %v1196 = vadd.f32 0.0, %v1195
  %v1197 = vpop.f32.mrb[0].mxu0
  %v1198 = vpop.f32.mrb[0].mxu0
  %v1199 = vadd.f32 0.0, %v1198
  %v1200 = vpop.f32.mrb[0].mxu0
  %1201 = vmatprep.mubr.bf16.mxu0 %v658
  %1202 = vmatmul.mubr.bf16.gmra.mrb[0].mxu0 %v657
  %v1203 = vpop.f32.mrb[0].mxu0
  %v1204 = vadd.f32 0.0, %v1203
  %v1205 = vpop.f32.mrb[0].mxu0
  %v1206 = vpop.f32.mrb[0].mxu0
  %v1207 = vadd.f32 0.0, %v1206
  %v1208 = vpop.f32.mrb[0].mxu0
  %1209 = vmatprep.mubr.bf16.mxu0 %v662
  %1210 = vmatmul.mubr.bf16.gmra.mrb[0].mxu0 %v661
  %v1211 = vpop.f32.mrb[0].mxu0
  %v1212 = vadd.f32 0.0, %v1211
  %v1213 = vpop.f32.mrb[0].mxu0
  %v1214 = vpop.f32.mrb[0].mxu0
  %v1215 = vadd.f32 0.0, %v1214
  %v1216 = vpop.f32.mrb[0].mxu0
  %1217 = vmatprep.mubr.bf16.mxu0 %v666
  %1218 = vmatmul.mubr.bf16.gmra.mrb[0].mxu0 %v665
  %v1219 = vpop.f32.mrb[0].mxu0
  %v1220 = vadd.f32 0.0, %v1219
  %v1221 = vpop.f32.mrb[0].mxu0
  %v1222 = vpop.f32.mrb[0].mxu0
  %v1223 = vadd.f32 0.0, %v1222
  %v1224 = vpop.f32.mrb[0].mxu0
  %1225 = vmatprep.mubr.bf16.mxu0 %v670
  %1226 = vmatmul.mubr.bf16.gmra.mrb[0].mxu0 %v669
  %v1227 = vpop.f32.mrb[0].mxu0
  %v1228 = vadd.f32 0.0, %v1227
  %v1229 = vpop.f32.mrb[0].mxu0
  %v1230 = vpop.f32.mrb[0].mxu0
  %v1231 = vadd.f32 0.0, %v1230
  %v1232 = vpop.f32.mrb[0].mxu0
  %1233 = vmatprep.mubr.bf16.mxu0 %v674
  %1234 = vmatmul.mubr.bf16.gmra.mrb[0].mxu0 %v673
  %v1235 = vpop.f32.mrb[0].mxu0
  %v1236 = vadd.f32 0.0, %v1235
  %v1237 = vpop.f32.mrb[0].mxu0
  %v1238 = vpop.f32.mrb[0].mxu0
  %v1239 = vadd.f32 0.0, %v1238
  %v1240 = vpop.f32.mrb[0].mxu0
  %1241 = vmatprep.mubr.bf16.mxu0 %v678
  %1242 = vmatmul.mubr.bf16.gmra.mrb[0].mxu0 %v677
  %v1243 = vpop.f32.mrb[0].mxu0
  %v1244 = vadd.f32 0.0, %v1243
  %v1245 = vpop.f32.mrb[0].mxu0
  %v1246 = vpop.f32.mrb[0].mxu0
  %v1247 = vadd.f32 0.0, %v1246
  %v1248 = vpop.f32.mrb[0].mxu0
  %1249 = vmatprep.mubr.bf16.mxu0 %v682
  %1250 = vmatmul.mubr.bf16.gmra.mrb[0].mxu0 %v681
  %v1251 = vpop.f32.mrb[0].mxu0
  %v1252 = vadd.f32 0.0, %v1251
  %v1253 = vpop.f32.mrb[0].mxu0
  %v1254 = vpop.f32.mrb[0].mxu0
  %v1255 = vadd.f32 0.0, %v1254
  %v1256 = vpop.f32.mrb[0].mxu0
  %1257 = vmatprep.mubr.bf16.mxu0 %v686
  %1258 = vmatmul.mubr.bf16.gmra.mrb[0].mxu0 %v685
  %v1259 = vpop.f32.mrb[0].mxu0
  %v1260 = vadd.f32 0.0, %v1259
  %v1261 = vpop.f32.mrb[0].mxu0
  %v1262 = vpop.f32.mrb[0].mxu0
  %v1263 = vadd.f32 0.0, %v1262
  %v1264 = vpop.f32.mrb[0].mxu0
  %1265 = vmatprep.mubr.bf16.mxu0 %v690
  %1266 = vmatmul.mubr.bf16.gmra.mrb[0].mxu0 %v689
  %v1267 = vpop.f32.mrb[0].mxu0
  %v1268 = vadd.f32 0.0, %v1267
  %v1269 = vpop.f32.mrb[0].mxu0
  %v1270 = vpop.f32.mrb[0].mxu0
  %v1271 = vadd.f32 0.0, %v1270
  %v1272 = vpop.f32.mrb[0].mxu0
  %1273 = vmatprep.mubr.bf16.mxu0 %v694
  %1274 = vmatmul.mubr.bf16.gmra.mrb[0].mxu0 %v693
  %v1275 = vpop.f32.mrb[0].mxu0
  %v1276 = vadd.f32 0.0, %v1275
  %v1277 = vpop.f32.mrb[0].mxu0
  %v1278 = vpop.f32.mrb[0].mxu0
  %v1279 = vadd.f32 0.0, %v1278
  %v1280 = vpop.f32.mrb[0].mxu0
  %1281 = vmatprep.mubr.bf16.mxu0 %v698
  %1282 = vmatmul.mubr.bf16.gmra.mrb[0].mxu0 %v697
  %v1283 = vpop.f32.mrb[0].mxu0
  %v1284 = vadd.f32 0.0, %v1283
  %v1285 = vpop.f32.mrb[0].mxu0
  %v1286 = vpop.f32.mrb[0].mxu0
  %v1287 = vadd.f32 0.0, %v1286
  %v1288 = vpop.f32.mrb[0].mxu0
  %1289 = vmatprep.mubr.bf16.mxu0 %v702
  %1290 = vmatmul.mubr.bf16.gmra.mrb[0].mxu0 %v701
  %v1291 = vpop.f32.mrb[0].mxu0
  %v1292 = vadd.f32 0.0, %v1291
  %v1293 = vpop.f32.mrb[0].mxu0
  %v1294 = vpop.f32.mrb[0].mxu0
  %v1295 = vadd.f32 0.0, %v1294
  %v1296 = vpop.f32.mrb[0].mxu0
  %1297 = vmatprep.mubr.bf16.mxu0 %v706
  %1298 = vmatmul.mubr.bf16.gmra.mrb[0].mxu0 %v705
  %v1299 = vpop.f32.mrb[0].mxu0
  %v1300 = vadd.f32 0.0, %v1299
  %v1301 = vpop.f32.mrb[0].mxu0
  %v1302 = vpop.f32.mrb[0].mxu0
  %v1303 = vadd.f32 0.0, %v1302
  %v1304 = vpop.f32.mrb[0].mxu0
  %1305 = vmatprep.mubr.bf16.mxu0 %v710
  %1306 = vmatmul.mubr.bf16.gmra.mrb[0].mxu0 %v709
  %v1307 = vpop.f32.mrb[0].mxu0
  %v1308 = vadd.f32 0.0, %v1307
  %v1309 = vpop.f32.mrb[0].mxu0
  %v1310 = vpop.f32.mrb[0].mxu0
  %v1311 = vadd.f32 0.0, %v1310
  %v1312 = vpop.f32.mrb[0].mxu0
  %1313 = vmatprep.mubr.bf16.mxu0 %v714
  %1314 = vmatmul.mubr.bf16.gmra.mrb[0].mxu0 %v713
  %v1315 = vpop.f32.mrb[0].mxu0
  %v1316 = vadd.f32 0.0, %v1315
  %v1317 = vpop.f32.mrb[0].mxu0
  %v1318 = vpop.f32.mrb[0].mxu0
  %v1319 = vadd.f32 0.0, %v1318
  %v1320 = vpop.f32.mrb[0].mxu0
  %1321 = vmatprep.mubr.bf16.mxu0 %v718
  %1322 = vmatmul.mubr.bf16.gmra.mrb[0].mxu0 %v717
  %v1323 = vpop.f32.mrb[0].mxu0
  %v1324 = vadd.f32 0.0, %v1323
  %v1325 = vpop.f32.mrb[0].mxu0
  %v1326 = vpop.f32.mrb[0].mxu0
  %v1327 = vadd.f32 0.0, %v1326
  %v1328 = vpop.f32.mrb[0].mxu0
  %1329 = vdwg.mxu0
  %1330 = vmatprep.subr.bf16.mxu0 0
  %1331 = vmatpush1.bf16.msra.mxu0 %v993
  %1332 = vmatprep.subr.bf16.mxu0 0
  %1333 = vmatpush1.bf16.msra.mxu0 %v994
  %1334 = vmatprep.subr.bf16.mxu0 0
  %1335 = vmatpush1.bf16.msra.mxu0 %v995
  %1336 = vmatprep.subr.bf16.mxu0 0
  %1337 = vmatpush1.bf16.msra.mxu0 %v996
  %1338 = vmatprep.subr.bf16.mxu0 0
  %1339 = vmatpush1.bf16.msra.mxu0 %v997
  %1340 = vmatprep.subr.bf16.mxu0 0
  %1341 = vmatpush1.bf16.msra.mxu0 %v998
  %1342 = vmatprep.subr.bf16.mxu0 0
  %1343 = vmatpush1.bf16.msra.mxu0 %v999
  %1344 = vmatprep.subr.bf16.mxu0 0
  %1345 = vmatpush1.bf16.msra.mxu0 %v1000
  %1346 = vmatprep.subr.bf16.mxu0 0
  %1347 = vmatpush1.bf16.msra.mxu0 %v1001
  %1348 = vmatprep.subr.bf16.mxu0 0
  %1349 = vmatpush1.bf16.msra.mxu0 %v1002
  %1350 = vmatprep.subr.bf16.mxu0 0
  %1351 = vmatpush1.bf16.msra.mxu0 %v1003
  %1352 = vmatprep.subr.bf16.mxu0 0
  %1353 = vmatpush1.bf16.msra.mxu0 %v1004
  %1354 = vmatprep.subr.bf16.mxu0 0
  %1355 = vmatpush1.bf16.msra.mxu0 %v1005
  %1356 = vmatprep.subr.bf16.mxu0 0
  %1357 = vmatpush1.bf16.msra.mxu0 %v1006
  %1358 = vmatprep.subr.bf16.mxu0 0
  %1359 = vmatpush1.bf16.msra.mxu0 %v1007
  %1360 = vmatprep.subr.bf16.mxu0 0
  %1361 = vmatpush1.bf16.msra.mxu0 %v1008
  %1362 = vmatprep.mubr.bf16.mxu0 %v596
  %1363 = vmatmul.mubr.bf16.gmra.mrb[0].mxu0 %v595
  %v1364 = vpop.f32.mrb[0].mxu0
  %v1365 = vadd.f32 %v1076, %v1364
  %v1366 = vpop.f32.mrb[0].mxu0
  %v1367 = vpop.f32.mrb[0].mxu0
  %v1368 = vadd.f32 %v1079, %v1367
  %v1369 = vpop.f32.mrb[0].mxu0
  %1370 = vmatprep.mubr.bf16.mxu0 %v600
  %1371 = vmatmul.mubr.bf16.gmra.mrb[0].mxu0 %v599
  %v1372 = vpop.f32.mrb[0].mxu0
  %v1373 = vadd.f32 %v1084, %v1372
  %v1374 = vpop.f32.mrb[0].mxu0
  %v1375 = vpop.f32.mrb[0].mxu0
  %v1376 = vadd.f32 %v1087, %v1375
  %v1377 = vpop.f32.mrb[0].mxu0
  %1378 = vmatprep.mubr.bf16.mxu0 %v604
  %1379 = vmatmul.mubr.bf16.gmra.mrb[0].mxu0 %v603
  %v1380 = vpop.f32.mrb[0].mxu0
  %v1381 = vadd.f32 %v1092, %v1380
  %v1382 = vpop.f32.mrb[0].mxu0
  %v1383 = vpop.f32.mrb[0].mxu0
  %v1384 = vadd.f32 %v1095, %v1383
  %v1385 = vpop.f32.mrb[0].mxu0
  %1386 = vmatprep.mubr.bf16.mxu0 %v608
  %1387 = vmatmul.mubr.bf16.gmra.mrb[0].mxu0 %v607
  %v1388 = vpop.f32.mrb[0].mxu0
  %v1389 = vadd.f32 %v1100, %v1388
  %v1390 = vpop.f32.mrb[0].mxu0
  %v1391 = vpop.f32.mrb[0].mxu0
  %v1392 = vadd.f32 %v1103, %v1391
  %v1393 = vpop.f32.mrb[0].mxu0
  %1394 = vmatprep.mubr.bf16.mxu0 %v612
  %1395 = vmatmul.mubr.bf16.gmra.mrb[0].mxu0 %v611
  %v1396 = vpop.f32.mrb[0].mxu0
  %v1397 = vadd.f32 %v1108, %v1396
  %v1398 = vpop.f32.mrb[0].mxu0
  %v1399 = vpop.f32.mrb[0].mxu0
  %v1400 = vadd.f32 %v1111, %v1399
  %v1401 = vpop.f32.mrb[0].mxu0
  %1402 = vmatprep.mubr.bf16.mxu0 %v616
  %1403 = vmatmul.mubr.bf16.gmra.mrb[0].mxu0 %v615
  %v1404 = vpop.f32.mrb[0].mxu0
  %v1405 = vadd.f32 %v1116, %v1404
  %v1406 = vpop.f32.mrb[0].mxu0
  %v1407 = vpop.f32.mrb[0].mxu0
  %v1408 = vadd.f32 %v1119, %v1407
  %v1409 = vpop.f32.mrb[0].mxu0
  %1410 = vmatprep.mubr.bf16.mxu0 %v620
  %1411 = vmatmul.mubr.bf16.gmra.mrb[0].mxu0 %v619
  %v1412 = vpop.f32.mrb[0].mxu0
  %v1413 = vadd.f32 %v1124, %v1412
  %v1414 = vpop.f32.mrb[0].mxu0
  %v1415 = vpop.f32.mrb[0].mxu0
  %v1416 = vadd.f32 %v1127, %v1415
  %v1417 = vpop.f32.mrb[0].mxu0
  %1418 = vmatprep.mubr.bf16.mxu0 %v624
  %1419 = vmatmul.mubr.bf16.gmra.mrb[0].mxu0 %v623
  %v1420 = vpop.f32.mrb[0].mxu0
  %v1421 = vadd.f32 %v1132, %v1420
  %v1422 = vpop.f32.mrb[0].mxu0
  %v1423 = vpop.f32.mrb[0].mxu0
  %v1424 = vadd.f32 %v1135, %v1423
  %v1425 = vpop.f32.mrb[0].mxu0
  %1426 = vmatprep.mubr.bf16.mxu0 %v628
  %1427 = vmatmul.mubr.bf16.gmra.mrb[0].mxu0 %v627
  %v1428 = vpop.f32.mrb[0].mxu0
  %v1429 = vadd.f32 %v1140, %v1428
  %v1430 = vpop.f32.mrb[0].mxu0
  %v1431 = vpop.f32.mrb[0].mxu0
  %v1432 = vadd.f32 %v1143, %v1431
  %v1433 = vpop.f32.mrb[0].mxu0
  %1434 = vmatprep.mubr.bf16.mxu0 %v632
  %1435 = vmatmul.mubr.bf16.gmra.mrb[0].mxu0 %v631
  %v1436 = vpop.f32.mrb[0].mxu0
  %v1437 = vadd.f32 %v1148, %v1436
  %v1438 = vpop.f32.mrb[0].mxu0
  %v1439 = vpop.f32.mrb[0].mxu0
  %v1440 = vadd.f32 %v1151, %v1439
  %v1441 = vpop.f32.mrb[0].mxu0
  %1442 = vmatprep.mubr.bf16.mxu0 %v636
  %1443 = vmatmul.mubr.bf16.gmra.mrb[0].mxu0 %v635
  %v1444 = vpop.f32.mrb[0].mxu0
  %v1445 = vadd.f32 %v1156, %v1444
  %v1446 = vpop.f32.mrb[0].mxu0
  %v1447 = vpop.f32.mrb[0].mxu0
  %v1448 = vadd.f32 %v1159, %v1447
  %v1449 = vpop.f32.mrb[0].mxu0
  %1450 = vmatprep.mubr.bf16.mxu0 %v640
  %1451 = vmatmul.mubr.bf16.gmra.mrb[0].mxu0 %v639
  %v1452 = vpop.f32.mrb[0].mxu0
  %v1453 = vadd.f32 %v1164, %v1452
  %v1454 = vpop.f32.mrb[0].mxu0
  %v1455 = vpop.f32.mrb[0].mxu0
  %v1456 = vadd.f32 %v1167, %v1455
  %v1457 = vpop.f32.mrb[0].mxu0
  %1458 = vmatprep.mubr.bf16.mxu0 %v644
  %1459 = vmatmul.mubr.bf16.gmra.mrb[0].mxu0 %v643
  %v1460 = vpop.f32.mrb[0].mxu0
  %v1461 = vadd.f32 %v1172, %v1460
  %v1462 = vpop.f32.mrb[0].mxu0
  %v1463 = vpop.f32.mrb[0].mxu0
  %v1464 = vadd.f32 %v1175, %v1463
  %v1465 = vpop.f32.mrb[0].mxu0
  %1466 = vmatprep.mubr.bf16.mxu0 %v648
  %1467 = vmatmul.mubr.bf16.gmra.mrb[0].mxu0 %v647
  %v1468 = vpop.f32.mrb[0].mxu0
  %v1469 = vadd.f32 %v1180, %v1468
  %v1470 = vpop.f32.mrb[0].mxu0
  %v1471 = vpop.f32.mrb[0].mxu0
  %v1472 = vadd.f32 %v1183, %v1471
  %v1473 = vpop.f32.mrb[0].mxu0
  %1474 = vmatprep.mubr.bf16.mxu0 %v652
  %1475 = vmatmul.mubr.bf16.gmra.mrb[0].mxu0 %v651
  %v1476 = vpop.f32.mrb[0].mxu0
  %v1477 = vadd.f32 %v1188, %v1476
  %v1478 = vpop.f32.mrb[0].mxu0
  %v1479 = vpop.f32.mrb[0].mxu0
  %v1480 = vadd.f32 %v1191, %v1479
  %v1481 = vpop.f32.mrb[0].mxu0
  %1482 = vmatprep.mubr.bf16.mxu0 %v656
  %1483 = vmatmul.mubr.bf16.gmra.mrb[0].mxu0 %v655
  %v1484 = vpop.f32.mrb[0].mxu0
  %v1485 = vadd.f32 %v1196, %v1484
  %v1486 = vpop.f32.mrb[0].mxu0
  %v1487 = vpop.f32.mrb[0].mxu0
  %v1488 = vadd.f32 %v1199, %v1487
  %v1489 = vpop.f32.mrb[0].mxu0
  %1490 = vmatprep.mubr.bf16.mxu0 %v660
  %1491 = vmatmul.mubr.bf16.gmra.mrb[0].mxu0 %v659
  %v1492 = vpop.f32.mrb[0].mxu0
  %v1493 = vadd.f32 %v1204, %v1492
  %v1494 = vpop.f32.mrb[0].mxu0
  %v1495 = vpop.f32.mrb[0].mxu0
  %v1496 = vadd.f32 %v1207, %v1495
  %v1497 = vpop.f32.mrb[0].mxu0
  %1498 = vmatprep.mubr.bf16.mxu0 %v664
  %1499 = vmatmul.mubr.bf16.gmra.mrb[0].mxu0 %v663
  %v1500 = vpop.f32.mrb[0].mxu0
  %v1501 = vadd.f32 %v1212, %v1500
  %v1502 = vpop.f32.mrb[0].mxu0
  %v1503 = vpop.f32.mrb[0].mxu0
  %v1504 = vadd.f32 %v1215, %v1503
  %v1505 = vpop.f32.mrb[0].mxu0
  %1506 = vmatprep.mubr.bf16.mxu0 %v668
  %1507 = vmatmul.mubr.bf16.gmra.mrb[0].mxu0 %v667
  %v1508 = vpop.f32.mrb[0].mxu0
  %v1509 = vadd.f32 %v1220, %v1508
  %v1510 = vpop.f32.mrb[0].mxu0
  %v1511 = vpop.f32.mrb[0].mxu0
  %v1512 = vadd.f32 %v1223, %v1511
  %v1513 = vpop.f32.mrb[0].mxu0
  %1514 = vmatprep.mubr.bf16.mxu0 %v672
  %1515 = vmatmul.mubr.bf16.gmra.mrb[0].mxu0 %v671
  %v1516 = vpop.f32.mrb[0].mxu0
  %v1517 = vadd.f32 %v1228, %v1516
  %v1518 = vpop.f32.mrb[0].mxu0
  %v1519 = vpop.f32.mrb[0].mxu0
  %v1520 = vadd.f32 %v1231, %v1519
  %v1521 = vpop.f32.mrb[0].mxu0
  %1522 = vmatprep.mubr.bf16.mxu0 %v676
  %1523 = vmatmul.mubr.bf16.gmra.mrb[0].mxu0 %v675
  %v1524 = vpop.f32.mrb[0].mxu0
  %v1525 = vadd.f32 %v1236, %v1524
  %v1526 = vpop.f32.mrb[0].mxu0
  %v1527 = vpop.f32.mrb[0].mxu0
  %v1528 = vadd.f32 %v1239, %v1527
  %v1529 = vpop.f32.mrb[0].mxu0
  %1530 = vmatprep.mubr.bf16.mxu0 %v680
  %1531 = vmatmul.mubr.bf16.gmra.mrb[0].mxu0 %v679
  %v1532 = vpop.f32.mrb[0].mxu0
  %v1533 = vadd.f32 %v1244, %v1532
  %v1534 = vpop.f32.mrb[0].mxu0
  %v1535 = vpop.f32.mrb[0].mxu0
  %v1536 = vadd.f32 %v1247, %v1535
  %v1537 = vpop.f32.mrb[0].mxu0
  %1538 = vmatprep.mubr.bf16.mxu0 %v684
  %1539 = vmatmul.mubr.bf16.gmra.mrb[0].mxu0 %v683
  %v1540 = vpop.f32.mrb[0].mxu0
  %v1541 = vadd.f32 %v1252, %v1540
  %v1542 = vpop.f32.mrb[0].mxu0
  %v1543 = vpop.f32.mrb[0].mxu0
  %v1544 = vadd.f32 %v1255, %v1543
  %v1545 = vpop.f32.mrb[0].mxu0
  %1546 = vmatprep.mubr.bf16.mxu0 %v688
  %1547 = vmatmul.mubr.bf16.gmra.mrb[0].mxu0 %v687
  %v1548 = vpop.f32.mrb[0].mxu0
  %v1549 = vadd.f32 %v1260, %v1548
  %v1550 = vpop.f32.mrb[0].mxu0
  %v1551 = vpop.f32.mrb[0].mxu0
  %v1552 = vadd.f32 %v1263, %v1551
  %v1553 = vpop.f32.mrb[0].mxu0
  %1554 = vmatprep.mubr.bf16.mxu0 %v692
  %1555 = vmatmul.mubr.bf16.gmra.mrb[0].mxu0 %v691
  %v1556 = vpop.f32.mrb[0].mxu0
  %v1557 = vadd.f32 %v1268, %v1556
  %v1558 = vpop.f32.mrb[0].mxu0
  %v1559 = vpop.f32.mrb[0].mxu0
  %v1560 = vadd.f32 %v1271, %v1559
  %v1561 = vpop.f32.mrb[0].mxu0
  %1562 = vmatprep.mubr.bf16.mxu0 %v696
  %1563 = vmatmul.mubr.bf16.gmra.mrb[0].mxu0 %v695
  %v1564 = vpop.f32.mrb[0].mxu0
  %v1565 = vadd.f32 %v1276, %v1564
  %v1566 = vpop.f32.mrb[0].mxu0
  %v1567 = vpop.f32.mrb[0].mxu0
  %v1568 = vadd.f32 %v1279, %v1567
  %v1569 = vpop.f32.mrb[0].mxu0
  %1570 = vmatprep.mubr.bf16.mxu0 %v700
  %1571 = vmatmul.mubr.bf16.gmra.mrb[0].mxu0 %v699
  %v1572 = vpop.f32.mrb[0].mxu0
  %v1573 = vadd.f32 %v1284, %v1572
  %v1574 = vpop.f32.mrb[0].mxu0
  %v1575 = vpop.f32.mrb[0].mxu0
  %v1576 = vadd.f32 %v1287, %v1575
  %v1577 = vpop.f32.mrb[0].mxu0
  %1578 = vmatprep.mubr.bf16.mxu0 %v704
  %1579 = vmatmul.mubr.bf16.gmra.mrb[0].mxu0 %v703
  %v1580 = vpop.f32.mrb[0].mxu0
  %v1581 = vadd.f32 %v1292, %v1580
  %v1582 = vpop.f32.mrb[0].mxu0
  %v1583 = vpop.f32.mrb[0].mxu0
  %v1584 = vadd.f32 %v1295, %v1583
  %v1585 = vpop.f32.mrb[0].mxu0
  %1586 = vmatprep.mubr.bf16.mxu0 %v708
  %1587 = vmatmul.mubr.bf16.gmra.mrb[0].mxu0 %v707
  %v1588 = vpop.f32.mrb[0].mxu0
  %v1589 = vadd.f32 %v1300, %v1588
  %v1590 = vpop.f32.mrb[0].mxu0
  %v1591 = vpop.f32.mrb[0].mxu0
  %v1592 = vadd.f32 %v1303, %v1591
  %v1593 = vpop.f32.mrb[0].mxu0
  %1594 = vmatprep.mubr.bf16.mxu0 %v712
  %1595 = vmatmul.mubr.bf16.gmra.mrb[0].mxu0 %v711
  %v1596 = vpop.f32.mrb[0].mxu0
  %v1597 = vadd.f32 %v1308, %v1596
  %v1598 = vpop.f32.mrb[0].mxu0
  %v1599 = vpop.f32.mrb[0].mxu0
  %v1600 = vadd.f32 %v1311, %v1599
  %v1601 = vpop.f32.mrb[0].mxu0
  %1602 = vmatprep.mubr.bf16.mxu0 %v716
  %1603 = vmatmul.mubr.bf16.gmra.mrb[0].mxu0 %v715
  %v1604 = vpop.f32.mrb[0].mxu0
  %v1605 = vadd.f32 %v1316, %v1604
  %v1606 = vpop.f32.mrb[0].mxu0
  %v1607 = vpop.f32.mrb[0].mxu0
  %v1608 = vadd.f32 %v1319, %v1607
  %v1609 = vpop.f32.mrb[0].mxu0
  %1610 = vmatprep.mubr.bf16.mxu0 %v720
  %1611 = vmatmul.mubr.bf16.gmra.mrb[0].mxu0 %v719
  %v1612 = vpop.f32.mrb[0].mxu0
  %v1613 = vadd.f32 %v1324, %v1612
  %v1614 = vpop.f32.mrb[0].mxu0
  %v1615 = vpop.f32.mrb[0].mxu0
  %v1616 = vadd.f32 %v1327, %v1615
  %v1617 = vpop.f32.mrb[0].mxu0
  %1618 = vdwg.mxu0
  %v1619 = vpack.c.bf16 %v1368, %v1365
  %v1620 = vpack.c.bf16 %v1376, %v1373
  %v1621 = vpack.c.bf16 %v1384, %v1381
  %v1622 = vpack.c.bf16 %v1392, %v1389
  %v1623 = vpack.c.bf16 %v1400, %v1397
  %v1624 = vpack.c.bf16 %v1408, %v1405
  %v1625 = vpack.c.bf16 %v1416, %v1413
  %v1626 = vpack.c.bf16 %v1424, %v1421
  %v1627 = vpack.c.bf16 %v1432, %v1429
  %v1628 = vpack.c.bf16 %v1440, %v1437
  %v1629 = vpack.c.bf16 %v1448, %v1445
  %v1630 = vpack.c.bf16 %v1456, %v1453
  %v1631 = vpack.c.bf16 %v1464, %v1461
  %v1632 = vpack.c.bf16 %v1472, %v1469
  %v1633 = vpack.c.bf16 %v1480, %v1477
  %v1634 = vpack.c.bf16 %v1488, %v1485
  %v1635 = vpack.c.bf16 %v1496, %v1493
  %v1636 = vpack.c.bf16 %v1504, %v1501
  %v1637 = vpack.c.bf16 %v1512, %v1509
  %v1638 = vpack.c.bf16 %v1520, %v1517
  %v1639 = vpack.c.bf16 %v1528, %v1525
  %v1640 = vpack.c.bf16 %v1536, %v1533
  %v1641 = vpack.c.bf16 %v1544, %v1541
  %v1642 = vpack.c.bf16 %v1552, %v1549
  %v1643 = vpack.c.bf16 %v1560, %v1557
  %v1644 = vpack.c.bf16 %v1568, %v1565
  %v1645 = vpack.c.bf16 %v1576, %v1573
  %v1646 = vpack.c.bf16 %v1584, %v1581
  %v1647 = vpack.c.bf16 %v1592, %v1589
  %v1648 = vpack.c.bf16 %v1600, %v1597
  %v1649 = vpack.c.bf16 %v1608, %v1605
  %v1650 = vpack.c.bf16 %v1616, %v1613
  %v1683 = vunpack.c.l.b16 %v1619
  %v1684 = vunpack.c.h.b16 %v1619
  %v1685 = vunpack.c.l.b16 %v1620
  %v1686 = vunpack.c.h.b16 %v1620
  %v1687 = vunpack.c.l.b16 %v1621
  %v1688 = vunpack.c.h.b16 %v1621
  %v1689 = vunpack.c.l.b16 %v1622
  %v1690 = vunpack.c.h.b16 %v1622
  %v1691 = vunpack.c.l.b16 %v1623
  %v1692 = vunpack.c.h.b16 %v1623
  %v1693 = vunpack.c.l.b16 %v1624
  %v1694 = vunpack.c.h.b16 %v1624
  %v1695 = vunpack.c.l.b16 %v1625
  %v1696 = vunpack.c.h.b16 %v1625
  %v1697 = vunpack.c.l.b16 %v1626
  %v1698 = vunpack.c.h.b16 %v1626
  %v1699 = vunpack.c.l.b16 %v1627
  %v1700 = vunpack.c.h.b16 %v1627
  %v1701 = vunpack.c.l.b16 %v1628
  %v1702 = vunpack.c.h.b16 %v1628
  %v1703 = vunpack.c.l.b16 %v1629
  %v1704 = vunpack.c.h.b16 %v1629
  %v1705 = vunpack.c.l.b16 %v1630
  %v1706 = vunpack.c.h.b16 %v1630
  %v1707 = vunpack.c.l.b16 %v1631
  %v1708 = vunpack.c.h.b16 %v1631
  %v1709 = vunpack.c.l.b16 %v1632
  %v1710 = vunpack.c.h.b16 %v1632
  %v1711 = vunpack.c.l.b16 %v1633
  %v1712 = vunpack.c.h.b16 %v1633
  %v1713 = vunpack.c.l.b16 %v1634
  %v1714 = vunpack.c.h.b16 %v1634
  %v1715 = vunpack.c.l.b16 %v1635
  %v1716 = vunpack.c.h.b16 %v1635
  %v1717 = vunpack.c.l.b16 %v1636
  %v1718 = vunpack.c.h.b16 %v1636
  %v1719 = vunpack.c.l.b16 %v1637
  %v1720 = vunpack.c.h.b16 %v1637
  %v1721 = vunpack.c.l.b16 %v1638
  %v1722 = vunpack.c.h.b16 %v1638
  %v1723 = vunpack.c.l.b16 %v1639
  %v1724 = vunpack.c.h.b16 %v1639
  %v1725 = vunpack.c.l.b16 %v1640
  %v1726 = vunpack.c.h.b16 %v1640
  %v1727 = vunpack.c.l.b16 %v1641
  %v1728 = vunpack.c.h.b16 %v1641
  %v1729 = vunpack.c.l.b16 %v1642
  %v1730 = vunpack.c.h.b16 %v1642
  %v1731 = vunpack.c.l.b16 %v1643
  %v1732 = vunpack.c.h.b16 %v1643
  %v1733 = vunpack.c.l.b16 %v1644
  %v1734 = vunpack.c.h.b16 %v1644
  %v1735 = vunpack.c.l.b16 %v1645
  %v1736 = vunpack.c.h.b16 %v1645
  %v1737 = vunpack.c.l.b16 %v1646
  %v1738 = vunpack.c.h.b16 %v1646
  %v1739 = vunpack.c.l.b16 %v1647
  %v1740 = vunpack.c.h.b16 %v1647
  %v1741 = vunpack.c.l.b16 %v1648
  %v1742 = vunpack.c.h.b16 %v1648
  %v1743 = vunpack.c.l.b16 %v1649
  %v1744 = vunpack.c.h.b16 %v1649
  %v1745 = vunpack.c.l.b16 %v1650
  %v1746 = vunpack.c.h.b16 %v1650
  %v1747 = vpack.c.b16 %v1683, %v1683
  %v1748 = vpack.c.b16 %v1684, %v1684
  %v1749 = vpack.c.b16 %v1685, %v1685
  %v1750 = vpack.c.b16 %v1686, %v1686
  %v1751 = vpack.c.b16 %v1687, %v1687
  %v1752 = vpack.c.b16 %v1688, %v1688
  %v1753 = vpack.c.b16 %v1689, %v1689
  %v1754 = vpack.c.b16 %v1690, %v1690
  %v1755 = vpack.c.b16 %v1691, %v1691
  %v1756 = vpack.c.b16 %v1692, %v1692
  %v1757 = vpack.c.b16 %v1693, %v1693
  %v1758 = vpack.c.b16 %v1694, %v1694
  %v1759 = vpack.c.b16 %v1695, %v1695
  %v1760 = vpack.c.b16 %v1696, %v1696
  %v1761 = vpack.c.b16 %v1697, %v1697
  %v1762 = vpack.c.b16 %v1698, %v1698
  %v1763 = vpack.c.b16 %v1699, %v1699
  %v1764 = vpack.c.b16 %v1700, %v1700
  %v1765 = vpack.c.b16 %v1701, %v1701
  %v1766 = vpack.c.b16 %v1702, %v1702
  %v1767 = vpack.c.b16 %v1703, %v1703
  %v1768 = vpack.c.b16 %v1704, %v1704
  %v1769 = vpack.c.b16 %v1705, %v1705
  %v1770 = vpack.c.b16 %v1706, %v1706
  %v1771 = vpack.c.b16 %v1707, %v1707
  %v1772 = vpack.c.b16 %v1708, %v1708
  %v1773 = vpack.c.b16 %v1709, %v1709
  %v1774 = vpack.c.b16 %v1710, %v1710
  %v1775 = vpack.c.b16 %v1711, %v1711
  %v1776 = vpack.c.b16 %v1712, %v1712
  %v1777 = vpack.c.b16 %v1713, %v1713
  %v1778 = vpack.c.b16 %v1714, %v1714
  %v1779 = vpack.c.b16 %v1715, %v1715
  %v1780 = vpack.c.b16 %v1716, %v1716
  %v1781 = vpack.c.b16 %v1717, %v1717
  %v1782 = vpack.c.b16 %v1718, %v1718
  %v1783 = vpack.c.b16 %v1719, %v1719
  %v1784 = vpack.c.b16 %v1720, %v1720
  %v1785 = vpack.c.b16 %v1721, %v1721
  %v1786 = vpack.c.b16 %v1722, %v1722
  %v1787 = vpack.c.b16 %v1723, %v1723
  %v1788 = vpack.c.b16 %v1724, %v1724
  %v1789 = vpack.c.b16 %v1725, %v1725
  %v1790 = vpack.c.b16 %v1726, %v1726
  %v1791 = vpack.c.b16 %v1727, %v1727
  %v1792 = vpack.c.b16 %v1728, %v1728
  %v1793 = vpack.c.b16 %v1729, %v1729
  %v1794 = vpack.c.b16 %v1730, %v1730
  %v1795 = vpack.c.b16 %v1731, %v1731
  %v1796 = vpack.c.b16 %v1732, %v1732
  %v1797 = vpack.c.b16 %v1733, %v1733
  %v1798 = vpack.c.b16 %v1734, %v1734
  %v1799 = vpack.c.b16 %v1735, %v1735
  %v1800 = vpack.c.b16 %v1736, %v1736
  %v1801 = vpack.c.b16 %v1737, %v1737
  %v1802 = vpack.c.b16 %v1738, %v1738
  %v1803 = vpack.c.b16 %v1739, %v1739
  %v1804 = vpack.c.b16 %v1740, %v1740
  %v1805 = vpack.c.b16 %v1741, %v1741
  %v1806 = vpack.c.b16 %v1742, %v1742
  %v1807 = vpack.c.b16 %v1743, %v1743
  %v1808 = vpack.c.b16 %v1744, %v1744
  %v1809 = vpack.c.b16 %v1745, %v1745
  %v1810 = vpack.c.b16 %v1746, %v1746
  %vm1875 = vcmask 519168
  %1876 = vst.msk [vmem:[%s3] sm:$0xf] %vm1875, %v1747
  %1877 = vst.msk [vmem:[%s3 + $0x4] sm:$0xf] %vm1875, %v1748
  %1878 = vst.msk [vmem:[%s3 + $0x8] sm:$0xf] %vm1875, %v1749
  %1879 = vst.msk [vmem:[%s3 + $0xc] sm:$0xf] %vm1875, %v1750
  %1880 = vst.msk [vmem:[%s3 + $0x10] sm:$0xf] %vm1875, %v1751
  %1881 = vst.msk [vmem:[%s3 + $0x14] sm:$0xf] %vm1875, %v1752
  %1882 = vst.msk [vmem:[%s3 + $0x18] sm:$0xf] %vm1875, %v1753
  %1883 = vst.msk [vmem:[%s3 + $0x1c] sm:$0xf] %vm1875, %v1754
  %1884 = vst.msk [vmem:[%s3 + $0x20] sm:$0xf] %vm1875, %v1755
  %1885 = vst.msk [vmem:[%s3 + $0x24] sm:$0xf] %vm1875, %v1756
  %1886 = vst.msk [vmem:[%s3 + $0x28] sm:$0xf] %vm1875, %v1757
  %1887 = vst.msk [vmem:[%s3 + $0x2c] sm:$0xf] %vm1875, %v1758
  %1888 = vst.msk [vmem:[%s3 + $0x30] sm:$0xf] %vm1875, %v1759
  %1889 = vst.msk [vmem:[%s3 + $0x34] sm:$0xf] %vm1875, %v1760
  %1890 = vst.msk [vmem:[%s3 + $0x38] sm:$0xf] %vm1875, %v1761
  %1891 = vst.msk [vmem:[%s3 + $0x3c] sm:$0xf] %vm1875, %v1762
  %1892 = vst.msk [vmem:[%s3 + $0x40] sm:$0xf] %vm1875, %v1763
  %1893 = vst.msk [vmem:[%s3 + $0x44] sm:$0xf] %vm1875, %v1764
  %1894 = vst.msk [vmem:[%s3 + $0x48] sm:$0xf] %vm1875, %v1765
  %1895 = vst.msk [vmem:[%s3 + $0x4c] sm:$0xf] %vm1875, %v1766
  %1896 = vst.msk [vmem:[%s3 + $0x50] sm:$0xf] %vm1875, %v1767
  %1897 = vst.msk [vmem:[%s3 + $0x54] sm:$0xf] %vm1875, %v1768
  %1898 = vst.msk [vmem:[%s3 + $0x58] sm:$0xf] %vm1875, %v1769
  %1899 = vst.msk [vmem:[%s3 + $0x5c] sm:$0xf] %vm1875, %v1770
  %1900 = vst.msk [vmem:[%s3 + $0x60] sm:$0xf] %vm1875, %v1771
  %1901 = vst.msk [vmem:[%s3 + $0x64] sm:$0xf] %vm1875, %v1772
  %1902 = vst.msk [vmem:[%s3 + $0x68] sm:$0xf] %vm1875, %v1773
  %1903 = vst.msk [vmem:[%s3 + $0x6c] sm:$0xf] %vm1875, %v1774
  %1904 = vst.msk [vmem:[%s3 + $0x70] sm:$0xf] %vm1875, %v1775
  %1905 = vst.msk [vmem:[%s3 + $0x74] sm:$0xf] %vm1875, %v1776
  %1906 = vst.msk [vmem:[%s3 + $0x78] sm:$0xf] %vm1875, %v1777
  %1907 = vst.msk [vmem:[%s3 + $0x7c] sm:$0xf] %vm1875, %v1778
  %1908 = vst.msk [vmem:[%s3 + $0x80] sm:$0xf] %vm1875, %v1779
  %1909 = vst.msk [vmem:[%s3 + $0x84] sm:$0xf] %vm1875, %v1780
  %1910 = vst.msk [vmem:[%s3 + $0x88] sm:$0xf] %vm1875, %v1781
  %1911 = vst.msk [vmem:[%s3 + $0x8c] sm:$0xf] %vm1875, %v1782
  %1912 = vst.msk [vmem:[%s3 + $0x90] sm:$0xf] %vm1875, %v1783
  %1913 = vst.msk [vmem:[%s3 + $0x94] sm:$0xf] %vm1875, %v1784
  %1914 = vst.msk [vmem:[%s3 + $0x98] sm:$0xf] %vm1875, %v1785
  %1915 = vst.msk [vmem:[%s3 + $0x9c] sm:$0xf] %vm1875, %v1786
  %1916 = vst.msk [vmem:[%s3 + $0xa0] sm:$0xf] %vm1875, %v1787
  %1917 = vst.msk [vmem:[%s3 + $0xa4] sm:$0xf] %vm1875, %v1788
  %1918 = vst.msk [vmem:[%s3 + $0xa8] sm:$0xf] %vm1875, %v1789
  %1919 = vst.msk [vmem:[%s3 + $0xac] sm:$0xf] %vm1875, %v1790
  %1920 = vst.msk [vmem:[%s3 + $0xb0] sm:$0xf] %vm1875, %v1791
  %1921 = vst.msk [vmem:[%s3 + $0xb4] sm:$0xf] %vm1875, %v1792
  %1922 = vst.msk [vmem:[%s3 + $0xb8] sm:$0xf] %vm1875, %v1793
  %1923 = vst.msk [vmem:[%s3 + $0xbc] sm:$0xf] %vm1875, %v1794
  %1924 = vst.msk [vmem:[%s3 + $0xc0] sm:$0xf] %vm1875, %v1795
  %1925 = vst.msk [vmem:[%s3 + $0xc4] sm:$0xf] %vm1875, %v1796
  %1926 = vst.msk [vmem:[%s3 + $0xc8] sm:$0xf] %vm1875, %v1797
  %1927 = vst.msk [vmem:[%s3 + $0xcc] sm:$0xf] %vm1875, %v1798
  %1928 = vst.msk [vmem:[%s3 + $0xd0] sm:$0xf] %vm1875, %v1799
  %1929 = vst.msk [vmem:[%s3 + $0xd4] sm:$0xf] %vm1875, %v1800
  %1930 = vst.msk [vmem:[%s3 + $0xd8] sm:$0xf] %vm1875, %v1801
  %1931 = vst.msk [vmem:[%s3 + $0xdc] sm:$0xf] %vm1875, %v1802
  %1932 = vst.msk [vmem:[%s3 + $0xe0] sm:$0xf] %vm1875, %v1803
  %1933 = vst.msk [vmem:[%s3 + $0xe4] sm:$0xf] %vm1875, %v1804
  %1934 = vst.msk [vmem:[%s3 + $0xe8] sm:$0xf] %vm1875, %v1805
  %1935 = vst.msk [vmem:[%s3 + $0xec] sm:$0xf] %vm1875, %v1806
  %1936 = vst.msk [vmem:[%s3 + $0xf0] sm:$0xf] %vm1875, %v1807
  %1937 = vst.msk [vmem:[%s3 + $0xf4] sm:$0xf] %vm1875, %v1808
  %1938 = vst.msk [vmem:[%s3 + $0xf8] sm:$0xf] %vm1875, %v1809
  %1939 = vst.msk [vmem:[%s3 + $0xfc] sm:$0xf] %vm1875, %v1810
  %v1940 = vld [vmem:[%s2] sm:$0xff]
  %v1941 = vld [vmem:[%s2 + $0x8] sm:$0xff]
  %v1942 = vld [vmem:[%s2 + $0x10] sm:$0xff]
  %v1943 = vld [vmem:[%s2 + $0x18] sm:$0xff]
  %v1944 = vld [vmem:[%s2 + $0x20] sm:$0xff]
  %v1945 = vld [vmem:[%s2 + $0x28] sm:$0xff]
  %v1946 = vld [vmem:[%s2 + $0x30] sm:$0xff]
  %v1947 = vld [vmem:[%s2 + $0x38] sm:$0xff]
  %v1948 = vld [vmem:[%s2 + $0x40] sm:$0xff]
  %v1949 = vld [vmem:[%s2 + $0x48] sm:$0xff]
  %v1950 = vld [vmem:[%s2 + $0x50] sm:$0xff]
  %v1951 = vld [vmem:[%s2 + $0x58] sm:$0xff]
  %v1952 = vld [vmem:[%s2 + $0x60] sm:$0xff]
  %v1953 = vld [vmem:[%s2 + $0x68] sm:$0xff]
  %v1954 = vld [vmem:[%s2 + $0x70] sm:$0xff]
  %v1955 = vld [vmem:[%s2 + $0x78] sm:$0xff]
  %v1956 = vld [vmem:[%s2 + $0x80] sm:$0xff]
  %v1957 = vld [vmem:[%s2 + $0x88] sm:$0xff]
  %v1958 = vld [vmem:[%s2 + $0x90] sm:$0xff]
  %v1959 = vld [vmem:[%s2 + $0x98] sm:$0xff]
  %v1960 = vld [vmem:[%s2 + $0xa0] sm:$0xff]
  %v1961 = vld [vmem:[%s2 + $0xa8] sm:$0xff]
  %v1962 = vld [vmem:[%s2 + $0xb0] sm:$0xff]
  %v1963 = vld [vmem:[%s2 + $0xb8] sm:$0xff]
  %v1964 = vld [vmem:[%s2 + $0xc0] sm:$0xff]
  %v1965 = vld [vmem:[%s2 + $0xc8] sm:$0xff]
  %v1966 = vld [vmem:[%s2 + $0xd0] sm:$0xff]
  %v1967 = vld [vmem:[%s2 + $0xd8] sm:$0xff]
  %v1968 = vld [vmem:[%s2 + $0xe0] sm:$0xff]
  %v1969 = vld [vmem:[%s2 + $0xe8] sm:$0xff]
  %v1970 = vld [vmem:[%s2 + $0xf0] sm:$0xff]
  %v1971 = vld [vmem:[%s2 + $0xf8] sm:$0xff]
  %v1972 = vld [vmem:[%s2 + $0x100] sm:$0xff]
  %v1973 = vld [vmem:[%s2 + $0x108] sm:$0xff]
  %v1974 = vld [vmem:[%s2 + $0x110] sm:$0xff]
  %v1975 = vld [vmem:[%s2 + $0x118] sm:$0xff]
  %v1976 = vld [vmem:[%s2 + $0x120] sm:$0xff]
  %v1977 = vld [vmem:[%s2 + $0x128] sm:$0xff]
  %v1978 = vld [vmem:[%s2 + $0x130] sm:$0xff]
  %v1979 = vld [vmem:[%s2 + $0x138] sm:$0xff]
  %v1980 = vld [vmem:[%s2 + $0x140] sm:$0xff]
  %v1981 = vld [vmem:[%s2 + $0x148] sm:$0xff]
  %v1982 = vld [vmem:[%s2 + $0x150] sm:$0xff]
  %v1983 = vld [vmem:[%s2 + $0x158] sm:$0xff]
  %v1984 = vld [vmem:[%s2 + $0x160] sm:$0xff]
  %v1985 = vld [vmem:[%s2 + $0x168] sm:$0xff]
  %v1986 = vld [vmem:[%s2 + $0x170] sm:$0xff]
  %v1987 = vld [vmem:[%s2 + $0x178] sm:$0xff]
  %v1988 = vld [vmem:[%s2 + $0x180] sm:$0xff]
  %v1989 = vld [vmem:[%s2 + $0x188] sm:$0xff]
  %v1990 = vld [vmem:[%s2 + $0x190] sm:$0xff]
  %v1991 = vld [vmem:[%s2 + $0x198] sm:$0xff]
  %v1992 = vld [vmem:[%s2 + $0x1a0] sm:$0xff]
  %v1993 = vld [vmem:[%s2 + $0x1a8] sm:$0xff]
  %v1994 = vld [vmem:[%s2 + $0x1b0] sm:$0xff]
  %v1995 = vld [vmem:[%s2 + $0x1b8] sm:$0xff]
  %v1996 = vld [vmem:[%s2 + $0x1c0] sm:$0xff]
  %v1997 = vld [vmem:[%s2 + $0x1c8] sm:$0xff]
  %v1998 = vld [vmem:[%s2 + $0x1d0] sm:$0xff]
  %v1999 = vld [vmem:[%s2 + $0x1d8] sm:$0xff]
  %v2000 = vld [vmem:[%s2 + $0x1e0] sm:$0xff]
  %v2001 = vld [vmem:[%s2 + $0x1e8] sm:$0xff]
  %v2002 = vld [vmem:[%s2 + $0x1f0] sm:$0xff]
  %v2003 = vld [vmem:[%s2 + $0x1f8] sm:$0xff]
  %v2004 = vadd.f32 %v1940, %v1365
  %v2005 = vadd.f32 %v1941, %v1368
  %v2006 = vadd.f32 %v1942, %v1373
  %v2007 = vadd.f32 %v1943, %v1376
  %v2008 = vadd.f32 %v1944, %v1381
  %v2009 = vadd.f32 %v1945, %v1384
  %v2010 = vadd.f32 %v1946, %v1389
  %v2011 = vadd.f32 %v1947, %v1392
  %v2012 = vadd.f32 %v1948, %v1397
  %v2013 = vadd.f32 %v1949, %v1400
  %v2014 = vadd.f32 %v1950, %v1405
  %v2015 = vadd.f32 %v1951, %v1408
  %v2016 = vadd.f32 %v1952, %v1413
  %v2017 = vadd.f32 %v1953, %v1416
  %v2018 = vadd.f32 %v1954, %v1421
  %v2019 = vadd.f32 %v1955, %v1424
  %v2020 = vadd.f32 %v1956, %v1429
  %v2021 = vadd.f32 %v1957, %v1432
  %v2022 = vadd.f32 %v1958, %v1437
  %v2023 = vadd.f32 %v1959, %v1440
  %v2024 = vadd.f32 %v1960, %v1445
  %v2025 = vadd.f32 %v1961, %v1448
  %v2026 = vadd.f32 %v1962, %v1453
  %v2027 = vadd.f32 %v1963, %v1456
  %v2028 = vadd.f32 %v1964, %v1461
  %v2029 = vadd.f32 %v1965, %v1464
  %v2030 = vadd.f32 %v1966, %v1469
  %v2031 = vadd.f32 %v1967, %v1472
  %v2032 = vadd.f32 %v1968, %v1477
  %v2033 = vadd.f32 %v1969, %v1480
  %v2034 = vadd.f32 %v1970, %v1485
  %v2035 = vadd.f32 %v1971, %v1488
  %v2036 = vadd.f32 %v1972, %v1493
  %v2037 = vadd.f32 %v1973, %v1496
  %v2038 = vadd.f32 %v1974, %v1501
  %v2039 = vadd.f32 %v1975, %v1504
  %v2040 = vadd.f32 %v1976, %v1509
  %v2041 = vadd.f32 %v1977, %v1512
  %v2042 = vadd.f32 %v1978, %v1517
  %v2043 = vadd.f32 %v1979, %v1520
  %v2044 = vadd.f32 %v1980, %v1525
  %v2045 = vadd.f32 %v1981, %v1528
  %v2046 = vadd.f32 %v1982, %v1533
  %v2047 = vadd.f32 %v1983, %v1536
  %v2048 = vadd.f32 %v1984, %v1541
  %v2049 = vadd.f32 %v1985, %v1544
  %v2050 = vadd.f32 %v1986, %v1549
  %v2051 = vadd.f32 %v1987, %v1552
  %v2052 = vadd.f32 %v1988, %v1557
  %v2053 = vadd.f32 %v1989, %v1560
  %v2054 = vadd.f32 %v1990, %v1565
  %v2055 = vadd.f32 %v1991, %v1568
  %v2056 = vadd.f32 %v1992, %v1573
  %v2057 = vadd.f32 %v1993, %v1576
  %v2058 = vadd.f32 %v1994, %v1581
  %v2059 = vadd.f32 %v1995, %v1584
  %v2060 = vadd.f32 %v1996, %v1589
  %v2061 = vadd.f32 %v1997, %v1592
  %v2062 = vadd.f32 %v1998, %v1597
  %v2063 = vadd.f32 %v1999, %v1600
  %v2064 = vadd.f32 %v2000, %v1605
  %v2065 = vadd.f32 %v2001, %v1608
  %v2066 = vadd.f32 %v2002, %v1613
  %v2067 = vadd.f32 %v2003, %v1616
  %vm2068 = vcmask 523264
  %2069 = vst.msk [vmem:[%s4] sm:$0xff] %vm2068, %v2004
  %2070 = vst.msk [vmem:[%s4 + $0x8] sm:$0xff] %vm2068, %v2005
  %2071 = vst.msk [vmem:[%s4 + $0x10] sm:$0xff] %vm2068, %v2006
  %2072 = vst.msk [vmem:[%s4 + $0x18] sm:$0xff] %vm2068, %v2007
  %2073 = vst.msk [vmem:[%s4 + $0x20] sm:$0xff] %vm2068, %v2008
  %2074 = vst.msk [vmem:[%s4 + $0x28] sm:$0xff] %vm2068, %v2009
  %2075 = vst.msk [vmem:[%s4 + $0x30] sm:$0xff] %vm2068, %v2010
  %2076 = vst.msk [vmem:[%s4 + $0x38] sm:$0xff] %vm2068, %v2011
  %2077 = vst.msk [vmem:[%s4 + $0x40] sm:$0xff] %vm2068, %v2012
  %2078 = vst.msk [vmem:[%s4 + $0x48] sm:$0xff] %vm2068, %v2013
  %2079 = vst.msk [vmem:[%s4 + $0x50] sm:$0xff] %vm2068, %v2014
  %2080 = vst.msk [vmem:[%s4 + $0x58] sm:$0xff] %vm2068, %v2015
  %2081 = vst.msk [vmem:[%s4 + $0x60] sm:$0xff] %vm2068, %v2016
  %2082 = vst.msk [vmem:[%s4 + $0x68] sm:$0xff] %vm2068, %v2017
  %2083 = vst.msk [vmem:[%s4 + $0x70] sm:$0xff] %vm2068, %v2018
  %2084 = vst.msk [vmem:[%s4 + $0x78] sm:$0xff] %vm2068, %v2019
  %2085 = vst.msk [vmem:[%s4 + $0x80] sm:$0xff] %vm2068, %v2020
  %2086 = vst.msk [vmem:[%s4 + $0x88] sm:$0xff] %vm2068, %v2021
  %2087 = vst.msk [vmem:[%s4 + $0x90] sm:$0xff] %vm2068, %v2022
  %2088 = vst.msk [vmem:[%s4 + $0x98] sm:$0xff] %vm2068, %v2023
  %2089 = vst.msk [vmem:[%s4 + $0xa0] sm:$0xff] %vm2068, %v2024
  %2090 = vst.msk [vmem:[%s4 + $0xa8] sm:$0xff] %vm2068, %v2025
  %2091 = vst.msk [vmem:[%s4 + $0xb0] sm:$0xff] %vm2068, %v2026
  %2092 = vst.msk [vmem:[%s4 + $0xb8] sm:$0xff] %vm2068, %v2027
  %2093 = vst.msk [vmem:[%s4 + $0xc0] sm:$0xff] %vm2068, %v2028
  %2094 = vst.msk [vmem:[%s4 + $0xc8] sm:$0xff] %vm2068, %v2029
  %2095 = vst.msk [vmem:[%s4 + $0xd0] sm:$0xff] %vm2068, %v2030
  %2096 = vst.msk [vmem:[%s4 + $0xd8] sm:$0xff] %vm2068, %v2031
  %2097 = vst.msk [vmem:[%s4 + $0xe0] sm:$0xff] %vm2068, %v2032
  %2098 = vst.msk [vmem:[%s4 + $0xe8] sm:$0xff] %vm2068, %v2033
  %2099 = vst.msk [vmem:[%s4 + $0xf0] sm:$0xff] %vm2068, %v2034
  %2100 = vst.msk [vmem:[%s4 + $0xf8] sm:$0xff] %vm2068, %v2035
  %2101 = vst.msk [vmem:[%s4 + $0x100] sm:$0xff] %vm2068, %v2036
  %2102 = vst.msk [vmem:[%s4 + $0x108] sm:$0xff] %vm2068, %v2037
  %2103 = vst.msk [vmem:[%s4 + $0x110] sm:$0xff] %vm2068, %v2038
  %2104 = vst.msk [vmem:[%s4 + $0x118] sm:$0xff] %vm2068, %v2039
  %2105 = vst.msk [vmem:[%s4 + $0x120] sm:$0xff] %vm2068, %v2040
  %2106 = vst.msk [vmem:[%s4 + $0x128] sm:$0xff] %vm2068, %v2041
  %2107 = vst.msk [vmem:[%s4 + $0x130] sm:$0xff] %vm2068, %v2042
  %2108 = vst.msk [vmem:[%s4 + $0x138] sm:$0xff] %vm2068, %v2043
  %2109 = vst.msk [vmem:[%s4 + $0x140] sm:$0xff] %vm2068, %v2044
  %2110 = vst.msk [vmem:[%s4 + $0x148] sm:$0xff] %vm2068, %v2045
  %2111 = vst.msk [vmem:[%s4 + $0x150] sm:$0xff] %vm2068, %v2046
  %2112 = vst.msk [vmem:[%s4 + $0x158] sm:$0xff] %vm2068, %v2047
  %2113 = vst.msk [vmem:[%s4 + $0x160] sm:$0xff] %vm2068, %v2048
  %2114 = vst.msk [vmem:[%s4 + $0x168] sm:$0xff] %vm2068, %v2049
  %2115 = vst.msk [vmem:[%s4 + $0x170] sm:$0xff] %vm2068, %v2050
  %2116 = vst.msk [vmem:[%s4 + $0x178] sm:$0xff] %vm2068, %v2051
  %2117 = vst.msk [vmem:[%s4 + $0x180] sm:$0xff] %vm2068, %v2052
  %2118 = vst.msk [vmem:[%s4 + $0x188] sm:$0xff] %vm2068, %v2053
  %2119 = vst.msk [vmem:[%s4 + $0x190] sm:$0xff] %vm2068, %v2054
  %2120 = vst.msk [vmem:[%s4 + $0x198] sm:$0xff] %vm2068, %v2055
  %2121 = vst.msk [vmem:[%s4 + $0x1a0] sm:$0xff] %vm2068, %v2056
  %2122 = vst.msk [vmem:[%s4 + $0x1a8] sm:$0xff] %vm2068, %v2057
  %2123 = vst.msk [vmem:[%s4 + $0x1b0] sm:$0xff] %vm2068, %v2058
  %2124 = vst.msk [vmem:[%s4 + $0x1b8] sm:$0xff] %vm2068, %v2059
  %2125 = vst.msk [vmem:[%s4 + $0x1c0] sm:$0xff] %vm2068, %v2060
  %2126 = vst.msk [vmem:[%s4 + $0x1c8] sm:$0xff] %vm2068, %v2061
  %2127 = vst.msk [vmem:[%s4 + $0x1d0] sm:$0xff] %vm2068, %v2062
  %2128 = vst.msk [vmem:[%s4 + $0x1d8] sm:$0xff] %vm2068, %v2063
  %2129 = vst.msk [vmem:[%s4 + $0x1e0] sm:$0xff] %vm2068, %v2064
  %2130 = vst.msk [vmem:[%s4 + $0x1e8] sm:$0xff] %vm2068, %v2065
  %2131 = vst.msk [vmem:[%s4 + $0x1f0] sm:$0xff] %vm2068, %v2066
  %2132 = vst.msk [vmem:[%s4 + $0x1f8] sm:$0xff] %vm2068, %v2067
  // Predicated region
  $region14: #{lightgcn_forward.4} parent=0 // pred_check
    _
  $region15: #{lightgcn_forward.4} parent=0 // pred_check_branch
    %2134 = sbr.rel (0) target = $region17
  $region16: #{lightgcn_forward.4} parent=0 // pred_region
    _
  $region17: #{lightgcn_forward.4} parent=0 // pred_fallthru
    _
  // Predicated region
  $region18: #{lightgcn_forward.4} parent=0 // pred_check
    _
  $region19: #{lightgcn_forward.4} parent=0 // pred_check_branch
    %2136 = sbr.rel (0) target = $region21
  $region20: #{lightgcn_forward.4} parent=0 // pred_region
    _
  $region21: #{lightgcn_forward.4} parent=0 // pred_fallthru
    _
  // Predicated region
  $region22: #{lightgcn_forward.4} parent=0 // pred_check
    _
  $region23: #{lightgcn_forward.4} parent=0 // pred_check_branch
    %2138 = sbr.rel (0) target = $region25
  $region24: #{lightgcn_forward.4} parent=0 // pred_region
    _
  $region25: #{lightgcn_forward.4} parent=0 // pred_fallthru
    _
  // Predicated region
  $region26: #{lightgcn_forward.4} parent=0 // pred_check
    _
  $region27: #{lightgcn_forward.4} parent=0 // pred_check_branch
    %2140 = sbr.rel (0) target = $region29
  $region28: #{lightgcn_forward.4} parent=0 // pred_region
    _
  $region29: #{lightgcn_forward.4} parent=0 // pred_fallthru
    _

// kernel: lightgcn_forward.6
$region0: #{lightgcn_forward.6}
  #allocation0 [shape = 'u32[]', space=smem, size = 0x4, offset = 0x4, fixed_abs, tag = 'smem constant byte address 0x4 - core index']
  #allocation1 [shape = 'u32[144,128]{1,0:T(1,128)}', space=vmem, size = 0x12000, scoped, tag = 'internal scratch']
  %s0 = inlined_call_operand.vmem [shape: bf16[512,512], index: 0, kind: input, shape index: {}]
  %s1 = inlined_call_operand.vmem [shape: bf16[512,64], index: 1, kind: input, shape index: {}]
  %s2 = inlined_call_operand.vmem [shape: f32[512,64], index: 2, kind: input, shape index: {}, may-alias: {2,4}]
  %s3 = inlined_call_operand.hbm [shape: bf16[512,64], index: 3, kind: output, shape index: {0}]
  %s4 = inlined_call_operand.vmem [shape: f32[512,64], index: 4, kind: output, shape index: {1}, may-alias: {2,4}]
  %5 = xla_tuple %s3, %s4
  %s6 = sld [smem:[#allocation0]]
  $region30: #{lightgcn_forward.6} parent=0
    _
  %s8 = ssub.s32 1, %s6
  %s9 = scalar_select 0, %s8, %s6
  $region1: #{lightgcn_forward.6} parent=0
    #allocation2 [shape = 'u8[131072]{0}', space=vmem, size = 0x20000, scoped, tag = 'output window, operand 0, single buffered']
    #allocation3 [shape = 's32[1]{0}', space=sflag, size = 0x4, scoped, tag = 'scoped memory for lightgcn_forward.6']
    %10 = vsyncpa [#allocation3], 0
    // Predicated region
    $region2: #{lightgcn_forward.6} parent=1 // pred_check
      _
    $region3: #{lightgcn_forward.6} parent=1 // pred_check_branch
      %12 = sbr.rel (0) target = $region5
    $region4: #{lightgcn_forward.6} parent=1 // pred_region
      _
    $region5: #{lightgcn_forward.6} parent=1 // pred_fallthru
      _
    // Predicated region
    $region6: #{lightgcn_forward.6} parent=1 // pred_check
      _
    $region7: #{lightgcn_forward.6} parent=1 // pred_check_branch
      %14 = sbr.rel (0) target = $region9
    $region8: #{lightgcn_forward.6} parent=1 // pred_region
      _
    $region9: #{lightgcn_forward.6} parent=1 // pred_fallthru
      _
    // Predicated region
    $region10: #{lightgcn_forward.6} parent=1 // pred_check
      _
    $region11: #{lightgcn_forward.6} parent=1 // pred_check_branch
      %16 = sbr.rel (0) target = $region13
    $region12: #{lightgcn_forward.6} parent=1 // pred_region
      _
    $region13: #{lightgcn_forward.6} parent=1 // pred_fallthru
      _
    %v18 = vld [vmem:[%s0] sm:$0xff]
    %v19 = vld [vmem:[%s0 + $0x8] sm:$0xff]
    %v20 = vld [vmem:[%s0 + $0x10] sm:$0xff]
    %v21 = vld [vmem:[%s0 + $0x18] sm:$0xff]
    %v22 = vld [vmem:[%s0 + $0x20] sm:$0xff]
    %v23 = vld [vmem:[%s0 + $0x28] sm:$0xff]
    %v24 = vld [vmem:[%s0 + $0x30] sm:$0xff]
    %v25 = vld [vmem:[%s0 + $0x38] sm:$0xff]
    %v26 = vld [vmem:[%s0 + $0x40] sm:$0xff]
    %v27 = vld [vmem:[%s0 + $0x48] sm:$0xff]
    %v28 = vld [vmem:[%s0 + $0x50] sm:$0xff]
    %v29 = vld [vmem:[%s0 + $0x58] sm:$0xff]
    %v30 = vld [vmem:[%s0 + $0x60] sm:$0xff]
    %v31 = vld [vmem:[%s0 + $0x68] sm:$0xff]
    %v32 = vld [vmem:[%s0 + $0x70] sm:$0xff]
    %v33 = vld [vmem:[%s0 + $0x78] sm:$0xff]
    %v34 = vld [vmem:[%s0 + $0x80] sm:$0xff]
    %v35 = vld [vmem:[%s0 + $0x88] sm:$0xff]
    %v36 = vld [vmem:[%s0 + $0x90] sm:$0xff]
    %v37 = vld [vmem:[%s0 + $0x98] sm:$0xff]
    %v38 = vld [vmem:[%s0 + $0xa0] sm:$0xff]
    %v39 = vld [vmem:[%s0 + $0xa8] sm:$0xff]
    %v40 = vld [vmem:[%s0 + $0xb0] sm:$0xff]
    %v41 = vld [vmem:[%s0 + $0xb8] sm:$0xff]
    %v42 = vld [vmem:[%s0 + $0xc0] sm:$0xff]
    %v43 = vld [vmem:[%s0 + $0xc8] sm:$0xff]
    %v44 = vld [vmem:[%s0 + $0xd0] sm:$0xff]
    %v45 = vld [vmem:[%s0 + $0xd8] sm:$0xff]
    %v46 = vld [vmem:[%s0 + $0xe0] sm:$0xff]
    %v47 = vld [vmem:[%s0 + $0xe8] sm:$0xff]
    %v48 = vld [vmem:[%s0 + $0xf0] sm:$0xff]
    %v49 = vld [vmem:[%s0 + $0xf8] sm:$0xff]
    %v50 = vld [vmem:[%s0 + $0x100] sm:$0xff]
    %v51 = vld [vmem:[%s0 + $0x108] sm:$0xff]
    %v52 = vld [vmem:[%s0 + $0x110] sm:$0xff]
    %v53 = vld [vmem:[%s0 + $0x118] sm:$0xff]
    %v54 = vld [vmem:[%s0 + $0x120] sm:$0xff]
    %v55 = vld [vmem:[%s0 + $0x128] sm:$0xff]
    %v56 = vld [vmem:[%s0 + $0x130] sm:$0xff]
    %v57 = vld [vmem:[%s0 + $0x138] sm:$0xff]
    %v58 = vld [vmem:[%s0 + $0x140] sm:$0xff]
    %v59 = vld [vmem:[%s0 + $0x148] sm:$0xff]
    %v60 = vld [vmem:[%s0 + $0x150] sm:$0xff]
    %v61 = vld [vmem:[%s0 + $0x158] sm:$0xff]
    %v62 = vld [vmem:[%s0 + $0x160] sm:$0xff]
    %v63 = vld [vmem:[%s0 + $0x168] sm:$0xff]
    %v64 = vld [vmem:[%s0 + $0x170] sm:$0xff]
    %v65 = vld [vmem:[%s0 + $0x178] sm:$0xff]
    %v66 = vld [vmem:[%s0 + $0x180] sm:$0xff]
    %v67 = vld [vmem:[%s0 + $0x188] sm:$0xff]
    %v68 = vld [vmem:[%s0 + $0x190] sm:$0xff]
    %v69 = vld [vmem:[%s0 + $0x198] sm:$0xff]
    %v70 = vld [vmem:[%s0 + $0x1a0] sm:$0xff]
    %v71 = vld [vmem:[%s0 + $0x1a8] sm:$0xff]
    %v72 = vld [vmem:[%s0 + $0x1b0] sm:$0xff]
    %v73 = vld [vmem:[%s0 + $0x1b8] sm:$0xff]
    %v74 = vld [vmem:[%s0 + $0x1c0] sm:$0xff]
    %v75 = vld [vmem:[%s0 + $0x1c8] sm:$0xff]
    %v76 = vld [vmem:[%s0 + $0x1d0] sm:$0xff]
    %v77 = vld [vmem:[%s0 + $0x1d8] sm:$0xff]
    %v78 = vld [vmem:[%s0 + $0x1e0] sm:$0xff]
    %v79 = vld [vmem:[%s0 + $0x1e8] sm:$0xff]
    %v80 = vld [vmem:[%s0 + $0x1f0] sm:$0xff]
    %v81 = vld [vmem:[%s0 + $0x1f8] sm:$0xff]
    %v82 = vld [vmem:[%s0 + $0x200] sm:$0xff]
    %v83 = vld [vmem:[%s0 + $0x208] sm:$0xff]
    %v84 = vld [vmem:[%s0 + $0x210] sm:$0xff]
    %v85 = vld [vmem:[%s0 + $0x218] sm:$0xff]
    %v86 = vld [vmem:[%s0 + $0x220] sm:$0xff]
    %v87 = vld [vmem:[%s0 + $0x228] sm:$0xff]
    %v88 = vld [vmem:[%s0 + $0x230] sm:$0xff]
    %v89 = vld [vmem:[%s0 + $0x238] sm:$0xff]
    %v90 = vld [vmem:[%s0 + $0x240] sm:$0xff]
    %v91 = vld [vmem:[%s0 + $0x248] sm:$0xff]
    %v92 = vld [vmem:[%s0 + $0x250] sm:$0xff]
    %v93 = vld [vmem:[%s0 + $0x258] sm:$0xff]
    %v94 = vld [vmem:[%s0 + $0x260] sm:$0xff]
    %v95 = vld [vmem:[%s0 + $0x268] sm:$0xff]
    %v96 = vld [vmem:[%s0 + $0x270] sm:$0xff]
    %v97 = vld [vmem:[%s0 + $0x278] sm:$0xff]
    %v98 = vld [vmem:[%s0 + $0x280] sm:$0xff]
    %v99 = vld [vmem:[%s0 + $0x288] sm:$0xff]
    %v100 = vld [vmem:[%s0 + $0x290] sm:$0xff]
    %v101 = vld [vmem:[%s0 + $0x298] sm:$0xff]
    %v102 = vld [vmem:[%s0 + $0x2a0] sm:$0xff]
    %v103 = vld [vmem:[%s0 + $0x2a8] sm:$0xff]
    %v104 = vld [vmem:[%s0 + $0x2b0] sm:$0xff]
    %v105 = vld [vmem:[%s0 + $0x2b8] sm:$0xff]
    %v106 = vld [vmem:[%s0 + $0x2c0] sm:$0xff]
    %v107 = vld [vmem:[%s0 + $0x2c8] sm:$0xff]
    %v108 = vld [vmem:[%s0 + $0x2d0] sm:$0xff]
    %v109 = vld [vmem:[%s0 + $0x2d8] sm:$0xff]
    %v110 = vld [vmem:[%s0 + $0x2e0] sm:$0xff]
    %v111 = vld [vmem:[%s0 + $0x2e8] sm:$0xff]
    %v112 = vld [vmem:[%s0 + $0x2f0] sm:$0xff]
    %v113 = vld [vmem:[%s0 + $0x2f8] sm:$0xff]
    %v114 = vld [vmem:[%s0 + $0x300] sm:$0xff]
    %v115 = vld [vmem:[%s0 + $0x308] sm:$0xff]
    %v116 = vld [vmem:[%s0 + $0x310] sm:$0xff]
    %v117 = vld [vmem:[%s0 + $0x318] sm:$0xff]
    %v118 = vld [vmem:[%s0 + $0x320] sm:$0xff]
    %v119 = vld [vmem:[%s0 + $0x328] sm:$0xff]
    %v120 = vld [vmem:[%s0 + $0x330] sm:$0xff]
    %v121 = vld [vmem:[%s0 + $0x338] sm:$0xff]
    %v122 = vld [vmem:[%s0 + $0x340] sm:$0xff]
    %v123 = vld [vmem:[%s0 + $0x348] sm:$0xff]
    %v124 = vld [vmem:[%s0 + $0x350] sm:$0xff]
    %v125 = vld [vmem:[%s0 + $0x358] sm:$0xff]
    %v126 = vld [vmem:[%s0 + $0x360] sm:$0xff]
    %v127 = vld [vmem:[%s0 + $0x368] sm:$0xff]
    %v128 = vld [vmem:[%s0 + $0x370] sm:$0xff]
    %v129 = vld [vmem:[%s0 + $0x378] sm:$0xff]
    %v130 = vld [vmem:[%s0 + $0x380] sm:$0xff]
    %v131 = vld [vmem:[%s0 + $0x388] sm:$0xff]
    %v132 = vld [vmem:[%s0 + $0x390] sm:$0xff]
    %v133 = vld [vmem:[%s0 + $0x398] sm:$0xff]
    %v134 = vld [vmem:[%s0 + $0x3a0] sm:$0xff]
    %v135 = vld [vmem:[%s0 + $0x3a8] sm:$0xff]
    %v136 = vld [vmem:[%s0 + $0x3b0] sm:$0xff]
    %v137 = vld [vmem:[%s0 + $0x3b8] sm:$0xff]
    %v138 = vld [vmem:[%s0 + $0x3c0] sm:$0xff]
    %v139 = vld [vmem:[%s0 + $0x3c8] sm:$0xff]
    %v140 = vld [vmem:[%s0 + $0x3d0] sm:$0xff]
    %v141 = vld [vmem:[%s0 + $0x3d8] sm:$0xff]
    %v142 = vld [vmem:[%s0 + $0x3e0] sm:$0xff]
    %v143 = vld [vmem:[%s0 + $0x3e8] sm:$0xff]
    %v144 = vld [vmem:[%s0 + $0x3f0] sm:$0xff]
    %v145 = vld [vmem:[%s0 + $0x3f8] sm:$0xff]
    %v146 = vld [vmem:[%s1] sm:$0xf]
    %v147 = vld [vmem:[%s1 + $0x4] sm:$0xf]
    %v148 = vld [vmem:[%s1 + $0x8] sm:$0xf]
    %v149 = vld [vmem:[%s1 + $0xc] sm:$0xf]
    %v150 = vld [vmem:[%s1 + $0x10] sm:$0xf]
    %v151 = vld [vmem:[%s1 + $0x14] sm:$0xf]
    %v152 = vld [vmem:[%s1 + $0x18] sm:$0xf]
    %v153 = vld [vmem:[%s1 + $0x1c] sm:$0xf]
    %v154 = vld [vmem:[%s1 + $0x20] sm:$0xf]
    %v155 = vld [vmem:[%s1 + $0x24] sm:$0xf]
    %v156 = vld [vmem:[%s1 + $0x28] sm:$0xf]
    %v157 = vld [vmem:[%s1 + $0x2c] sm:$0xf]
    %v158 = vld [vmem:[%s1 + $0x30] sm:$0xf]
    %v159 = vld [vmem:[%s1 + $0x34] sm:$0xf]
    %v160 = vld [vmem:[%s1 + $0x38] sm:$0xf]
    %v161 = vld [vmem:[%s1 + $0x3c] sm:$0xf]
    %v162 = vld [vmem:[%s1 + $0x40] sm:$0xf]
    %v163 = vld [vmem:[%s1 + $0x44] sm:$0xf]
    %v164 = vld [vmem:[%s1 + $0x48] sm:$0xf]
    %v165 = vld [vmem:[%s1 + $0x4c] sm:$0xf]
    %v166 = vld [vmem:[%s1 + $0x50] sm:$0xf]
    %v167 = vld [vmem:[%s1 + $0x54] sm:$0xf]
    %v168 = vld [vmem:[%s1 + $0x58] sm:$0xf]
    %v169 = vld [vmem:[%s1 + $0x5c] sm:$0xf]
    %v170 = vld [vmem:[%s1 + $0x60] sm:$0xf]
    %v171 = vld [vmem:[%s1 + $0x64] sm:$0xf]
    %v172 = vld [vmem:[%s1 + $0x68] sm:$0xf]
    %v173 = vld [vmem:[%s1 + $0x6c] sm:$0xf]
    %v174 = vld [vmem:[%s1 + $0x70] sm:$0xf]
    %v175 = vld [vmem:[%s1 + $0x74] sm:$0xf]
    %v176 = vld [vmem:[%s1 + $0x78] sm:$0xf]
    %v177 = vld [vmem:[%s1 + $0x7c] sm:$0xf]
    %v178 = vld [vmem:[%s1 + $0x80] sm:$0xf]
    %v179 = vld [vmem:[%s1 + $0x84] sm:$0xf]
    %v180 = vld [vmem:[%s1 + $0x88] sm:$0xf]
    %v181 = vld [vmem:[%s1 + $0x8c] sm:$0xf]
    %v182 = vld [vmem:[%s1 + $0x90] sm:$0xf]
    %v183 = vld [vmem:[%s1 + $0x94] sm:$0xf]
    %v184 = vld [vmem:[%s1 + $0x98] sm:$0xf]
    %v185 = vld [vmem:[%s1 + $0x9c] sm:$0xf]
    %v186 = vld [vmem:[%s1 + $0xa0] sm:$0xf]
    %v187 = vld [vmem:[%s1 + $0xa4] sm:$0xf]
    %v188 = vld [vmem:[%s1 + $0xa8] sm:$0xf]
    %v189 = vld [vmem:[%s1 + $0xac] sm:$0xf]
    %v190 = vld [vmem:[%s1 + $0xb0] sm:$0xf]
    %v191 = vld [vmem:[%s1 + $0xb4] sm:$0xf]
    %v192 = vld [vmem:[%s1 + $0xb8] sm:$0xf]
    %v193 = vld [vmem:[%s1 + $0xbc] sm:$0xf]
    %v194 = vld [vmem:[%s1 + $0xc0] sm:$0xf]
    %v195 = vld [vmem:[%s1 + $0xc4] sm:$0xf]
    %v196 = vld [vmem:[%s1 + $0xc8] sm:$0xf]
    %v197 = vld [vmem:[%s1 + $0xcc] sm:$0xf]
    %v198 = vld [vmem:[%s1 + $0xd0] sm:$0xf]
    %v199 = vld [vmem:[%s1 + $0xd4] sm:$0xf]
    %v200 = vld [vmem:[%s1 + $0xd8] sm:$0xf]
    %v201 = vld [vmem:[%s1 + $0xdc] sm:$0xf]
    %v202 = vld [vmem:[%s1 + $0xe0] sm:$0xf]
    %v203 = vld [vmem:[%s1 + $0xe4] sm:$0xf]
    %v204 = vld [vmem:[%s1 + $0xe8] sm:$0xf]
    %v205 = vld [vmem:[%s1 + $0xec] sm:$0xf]
    %v206 = vld [vmem:[%s1 + $0xf0] sm:$0xf]
    %v207 = vld [vmem:[%s1 + $0xf4] sm:$0xf]
    %v208 = vld [vmem:[%s1 + $0xf8] sm:$0xf]
    %v209 = vld [vmem:[%s1 + $0xfc] sm:$0xf]
    %v338 = vunpack.c.l.b16 %v18
    %v339 = vunpack.c.h.b16 %v18
    %v340 = vunpack.c.l.b16 %v19
    %v341 = vunpack.c.h.b16 %v19
    %v342 = vunpack.c.l.b16 %v20
    %v343 = vunpack.c.h.b16 %v20
    %v344 = vunpack.c.l.b16 %v21
    %v345 = vunpack.c.h.b16 %v21
    %v346 = vunpack.c.l.b16 %v22
    %v347 = vunpack.c.h.b16 %v22
    %v348 = vunpack.c.l.b16 %v23
    %v349 = vunpack.c.h.b16 %v23
    %v350 = vunpack.c.l.b16 %v24
    %v351 = vunpack.c.h.b16 %v24
    %v352 = vunpack.c.l.b16 %v25
    %v353 = vunpack.c.h.b16 %v25
    %v354 = vunpack.c.l.b16 %v26
    %v355 = vunpack.c.h.b16 %v26
    %v356 = vunpack.c.l.b16 %v27
    %v357 = vunpack.c.h.b16 %v27
    %v358 = vunpack.c.l.b16 %v28
    %v359 = vunpack.c.h.b16 %v28
    %v360 = vunpack.c.l.b16 %v29
    %v361 = vunpack.c.h.b16 %v29
    %v362 = vunpack.c.l.b16 %v30
    %v363 = vunpack.c.h.b16 %v30
    %v364 = vunpack.c.l.b16 %v31
    %v365 = vunpack.c.h.b16 %v31
    %v366 = vunpack.c.l.b16 %v32
    %v367 = vunpack.c.h.b16 %v32
    %v368 = vunpack.c.l.b16 %v33
    %v369 = vunpack.c.h.b16 %v33
    %v370 = vunpack.c.l.b16 %v34
    %v371 = vunpack.c.h.b16 %v34
    %v372 = vunpack.c.l.b16 %v35
    %v373 = vunpack.c.h.b16 %v35
    %v374 = vunpack.c.l.b16 %v36
    %v375 = vunpack.c.h.b16 %v36
    %v376 = vunpack.c.l.b16 %v37
    %v377 = vunpack.c.h.b16 %v37
    %v378 = vunpack.c.l.b16 %v38
    %v379 = vunpack.c.h.b16 %v38
    %v380 = vunpack.c.l.b16 %v39
    %v381 = vunpack.c.h.b16 %v39
    %v382 = vunpack.c.l.b16 %v40
    %v383 = vunpack.c.h.b16 %v40
    %v384 = vunpack.c.l.b16 %v41
    %v385 = vunpack.c.h.b16 %v41
    %v386 = vunpack.c.l.b16 %v42
    %v387 = vunpack.c.h.b16 %v42
    %v388 = vunpack.c.l.b16 %v43
    %v389 = vunpack.c.h.b16 %v43
    %v390 = vunpack.c.l.b16 %v44
    %v391 = vunpack.c.h.b16 %v44
    %v392 = vunpack.c.l.b16 %v45
    %v393 = vunpack.c.h.b16 %v45
    %v394 = vunpack.c.l.b16 %v46
    %v395 = vunpack.c.h.b16 %v46
    %v396 = vunpack.c.l.b16 %v47
    %v397 = vunpack.c.h.b16 %v47
    %v398 = vunpack.c.l.b16 %v48
    %v399 = vunpack.c.h.b16 %v48
    %v400 = vunpack.c.l.b16 %v49
    %v401 = vunpack.c.h.b16 %v49
    %v402 = vunpack.c.l.b16 %v50
    %v403 = vunpack.c.h.b16 %v50
    %v404 = vunpack.c.l.b16 %v51
    %v405 = vunpack.c.h.b16 %v51
    %v406 = vunpack.c.l.b16 %v52
    %v407 = vunpack.c.h.b16 %v52
    %v408 = vunpack.c.l.b16 %v53
    %v409 = vunpack.c.h.b16 %v53
    %v410 = vunpack.c.l.b16 %v54
    %v411 = vunpack.c.h.b16 %v54
    %v412 = vunpack.c.l.b16 %v55
    %v413 = vunpack.c.h.b16 %v55
    %v414 = vunpack.c.l.b16 %v56
    %v415 = vunpack.c.h.b16 %v56
    %v416 = vunpack.c.l.b16 %v57
    %v417 = vunpack.c.h.b16 %v57
    %v418 = vunpack.c.l.b16 %v58
    %v419 = vunpack.c.h.b16 %v58
    %v420 = vunpack.c.l.b16 %v59
    %v421 = vunpack.c.h.b16 %v59
    %v422 = vunpack.c.l.b16 %v60
    %v423 = vunpack.c.h.b16 %v60
    %v424 = vunpack.c.l.b16 %v61
    %v425 = vunpack.c.h.b16 %v61
    %v426 = vunpack.c.l.b16 %v62
    %v427 = vunpack.c.h.b16 %v62
    %v428 = vunpack.c.l.b16 %v63
    %v429 = vunpack.c.h.b16 %v63
    %v430 = vunpack.c.l.b16 %v64
    %v431 = vunpack.c.h.b16 %v64
    %v432 = vunpack.c.l.b16 %v65
    %v433 = vunpack.c.h.b16 %v65
    %v434 = vunpack.c.l.b16 %v66
    %v435 = vunpack.c.h.b16 %v66
    %v436 = vunpack.c.l.b16 %v67
    %v437 = vunpack.c.h.b16 %v67
    %v438 = vunpack.c.l.b16 %v68
    %v439 = vunpack.c.h.b16 %v68
    %v440 = vunpack.c.l.b16 %v69
    %v441 = vunpack.c.h.b16 %v69
    %v442 = vunpack.c.l.b16 %v70
    %v443 = vunpack.c.h.b16 %v70
    %v444 = vunpack.c.l.b16 %v71
    %v445 = vunpack.c.h.b16 %v71
    %v446 = vunpack.c.l.b16 %v72
    %v447 = vunpack.c.h.b16 %v72
    %v448 = vunpack.c.l.b16 %v73
    %v449 = vunpack.c.h.b16 %v73
    %v450 = vunpack.c.l.b16 %v74
    %v451 = vunpack.c.h.b16 %v74
    %v452 = vunpack.c.l.b16 %v75
    %v453 = vunpack.c.h.b16 %v75
    %v454 = vunpack.c.l.b16 %v76
    %v455 = vunpack.c.h.b16 %v76
    %v456 = vunpack.c.l.b16 %v77
    %v457 = vunpack.c.h.b16 %v77
    %v458 = vunpack.c.l.b16 %v78
    %v459 = vunpack.c.h.b16 %v78
    %v460 = vunpack.c.l.b16 %v79
    %v461 = vunpack.c.h.b16 %v79
    %v462 = vunpack.c.l.b16 %v80
    %v463 = vunpack.c.h.b16 %v80
    %v464 = vunpack.c.l.b16 %v81
    %v465 = vunpack.c.h.b16 %v81
    %v466 = vunpack.c.l.b16 %v82
    %v467 = vunpack.c.h.b16 %v82
    %v468 = vunpack.c.l.b16 %v83
    %v469 = vunpack.c.h.b16 %v83
    %v470 = vunpack.c.l.b16 %v84
    %v471 = vunpack.c.h.b16 %v84
    %v472 = vunpack.c.l.b16 %v85
    %v473 = vunpack.c.h.b16 %v85
    %v474 = vunpack.c.l.b16 %v86
    %v475 = vunpack.c.h.b16 %v86
    %v476 = vunpack.c.l.b16 %v87
    %v477 = vunpack.c.h.b16 %v87
    %v478 = vunpack.c.l.b16 %v88
    %v479 = vunpack.c.h.b16 %v88
    %v480 = vunpack.c.l.b16 %v89
    %v481 = vunpack.c.h.b16 %v89
    %v482 = vunpack.c.l.b16 %v90
    %v483 = vunpack.c.h.b16 %v90
    %v484 = vunpack.c.l.b16 %v91
    %v485 = vunpack.c.h.b16 %v91
    %v486 = vunpack.c.l.b16 %v92
    %v487 = vunpack.c.h.b16 %v92
    %v488 = vunpack.c.l.b16 %v93
    %v489 = vunpack.c.h.b16 %v93
    %v490 = vunpack.c.l.b16 %v94
    %v491 = vunpack.c.h.b16 %v94
    %v492 = vunpack.c.l.b16 %v95
    %v493 = vunpack.c.h.b16 %v95
    %v494 = vunpack.c.l.b16 %v96
    %v495 = vunpack.c.h.b16 %v96
    %v496 = vunpack.c.l.b16 %v97
    %v497 = vunpack.c.h.b16 %v97
    %v498 = vunpack.c.l.b16 %v98
    %v499 = vunpack.c.h.b16 %v98
    %v500 = vunpack.c.l.b16 %v99
    %v501 = vunpack.c.h.b16 %v99
    %v502 = vunpack.c.l.b16 %v100
    %v503 = vunpack.c.h.b16 %v100
    %v504 = vunpack.c.l.b16 %v101
    %v505 = vunpack.c.h.b16 %v101
    %v506 = vunpack.c.l.b16 %v102
    %v507 = vunpack.c.h.b16 %v102
    %v508 = vunpack.c.l.b16 %v103
    %v509 = vunpack.c.h.b16 %v103
    %v510 = vunpack.c.l.b16 %v104
    %v511 = vunpack.c.h.b16 %v104
    %v512 = vunpack.c.l.b16 %v105
    %v513 = vunpack.c.h.b16 %v105
    %v514 = vunpack.c.l.b16 %v106
    %v515 = vunpack.c.h.b16 %v106
    %v516 = vunpack.c.l.b16 %v107
    %v517 = vunpack.c.h.b16 %v107
    %v518 = vunpack.c.l.b16 %v108
    %v519 = vunpack.c.h.b16 %v108
    %v520 = vunpack.c.l.b16 %v109
    %v521 = vunpack.c.h.b16 %v109
    %v522 = vunpack.c.l.b16 %v110
    %v523 = vunpack.c.h.b16 %v110
    %v524 = vunpack.c.l.b16 %v111
    %v525 = vunpack.c.h.b16 %v111
    %v526 = vunpack.c.l.b16 %v112
    %v527 = vunpack.c.h.b16 %v112
    %v528 = vunpack.c.l.b16 %v113
    %v529 = vunpack.c.h.b16 %v113
    %v530 = vunpack.c.l.b16 %v114
    %v531 = vunpack.c.h.b16 %v114
    %v532 = vunpack.c.l.b16 %v115
    %v533 = vunpack.c.h.b16 %v115
    %v534 = vunpack.c.l.b16 %v116
    %v535 = vunpack.c.h.b16 %v116
    %v536 = vunpack.c.l.b16 %v117
    %v537 = vunpack.c.h.b16 %v117
    %v538 = vunpack.c.l.b16 %v118
    %v539 = vunpack.c.h.b16 %v118
    %v540 = vunpack.c.l.b16 %v119
    %v541 = vunpack.c.h.b16 %v119
    %v542 = vunpack.c.l.b16 %v120
    %v543 = vunpack.c.h.b16 %v120
    %v544 = vunpack.c.l.b16 %v121
    %v545 = vunpack.c.h.b16 %v121
    %v546 = vunpack.c.l.b16 %v122
    %v547 = vunpack.c.h.b16 %v122
    %v548 = vunpack.c.l.b16 %v123
    %v549 = vunpack.c.h.b16 %v123
    %v550 = vunpack.c.l.b16 %v124
    %v551 = vunpack.c.h.b16 %v124
    %v552 = vunpack.c.l.b16 %v125
    %v553 = vunpack.c.h.b16 %v125
    %v554 = vunpack.c.l.b16 %v126
    %v555 = vunpack.c.h.b16 %v126
    %v556 = vunpack.c.l.b16 %v127
    %v557 = vunpack.c.h.b16 %v127
    %v558 = vunpack.c.l.b16 %v128
    %v559 = vunpack.c.h.b16 %v128
    %v560 = vunpack.c.l.b16 %v129
    %v561 = vunpack.c.h.b16 %v129
    %v562 = vunpack.c.l.b16 %v130
    %v563 = vunpack.c.h.b16 %v130
    %v564 = vunpack.c.l.b16 %v131
    %v565 = vunpack.c.h.b16 %v131
    %v566 = vunpack.c.l.b16 %v132
    %v567 = vunpack.c.h.b16 %v132
    %v568 = vunpack.c.l.b16 %v133
    %v569 = vunpack.c.h.b16 %v133
    %v570 = vunpack.c.l.b16 %v134
    %v571 = vunpack.c.h.b16 %v134
    %v572 = vunpack.c.l.b16 %v135
    %v573 = vunpack.c.h.b16 %v135
    %v574 = vunpack.c.l.b16 %v136
    %v575 = vunpack.c.h.b16 %v136
    %v576 = vunpack.c.l.b16 %v137
    %v577 = vunpack.c.h.b16 %v137
    %v578 = vunpack.c.l.b16 %v138
    %v579 = vunpack.c.h.b16 %v138
    %v580 = vunpack.c.l.b16 %v139
    %v581 = vunpack.c.h.b16 %v139
    %v582 = vunpack.c.l.b16 %v140
    %v583 = vunpack.c.h.b16 %v140
    %v584 = vunpack.c.l.b16 %v141
    %v585 = vunpack.c.h.b16 %v141
    %v586 = vunpack.c.l.b16 %v142
    %v587 = vunpack.c.h.b16 %v142
    %v588 = vunpack.c.l.b16 %v143
    %v589 = vunpack.c.h.b16 %v143
    %v590 = vunpack.c.l.b16 %v144
    %v591 = vunpack.c.h.b16 %v144
    %v592 = vunpack.c.l.b16 %v145
    %v593 = vunpack.c.h.b16 %v145
    %v594 = vpack.c.b16 %v342, %v338
    %v595 = vpack.c.b16 %v343, %v339
    %v596 = vpack.c.b16 %v344, %v340
    %v597 = vpack.c.b16 %v345, %v341
    %v598 = vpack.c.b16 %v350, %v346
    %v599 = vpack.c.b16 %v351, %v347
    %v600 = vpack.c.b16 %v352, %v348
    %v601 = vpack.c.b16 %v353, %v349
    %v602 = vpack.c.b16 %v358, %v354
    %v603 = vpack.c.b16 %v359, %v355
    %v604 = vpack.c.b16 %v360, %v356
    %v605 = vpack.c.b16 %v361, %v357
    %v606 = vpack.c.b16 %v366, %v362
    %v607 = vpack.c.b16 %v367, %v363
    %v608 = vpack.c.b16 %v368, %v364
    %v609 = vpack.c.b16 %v369, %v365
    %v610 = vpack.c.b16 %v374, %v370
    %v611 = vpack.c.b16 %v375, %v371
    %v612 = vpack.c.b16 %v376, %v372
    %v613 = vpack.c.b16 %v377, %v373
    %v614 = vpack.c.b16 %v382, %v378
    %v615 = vpack.c.b16 %v383, %v379
    %v616 = vpack.c.b16 %v384, %v380
    %v617 = vpack.c.b16 %v385, %v381
    %v618 = vpack.c.b16 %v390, %v386
    %v619 = vpack.c.b16 %v391, %v387
    %v620 = vpack.c.b16 %v392, %v388
    %v621 = vpack.c.b16 %v393, %v389
    %v622 = vpack.c.b16 %v398, %v394
    %v623 = vpack.c.b16 %v399, %v395
    %v624 = vpack.c.b16 %v400, %v396
    %v625 = vpack.c.b16 %v401, %v397
    %v626 = vpack.c.b16 %v406, %v402
    %v627 = vpack.c.b16 %v407, %v403
    %v628 = vpack.c.b16 %v408, %v404
    %v629 = vpack.c.b16 %v409, %v405
    %v630 = vpack.c.b16 %v414, %v410
    %v631 = vpack.c.b16 %v415, %v411
    %v632 = vpack.c.b16 %v416, %v412
    %v633 = vpack.c.b16 %v417, %v413
    %v634 = vpack.c.b16 %v422, %v418
    %v635 = vpack.c.b16 %v423, %v419
    %v636 = vpack.c.b16 %v424, %v420
    %v637 = vpack.c.b16 %v425, %v421
    %v638 = vpack.c.b16 %v430, %v426
    %v639 = vpack.c.b16 %v431, %v427
    %v640 = vpack.c.b16 %v432, %v428
    %v641 = vpack.c.b16 %v433, %v429
    %v642 = vpack.c.b16 %v438, %v434
    %v643 = vpack.c.b16 %v439, %v435
    %v644 = vpack.c.b16 %v440, %v436
    %v645 = vpack.c.b16 %v441, %v437
    %v646 = vpack.c.b16 %v446, %v442
    %v647 = vpack.c.b16 %v447, %v443
    %v648 = vpack.c.b16 %v448, %v444
    %v649 = vpack.c.b16 %v449, %v445
    %v650 = vpack.c.b16 %v454, %v450
    %v651 = vpack.c.b16 %v455, %v451
    %v652 = vpack.c.b16 %v456, %v452
    %v653 = vpack.c.b16 %v457, %v453
    %v654 = vpack.c.b16 %v462, %v458
    %v655 = vpack.c.b16 %v463, %v459
    %v656 = vpack.c.b16 %v464, %v460
    %v657 = vpack.c.b16 %v465, %v461
    %v658 = vpack.c.b16 %v470, %v466
    %v659 = vpack.c.b16 %v471, %v467
    %v660 = vpack.c.b16 %v472, %v468
    %v661 = vpack.c.b16 %v473, %v469
    %v662 = vpack.c.b16 %v478, %v474
    %v663 = vpack.c.b16 %v479, %v475
    %v664 = vpack.c.b16 %v480, %v476
    %v665 = vpack.c.b16 %v481, %v477
    %v666 = vpack.c.b16 %v486, %v482
    %v667 = vpack.c.b16 %v487, %v483
    %v668 = vpack.c.b16 %v488, %v484
    %v669 = vpack.c.b16 %v489, %v485
    %v670 = vpack.c.b16 %v494, %v490
    %v671 = vpack.c.b16 %v495, %v491
    %v672 = vpack.c.b16 %v496, %v492
    %v673 = vpack.c.b16 %v497, %v493
    %v674 = vpack.c.b16 %v502, %v498
    %v675 = vpack.c.b16 %v503, %v499
    %v676 = vpack.c.b16 %v504, %v500
    %v677 = vpack.c.b16 %v505, %v501
    %v678 = vpack.c.b16 %v510, %v506
    %v679 = vpack.c.b16 %v511, %v507
    %v680 = vpack.c.b16 %v512, %v508
    %v681 = vpack.c.b16 %v513, %v509
    %v682 = vpack.c.b16 %v518, %v514
    %v683 = vpack.c.b16 %v519, %v515
    %v684 = vpack.c.b16 %v520, %v516
    %v685 = vpack.c.b16 %v521, %v517
    %v686 = vpack.c.b16 %v526, %v522
    %v687 = vpack.c.b16 %v527, %v523
    %v688 = vpack.c.b16 %v528, %v524
    %v689 = vpack.c.b16 %v529, %v525
    %v690 = vpack.c.b16 %v534, %v530
    %v691 = vpack.c.b16 %v535, %v531
    %v692 = vpack.c.b16 %v536, %v532
    %v693 = vpack.c.b16 %v537, %v533
    %v694 = vpack.c.b16 %v542, %v538
    %v695 = vpack.c.b16 %v543, %v539
    %v696 = vpack.c.b16 %v544, %v540
    %v697 = vpack.c.b16 %v545, %v541
    %v698 = vpack.c.b16 %v550, %v546
    %v699 = vpack.c.b16 %v551, %v547
    %v700 = vpack.c.b16 %v552, %v548
    %v701 = vpack.c.b16 %v553, %v549
    %v702 = vpack.c.b16 %v558, %v554
    %v703 = vpack.c.b16 %v559, %v555
    %v704 = vpack.c.b16 %v560, %v556
    %v705 = vpack.c.b16 %v561, %v557
    %v706 = vpack.c.b16 %v566, %v562
    %v707 = vpack.c.b16 %v567, %v563
    %v708 = vpack.c.b16 %v568, %v564
    %v709 = vpack.c.b16 %v569, %v565
    %v710 = vpack.c.b16 %v574, %v570
    %v711 = vpack.c.b16 %v575, %v571
    %v712 = vpack.c.b16 %v576, %v572
    %v713 = vpack.c.b16 %v577, %v573
    %v714 = vpack.c.b16 %v582, %v578
    %v715 = vpack.c.b16 %v583, %v579
    %v716 = vpack.c.b16 %v584, %v580
    %v717 = vpack.c.b16 %v585, %v581
    %v718 = vpack.c.b16 %v590, %v586
    %v719 = vpack.c.b16 %v591, %v587
    %v720 = vpack.c.b16 %v592, %v588
    %v721 = vpack.c.b16 %v593, %v589
    %v914 = vunpack.c.l.b16 %v146
    %v915 = vunpack.c.l.b16 %v147
    %v916 = vunpack.c.l.b16 %v148
    %v917 = vunpack.c.l.b16 %v149
    %v918 = vunpack.c.l.b16 %v150
    %v919 = vunpack.c.l.b16 %v151
    %v920 = vunpack.c.l.b16 %v152
    %v921 = vunpack.c.l.b16 %v153
    %v922 = vunpack.c.l.b16 %v154
    %v923 = vunpack.c.l.b16 %v155
    %v924 = vunpack.c.l.b16 %v156
    %v925 = vunpack.c.l.b16 %v157
    %v926 = vunpack.c.l.b16 %v158
    %v927 = vunpack.c.l.b16 %v159
    %v928 = vunpack.c.l.b16 %v160
    %v929 = vunpack.c.l.b16 %v161
    %v930 = vunpack.c.l.b16 %v162
    %v931 = vunpack.c.l.b16 %v163
    %v932 = vunpack.c.l.b16 %v164
    %v933 = vunpack.c.l.b16 %v165
    %v934 = vunpack.c.l.b16 %v166
    %v935 = vunpack.c.l.b16 %v167
    %v936 = vunpack.c.l.b16 %v168
    %v937 = vunpack.c.l.b16 %v169
    %v938 = vunpack.c.l.b16 %v170
    %v939 = vunpack.c.l.b16 %v171
    %v940 = vunpack.c.l.b16 %v172
    %v941 = vunpack.c.l.b16 %v173
    %v942 = vunpack.c.l.b16 %v174
    %v943 = vunpack.c.l.b16 %v175
    %v944 = vunpack.c.l.b16 %v176
    %v945 = vunpack.c.l.b16 %v177
    %v946 = vunpack.c.l.b16 %v178
    %v947 = vunpack.c.l.b16 %v179
    %v948 = vunpack.c.l.b16 %v180
    %v949 = vunpack.c.l.b16 %v181
    %v950 = vunpack.c.l.b16 %v182
    %v951 = vunpack.c.l.b16 %v183
    %v952 = vunpack.c.l.b16 %v184
    %v953 = vunpack.c.l.b16 %v185
    %v954 = vunpack.c.l.b16 %v186
    %v955 = vunpack.c.l.b16 %v187
    %v956 = vunpack.c.l.b16 %v188
    %v957 = vunpack.c.l.b16 %v189
    %v958 = vunpack.c.l.b16 %v190
    %v959 = vunpack.c.l.b16 %v191
    %v960 = vunpack.c.l.b16 %v192
    %v961 = vunpack.c.l.b16 %v193
    %v962 = vunpack.c.l.b16 %v194
    %v963 = vunpack.c.l.b16 %v195
    %v964 = vunpack.c.l.b16 %v196
    %v965 = vunpack.c.l.b16 %v197
    %v966 = vunpack.c.l.b16 %v198
    %v967 = vunpack.c.l.b16 %v199
    %v968 = vunpack.c.l.b16 %v200
    %v969 = vunpack.c.l.b16 %v201
    %v970 = vunpack.c.l.b16 %v202
    %v971 = vunpack.c.l.b16 %v203
    %v972 = vunpack.c.l.b16 %v204
    %v973 = vunpack.c.l.b16 %v205
    %v974 = vunpack.c.l.b16 %v206
    %v975 = vunpack.c.l.b16 %v207
    %v976 = vunpack.c.l.b16 %v208
    %v977 = vunpack.c.l.b16 %v209
    %v978 = vpack.c.b16 %v915, %v914
    %v979 = vpack.c.b16 %v917, %v916
    %v980 = vpack.c.b16 %v919, %v918
    %v981 = vpack.c.b16 %v921, %v920
    %v982 = vpack.c.b16 %v923, %v922
    %v983 = vpack.c.b16 %v925, %v924
    %v984 = vpack.c.b16 %v927, %v926
    %v985 = vpack.c.b16 %v929, %v928
    %v986 = vpack.c.b16 %v931, %v930
    %v987 = vpack.c.b16 %v933, %v932
    %v988 = vpack.c.b16 %v935, %v934
    %v989 = vpack.c.b16 %v937, %v936
    %v990 = vpack.c.b16 %v939, %v938
    %v991 = vpack.c.b16 %v941, %v940
    %v992 = vpack.c.b16 %v943, %v942
    %v993 = vpack.c.b16 %v945, %v944
    %v994 = vpack.c.b16 %v947, %v946
    %v995 = vpack.c.b16 %v949, %v948
    %v996 = vpack.c.b16 %v951, %v950
    %v997 = vpack.c.b16 %v953, %v952
    %v998 = vpack.c.b16 %v955, %v954
    %v999 = vpack.c.b16 %v957, %v956
    %v1000 = vpack.c.b16 %v959, %v958
    %v1001 = vpack.c.b16 %v961, %v960
    %v1002 = vpack.c.b16 %v963, %v962
    %v1003 = vpack.c.b16 %v965, %v964
    %v1004 = vpack.c.b16 %v967, %v966
    %v1005 = vpack.c.b16 %v969, %v968
    %v1006 = vpack.c.b16 %v971, %v970
    %v1007 = vpack.c.b16 %v973, %v972
    %v1008 = vpack.c.b16 %v975, %v974
    %v1009 = vpack.c.b16 %v977, %v976
    %1042 = vmatprep.subr.bf16.mxu0 0
    %1043 = vmatpush1.bf16.msra.mxu0 %v978
    %1044 = vmatprep.subr.bf16.mxu0 0
    %1045 = vmatpush1.bf16.msra.mxu0 %v979
    %1046 = vmatprep.subr.bf16.mxu0 0
    %1047 = vmatpush1.bf16.msra.mxu0 %v980
    %1048 = vmatprep.subr.bf16.mxu0 0
    %1049 = vmatpush1.bf16.msra.mxu0 %v981
    %1050 = vmatprep.subr.bf16.mxu0 0
    %1051 = vmatpush1.bf16.msra.mxu0 %v982
    %1052 = vmatprep.subr.bf16.mxu0 0
    %1053 = vmatpush1.bf16.msra.mxu0 %v983
    %1054 = vmatprep.subr.bf16.mxu0 0
    %1055 = vmatpush1.bf16.msra.mxu0 %v984
    %1056 = vmatprep.subr.bf16.mxu0 0
    %1057 = vmatpush1.bf16.msra.mxu0 %v985
    %1058 = vmatprep.subr.bf16.mxu0 0
    %1059 = vmatpush1.bf16.msra.mxu0 %v986
    %1060 = vmatprep.subr.bf16.mxu0 0
    %1061 = vmatpush1.bf16.msra.mxu0 %v987
    %1062 = vmatprep.subr.bf16.mxu0 0
    %1063 = vmatpush1.bf16.msra.mxu0 %v988
    %1064 = vmatprep.subr.bf16.mxu0 0
    %1065 = vmatpush1.bf16.msra.mxu0 %v989
    %1066 = vmatprep.subr.bf16.mxu0 0
    %1067 = vmatpush1.bf16.msra.mxu0 %v990
    %1068 = vmatprep.subr.bf16.mxu0 0
    %1069 = vmatpush1.bf16.msra.mxu0 %v991
    %1070 = vmatprep.subr.bf16.mxu0 0
    %1071 = vmatpush1.bf16.msra.mxu0 %v992
    %1072 = vmatprep.subr.bf16.mxu0 0
    %1073 = vmatpush1.bf16.msra.mxu0 %v993
    %1074 = vmatprep.mubr.bf16.mxu0 %v595
    %1075 = vmatmul.mubr.bf16.gmra.mrb[0].mxu0 %v594
    %v1076 = vpop.f32.mrb[0].mxu0
    %v1077 = vadd.f32 0.0, %v1076
    %v1078 = vpop.f32.mrb[0].mxu0
    %v1079 = vpop.f32.mrb[0].mxu0
    %v1080 = vadd.f32 0.0, %v1079
    %v1081 = vpop.f32.mrb[0].mxu0
    %1082 = vmatprep.mubr.bf16.mxu0 %v599
    %1083 = vmatmul.mubr.bf16.gmra.mrb[0].mxu0 %v598
    %v1084 = vpop.f32.mrb[0].mxu0
    %v1085 = vadd.f32 0.0, %v1084
    %v1086 = vpop.f32.mrb[0].mxu0
    %v1087 = vpop.f32.mrb[0].mxu0
    %v1088 = vadd.f32 0.0, %v1087
    %v1089 = vpop.f32.mrb[0].mxu0
    %1090 = vmatprep.mubr.bf16.mxu0 %v603
    %1091 = vmatmul.mubr.bf16.gmra.mrb[0].mxu0 %v602
    %v1092 = vpop.f32.mrb[0].mxu0
    %v1093 = vadd.f32 0.0, %v1092
    %v1094 = vpop.f32.mrb[0].mxu0
    %v1095 = vpop.f32.mrb[0].mxu0
    %v1096 = vadd.f32 0.0, %v1095
    %v1097 = vpop.f32.mrb[0].mxu0
    %1098 = vmatprep.mubr.bf16.mxu0 %v607
    %1099 = vmatmul.mubr.bf16.gmra.mrb[0].mxu0 %v606
    %v1100 = vpop.f32.mrb[0].mxu0
    %v1101 = vadd.f32 0.0, %v1100
    %v1102 = vpop.f32.mrb[0].mxu0
    %v1103 = vpop.f32.mrb[0].mxu0
    %v1104 = vadd.f32 0.0, %v1103
    %v1105 = vpop.f32.mrb[0].mxu0
    %1106 = vmatprep.mubr.bf16.mxu0 %v611
    %1107 = vmatmul.mubr.bf16.gmra.mrb[0].mxu0 %v610
    %v1108 = vpop.f32.mrb[0].mxu0
    %v1109 = vadd.f32 0.0, %v1108
    %v1110 = vpop.f32.mrb[0].mxu0
    %v1111 = vpop.f32.mrb[0].mxu0
    %v1112 = vadd.f32 0.0, %v1111
    %v1113 = vpop.f32.mrb[0].mxu0
    %1114 = vmatprep.mubr.bf16.mxu0 %v615
    %1115 = vmatmul.mubr.bf16.gmra.mrb[0].mxu0 %v614
    %v1116 = vpop.f32.mrb[0].mxu0
    %v1117 = vadd.f32 0.0, %v1116
    %v1118 = vpop.f32.mrb[0].mxu0
    %v1119 = vpop.f32.mrb[0].mxu0
    %v1120 = vadd.f32 0.0, %v1119
    %v1121 = vpop.f32.mrb[0].mxu0
    %1122 = vmatprep.mubr.bf16.mxu0 %v619
    %1123 = vmatmul.mubr.bf16.gmra.mrb[0].mxu0 %v618
    %v1124 = vpop.f32.mrb[0].mxu0
    %v1125 = vadd.f32 0.0, %v1124
    %v1126 = vpop.f32.mrb[0].mxu0
    %v1127 = vpop.f32.mrb[0].mxu0
    %v1128 = vadd.f32 0.0, %v1127
    %v1129 = vpop.f32.mrb[0].mxu0
    %1130 = vmatprep.mubr.bf16.mxu0 %v623
    %1131 = vmatmul.mubr.bf16.gmra.mrb[0].mxu0 %v622
    %v1132 = vpop.f32.mrb[0].mxu0
    %v1133 = vadd.f32 0.0, %v1132
    %v1134 = vpop.f32.mrb[0].mxu0
    %v1135 = vpop.f32.mrb[0].mxu0
    %v1136 = vadd.f32 0.0, %v1135
    %v1137 = vpop.f32.mrb[0].mxu0
    %1138 = vmatprep.mubr.bf16.mxu0 %v627
    %1139 = vmatmul.mubr.bf16.gmra.mrb[0].mxu0 %v626
    %v1140 = vpop.f32.mrb[0].mxu0
    %v1141 = vadd.f32 0.0, %v1140
    %v1142 = vpop.f32.mrb[0].mxu0
    %v1143 = vpop.f32.mrb[0].mxu0
    %v1144 = vadd.f32 0.0, %v1143
    %v1145 = vpop.f32.mrb[0].mxu0
    %1146 = vmatprep.mubr.bf16.mxu0 %v631
    %1147 = vmatmul.mubr.bf16.gmra.mrb[0].mxu0 %v630
    %v1148 = vpop.f32.mrb[0].mxu0
    %v1149 = vadd.f32 0.0, %v1148
    %v1150 = vpop.f32.mrb[0].mxu0
    %v1151 = vpop.f32.mrb[0].mxu0
    %v1152 = vadd.f32 0.0, %v1151
    %v1153 = vpop.f32.mrb[0].mxu0
    %1154 = vmatprep.mubr.bf16.mxu0 %v635
    %1155 = vmatmul.mubr.bf16.gmra.mrb[0].mxu0 %v634
    %v1156 = vpop.f32.mrb[0].mxu0
    %v1157 = vadd.f32 0.0, %v1156
    %v1158 = vpop.f32.mrb[0].mxu0
    %v1159 = vpop.f32.mrb[0].mxu0
    %v1160 = vadd.f32 0.0, %v1159
    %v1161 = vpop.f32.mrb[0].mxu0
    %1162 = vmatprep.mubr.bf16.mxu0 %v639
    %1163 = vmatmul.mubr.bf16.gmra.mrb[0].mxu0 %v638
    %v1164 = vpop.f32.mrb[0].mxu0
    %v1165 = vadd.f32 0.0, %v1164
    %v1166 = vpop.f32.mrb[0].mxu0
    %v1167 = vpop.f32.mrb[0].mxu0
    %v1168 = vadd.f32 0.0, %v1167
    %v1169 = vpop.f32.mrb[0].mxu0
    %1170 = vmatprep.mubr.bf16.mxu0 %v643
    %1171 = vmatmul.mubr.bf16.gmra.mrb[0].mxu0 %v642
    %v1172 = vpop.f32.mrb[0].mxu0
    %v1173 = vadd.f32 0.0, %v1172
    %v1174 = vpop.f32.mrb[0].mxu0
    %v1175 = vpop.f32.mrb[0].mxu0
    %v1176 = vadd.f32 0.0, %v1175
    %v1177 = vpop.f32.mrb[0].mxu0
    %1178 = vmatprep.mubr.bf16.mxu0 %v647
    %1179 = vmatmul.mubr.bf16.gmra.mrb[0].mxu0 %v646
    %v1180 = vpop.f32.mrb[0].mxu0
    %v1181 = vadd.f32 0.0, %v1180
    %v1182 = vpop.f32.mrb[0].mxu0
    %v1183 = vpop.f32.mrb[0].mxu0
    %v1184 = vadd.f32 0.0, %v1183
    %v1185 = vpop.f32.mrb[0].mxu0
    %1186 = vmatprep.mubr.bf16.mxu0 %v651
    %1187 = vmatmul.mubr.bf16.gmra.mrb[0].mxu0 %v650
    %v1188 = vpop.f32.mrb[0].mxu0
    %v1189 = vadd.f32 0.0, %v1188
    %v1190 = vpop.f32.mrb[0].mxu0
    %v1191 = vpop.f32.mrb[0].mxu0
    %v1192 = vadd.f32 0.0, %v1191
    %v1193 = vpop.f32.mrb[0].mxu0
    %1194 = vmatprep.mubr.bf16.mxu0 %v655
    %1195 = vmatmul.mubr.bf16.gmra.mrb[0].mxu0 %v654
    %v1196 = vpop.f32.mrb[0].mxu0
    %v1197 = vadd.f32 0.0, %v1196
    %v1198 = vpop.f32.mrb[0].mxu0
    %v1199 = vpop.f32.mrb[0].mxu0
    %v1200 = vadd.f32 0.0, %v1199
    %v1201 = vpop.f32.mrb[0].mxu0
    %1202 = vmatprep.mubr.bf16.mxu0 %v659
    %1203 = vmatmul.mubr.bf16.gmra.mrb[0].mxu0 %v658
    %v1204 = vpop.f32.mrb[0].mxu0
    %v1205 = vadd.f32 0.0, %v1204
    %v1206 = vpop.f32.mrb[0].mxu0
    %v1207 = vpop.f32.mrb[0].mxu0
    %v1208 = vadd.f32 0.0, %v1207
    %v1209 = vpop.f32.mrb[0].mxu0
    %1210 = vmatprep.mubr.bf16.mxu0 %v663
    %1211 = vmatmul.mubr.bf16.gmra.mrb[0].mxu0 %v662
    %v1212 = vpop.f32.mrb[0].mxu0
    %v1213 = vadd.f32 0.0, %v1212
    %v1214 = vpop.f32.mrb[0].mxu0
    %v1215 = vpop.f32.mrb[0].mxu0
    %v1216 = vadd.f32 0.0, %v1215
    %v1217 = vpop.f32.mrb[0].mxu0
    %1218 = vmatprep.mubr.bf16.mxu0 %v667
    %1219 = vmatmul.mubr.bf16.gmra.mrb[0].mxu0 %v666
    %v1220 = vpop.f32.mrb[0].mxu0
    %v1221 = vadd.f32 0.0, %v1220
    %v1222 = vpop.f32.mrb[0].mxu0
    %v1223 = vpop.f32.mrb[0].mxu0
    %v1224 = vadd.f32 0.0, %v1223
    %v1225 = vpop.f32.mrb[0].mxu0
    %1226 = vmatprep.mubr.bf16.mxu0 %v671
    %1227 = vmatmul.mubr.bf16.gmra.mrb[0].mxu0 %v670
    %v1228 = vpop.f32.mrb[0].mxu0
    %v1229 = vadd.f32 0.0, %v1228
    %v1230 = vpop.f32.mrb[0].mxu0
    %v1231 = vpop.f32.mrb[0].mxu0
    %v1232 = vadd.f32 0.0, %v1231
    %v1233 = vpop.f32.mrb[0].mxu0
    %1234 = vmatprep.mubr.bf16.mxu0 %v675
    %1235 = vmatmul.mubr.bf16.gmra.mrb[0].mxu0 %v674
    %v1236 = vpop.f32.mrb[0].mxu0
    %v1237 = vadd.f32 0.0, %v1236
    %v1238 = vpop.f32.mrb[0].mxu0
    %v1239 = vpop.f32.mrb[0].mxu0
    %v1240 = vadd.f32 0.0, %v1239
    %v1241 = vpop.f32.mrb[0].mxu0
    %1242 = vmatprep.mubr.bf16.mxu0 %v679
    %1243 = vmatmul.mubr.bf16.gmra.mrb[0].mxu0 %v678
    %v1244 = vpop.f32.mrb[0].mxu0
    %v1245 = vadd.f32 0.0, %v1244
    %v1246 = vpop.f32.mrb[0].mxu0
    %v1247 = vpop.f32.mrb[0].mxu0
    %v1248 = vadd.f32 0.0, %v1247
    %v1249 = vpop.f32.mrb[0].mxu0
    %1250 = vmatprep.mubr.bf16.mxu0 %v683
    %1251 = vmatmul.mubr.bf16.gmra.mrb[0].mxu0 %v682
    %v1252 = vpop.f32.mrb[0].mxu0
    %v1253 = vadd.f32 0.0, %v1252
    %v1254 = vpop.f32.mrb[0].mxu0
    %v1255 = vpop.f32.mrb[0].mxu0
    %v1256 = vadd.f32 0.0, %v1255
    %v1257 = vpop.f32.mrb[0].mxu0
    %1258 = vmatprep.mubr.bf16.mxu0 %v687
    %1259 = vmatmul.mubr.bf16.gmra.mrb[0].mxu0 %v686
    %v1260 = vpop.f32.mrb[0].mxu0
    %v1261 = vadd.f32 0.0, %v1260
    %v1262 = vpop.f32.mrb[0].mxu0
    %v1263 = vpop.f32.mrb[0].mxu0
    %v1264 = vadd.f32 0.0, %v1263
    %v1265 = vpop.f32.mrb[0].mxu0
    %1266 = vmatprep.mubr.bf16.mxu0 %v691
    %1267 = vmatmul.mubr.bf16.gmra.mrb[0].mxu0 %v690
    %v1268 = vpop.f32.mrb[0].mxu0
    %v1269 = vadd.f32 0.0, %v1268
    %v1270 = vpop.f32.mrb[0].mxu0
    %v1271 = vpop.f32.mrb[0].mxu0
    %v1272 = vadd.f32 0.0, %v1271
    %v1273 = vpop.f32.mrb[0].mxu0
    %1274 = vmatprep.mubr.bf16.mxu0 %v695
    %1275 = vmatmul.mubr.bf16.gmra.mrb[0].mxu0 %v694
    %v1276 = vpop.f32.mrb[0].mxu0
    %v1277 = vadd.f32 0.0, %v1276
    %v1278 = vpop.f32.mrb[0].mxu0
    %v1279 = vpop.f32.mrb[0].mxu0
    %v1280 = vadd.f32 0.0, %v1279
    %v1281 = vpop.f32.mrb[0].mxu0
    %1282 = vmatprep.mubr.bf16.mxu0 %v699
    %1283 = vmatmul.mubr.bf16.gmra.mrb[0].mxu0 %v698
    %v1284 = vpop.f32.mrb[0].mxu0
    %v1285 = vadd.f32 0.0, %v1284
    %v1286 = vpop.f32.mrb[0].mxu0
    %v1287 = vpop.f32.mrb[0].mxu0
    %v1288 = vadd.f32 0.0, %v1287
    %v1289 = vpop.f32.mrb[0].mxu0
    %1290 = vmatprep.mubr.bf16.mxu0 %v703
    %1291 = vmatmul.mubr.bf16.gmra.mrb[0].mxu0 %v702
    %v1292 = vpop.f32.mrb[0].mxu0
    %v1293 = vadd.f32 0.0, %v1292
    %v1294 = vpop.f32.mrb[0].mxu0
    %v1295 = vpop.f32.mrb[0].mxu0
    %v1296 = vadd.f32 0.0, %v1295
    %v1297 = vpop.f32.mrb[0].mxu0
    %1298 = vmatprep.mubr.bf16.mxu0 %v707
    %1299 = vmatmul.mubr.bf16.gmra.mrb[0].mxu0 %v706
    %v1300 = vpop.f32.mrb[0].mxu0
    %v1301 = vadd.f32 0.0, %v1300
    %v1302 = vpop.f32.mrb[0].mxu0
    %v1303 = vpop.f32.mrb[0].mxu0
    %v1304 = vadd.f32 0.0, %v1303
    %v1305 = vpop.f32.mrb[0].mxu0
    %1306 = vmatprep.mubr.bf16.mxu0 %v711
    %1307 = vmatmul.mubr.bf16.gmra.mrb[0].mxu0 %v710
    %v1308 = vpop.f32.mrb[0].mxu0
    %v1309 = vadd.f32 0.0, %v1308
    %v1310 = vpop.f32.mrb[0].mxu0
    %v1311 = vpop.f32.mrb[0].mxu0
    %v1312 = vadd.f32 0.0, %v1311
    %v1313 = vpop.f32.mrb[0].mxu0
    %1314 = vmatprep.mubr.bf16.mxu0 %v715
    %1315 = vmatmul.mubr.bf16.gmra.mrb[0].mxu0 %v714
    %v1316 = vpop.f32.mrb[0].mxu0
    %v1317 = vadd.f32 0.0, %v1316
    %v1318 = vpop.f32.mrb[0].mxu0
    %v1319 = vpop.f32.mrb[0].mxu0
    %v1320 = vadd.f32 0.0, %v1319
    %v1321 = vpop.f32.mrb[0].mxu0
    %1322 = vmatprep.mubr.bf16.mxu0 %v719
    %1323 = vmatmul.mubr.bf16.gmra.mrb[0].mxu0 %v718
    %v1324 = vpop.f32.mrb[0].mxu0
    %v1325 = vadd.f32 0.0, %v1324
    %v1326 = vpop.f32.mrb[0].mxu0
    %v1327 = vpop.f32.mrb[0].mxu0
    %v1328 = vadd.f32 0.0, %v1327
    %v1329 = vpop.f32.mrb[0].mxu0
    %1330 = vdwg.mxu0
    %1331 = vmatprep.subr.bf16.mxu0 0
    %1332 = vmatpush1.bf16.msra.mxu0 %v994
    %1333 = vmatprep.subr.bf16.mxu0 0
    %1334 = vmatpush1.bf16.msra.mxu0 %v995
    %1335 = vmatprep.subr.bf16.mxu0 0
    %1336 = vmatpush1.bf16.msra.mxu0 %v996
    %1337 = vmatprep.subr.bf16.mxu0 0
    %1338 = vmatpush1.bf16.msra.mxu0 %v997
    %1339 = vmatprep.subr.bf16.mxu0 0
    %1340 = vmatpush1.bf16.msra.mxu0 %v998
    %1341 = vmatprep.subr.bf16.mxu0 0
    %1342 = vmatpush1.bf16.msra.mxu0 %v999
    %1343 = vmatprep.subr.bf16.mxu0 0
    %1344 = vmatpush1.bf16.msra.mxu0 %v1000
    %1345 = vmatprep.subr.bf16.mxu0 0
    %1346 = vmatpush1.bf16.msra.mxu0 %v1001
    %1347 = vmatprep.subr.bf16.mxu0 0
    %1348 = vmatpush1.bf16.msra.mxu0 %v1002
    %1349 = vmatprep.subr.bf16.mxu0 0
    %1350 = vmatpush1.bf16.msra.mxu0 %v1003
    %1351 = vmatprep.subr.bf16.mxu0 0
    %1352 = vmatpush1.bf16.msra.mxu0 %v1004
    %1353 = vmatprep.subr.bf16.mxu0 0
    %1354 = vmatpush1.bf16.msra.mxu0 %v1005
    %1355 = vmatprep.subr.bf16.mxu0 0
    %1356 = vmatpush1.bf16.msra.mxu0 %v1006
    %1357 = vmatprep.subr.bf16.mxu0 0
    %1358 = vmatpush1.bf16.msra.mxu0 %v1007
    %1359 = vmatprep.subr.bf16.mxu0 0
    %1360 = vmatpush1.bf16.msra.mxu0 %v1008
    %1361 = vmatprep.subr.bf16.mxu0 0
    %1362 = vmatpush1.bf16.msra.mxu0 %v1009
    %1363 = vmatprep.mubr.bf16.mxu0 %v597
    %1364 = vmatmul.mubr.bf16.gmra.mrb[0].mxu0 %v596
    %v1365 = vpop.f32.mrb[0].mxu0
    %v1366 = vadd.f32 %v1077, %v1365
    %v1367 = vpop.f32.mrb[0].mxu0
    %v1368 = vpop.f32.mrb[0].mxu0
    %v1369 = vadd.f32 %v1080, %v1368
    %v1370 = vpop.f32.mrb[0].mxu0
    %1371 = vmatprep.mubr.bf16.mxu0 %v601
    %1372 = vmatmul.mubr.bf16.gmra.mrb[0].mxu0 %v600
    %v1373 = vpop.f32.mrb[0].mxu0
    %v1374 = vadd.f32 %v1085, %v1373
    %v1375 = vpop.f32.mrb[0].mxu0
    %v1376 = vpop.f32.mrb[0].mxu0
    %v1377 = vadd.f32 %v1088, %v1376
    %v1378 = vpop.f32.mrb[0].mxu0
    %1379 = vmatprep.mubr.bf16.mxu0 %v605
    %1380 = vmatmul.mubr.bf16.gmra.mrb[0].mxu0 %v604
    %v1381 = vpop.f32.mrb[0].mxu0
    %v1382 = vadd.f32 %v1093, %v1381
    %v1383 = vpop.f32.mrb[0].mxu0
    %v1384 = vpop.f32.mrb[0].mxu0
    %v1385 = vadd.f32 %v1096, %v1384
    %v1386 = vpop.f32.mrb[0].mxu0
    %1387 = vmatprep.mubr.bf16.mxu0 %v609
    %1388 = vmatmul.mubr.bf16.gmra.mrb[0].mxu0 %v608
    %v1389 = vpop.f32.mrb[0].mxu0
    %v1390 = vadd.f32 %v1101, %v1389
    %v1391 = vpop.f32.mrb[0].mxu0
    %v1392 = vpop.f32.mrb[0].mxu0
    %v1393 = vadd.f32 %v1104, %v1392
    %v1394 = vpop.f32.mrb[0].mxu0
    %1395 = vmatprep.mubr.bf16.mxu0 %v613
    %1396 = vmatmul.mubr.bf16.gmra.mrb[0].mxu0 %v612
    %v1397 = vpop.f32.mrb[0].mxu0
    %v1398 = vadd.f32 %v1109, %v1397
    %v1399 = vpop.f32.mrb[0].mxu0
    %v1400 = vpop.f32.mrb[0].mxu0
    %v1401 = vadd.f32 %v1112, %v1400
    %v1402 = vpop.f32.mrb[0].mxu0
    %1403 = vmatprep.mubr.bf16.mxu0 %v617
    %1404 = vmatmul.mubr.bf16.gmra.mrb[0].mxu0 %v616
    %v1405 = vpop.f32.mrb[0].mxu0
    %v1406 = vadd.f32 %v1117, %v1405
    %v1407 = vpop.f32.mrb[0].mxu0
    %v1408 = vpop.f32.mrb[0].mxu0
    %v1409 = vadd.f32 %v1120, %v1408
    %v1410 = vpop.f32.mrb[0].mxu0
    %1411 = vmatprep.mubr.bf16.mxu0 %v621
    %1412 = vmatmul.mubr.bf16.gmra.mrb[0].mxu0 %v620
    %v1413 = vpop.f32.mrb[0].mxu0
    %v1414 = vadd.f32 %v1125, %v1413
    %v1415 = vpop.f32.mrb[0].mxu0
    %v1416 = vpop.f32.mrb[0].mxu0
    %v1417 = vadd.f32 %v1128, %v1416
    %v1418 = vpop.f32.mrb[0].mxu0
    %1419 = vmatprep.mubr.bf16.mxu0 %v625
    %1420 = vmatmul.mubr.bf16.gmra.mrb[0].mxu0 %v624
    %v1421 = vpop.f32.mrb[0].mxu0
    %v1422 = vadd.f32 %v1133, %v1421
    %v1423 = vpop.f32.mrb[0].mxu0
    %v1424 = vpop.f32.mrb[0].mxu0
    %v1425 = vadd.f32 %v1136, %v1424
    %v1426 = vpop.f32.mrb[0].mxu0
    %1427 = vmatprep.mubr.bf16.mxu0 %v629
    %1428 = vmatmul.mubr.bf16.gmra.mrb[0].mxu0 %v628
    %v1429 = vpop.f32.mrb[0].mxu0
    %v1430 = vadd.f32 %v1141, %v1429
    %v1431 = vpop.f32.mrb[0].mxu0
    %v1432 = vpop.f32.mrb[0].mxu0
    %v1433 = vadd.f32 %v1144, %v1432
    %v1434 = vpop.f32.mrb[0].mxu0
    %1435 = vmatprep.mubr.bf16.mxu0 %v633
    %1436 = vmatmul.mubr.bf16.gmra.mrb[0].mxu0 %v632
    %v1437 = vpop.f32.mrb[0].mxu0
    %v1438 = vadd.f32 %v1149, %v1437
    %v1439 = vpop.f32.mrb[0].mxu0
    %v1440 = vpop.f32.mrb[0].mxu0
    %v1441 = vadd.f32 %v1152, %v1440
    %v1442 = vpop.f32.mrb[0].mxu0
    %1443 = vmatprep.mubr.bf16.mxu0 %v637
    %1444 = vmatmul.mubr.bf16.gmra.mrb[0].mxu0 %v636
    %v1445 = vpop.f32.mrb[0].mxu0
    %v1446 = vadd.f32 %v1157, %v1445
    %v1447 = vpop.f32.mrb[0].mxu0
    %v1448 = vpop.f32.mrb[0].mxu0
    %v1449 = vadd.f32 %v1160, %v1448
    %v1450 = vpop.f32.mrb[0].mxu0
    %1451 = vmatprep.mubr.bf16.mxu0 %v641
    %1452 = vmatmul.mubr.bf16.gmra.mrb[0].mxu0 %v640
    %v1453 = vpop.f32.mrb[0].mxu0
    %v1454 = vadd.f32 %v1165, %v1453
    %v1455 = vpop.f32.mrb[0].mxu0
    %v1456 = vpop.f32.mrb[0].mxu0
    %v1457 = vadd.f32 %v1168, %v1456
    %v1458 = vpop.f32.mrb[0].mxu0
    %1459 = vmatprep.mubr.bf16.mxu0 %v645
    %1460 = vmatmul.mubr.bf16.gmra.mrb[0].mxu0 %v644
    %v1461 = vpop.f32.mrb[0].mxu0
    %v1462 = vadd.f32 %v1173, %v1461
    %v1463 = vpop.f32.mrb[0].mxu0
    %v1464 = vpop.f32.mrb[0].mxu0
    %v1465 = vadd.f32 %v1176, %v1464
    %v1466 = vpop.f32.mrb[0].mxu0
    %1467 = vmatprep.mubr.bf16.mxu0 %v649
    %1468 = vmatmul.mubr.bf16.gmra.mrb[0].mxu0 %v648
    %v1469 = vpop.f32.mrb[0].mxu0
    %v1470 = vadd.f32 %v1181, %v1469
    %v1471 = vpop.f32.mrb[0].mxu0
    %v1472 = vpop.f32.mrb[0].mxu0
    %v1473 = vadd.f32 %v1184, %v1472
    %v1474 = vpop.f32.mrb[0].mxu0
    %1475 = vmatprep.mubr.bf16.mxu0 %v653
    %1476 = vmatmul.mubr.bf16.gmra.mrb[0].mxu0 %v652
    %v1477 = vpop.f32.mrb[0].mxu0
    %v1478 = vadd.f32 %v1189, %v1477
    %v1479 = vpop.f32.mrb[0].mxu0
    %v1480 = vpop.f32.mrb[0].mxu0
    %v1481 = vadd.f32 %v1192, %v1480
    %v1482 = vpop.f32.mrb[0].mxu0
    %1483 = vmatprep.mubr.bf16.mxu0 %v657
    %1484 = vmatmul.mubr.bf16.gmra.mrb[0].mxu0 %v656
    %v1485 = vpop.f32.mrb[0].mxu0
    %v1486 = vadd.f32 %v1197, %v1485
    %v1487 = vpop.f32.mrb[0].mxu0
    %v1488 = vpop.f32.mrb[0].mxu0
    %v1489 = vadd.f32 %v1200, %v1488
    %v1490 = vpop.f32.mrb[0].mxu0
    %1491 = vmatprep.mubr.bf16.mxu0 %v661
    %1492 = vmatmul.mubr.bf16.gmra.mrb[0].mxu0 %v660
    %v1493 = vpop.f32.mrb[0].mxu0
    %v1494 = vadd.f32 %v1205, %v1493
    %v1495 = vpop.f32.mrb[0].mxu0
    %v1496 = vpop.f32.mrb[0].mxu0
    %v1497 = vadd.f32 %v1208, %v1496
    %v1498 = vpop.f32.mrb[0].mxu0
    %1499 = vmatprep.mubr.bf16.mxu0 %v665
    %1500 = vmatmul.mubr.bf16.gmra.mrb[0].mxu0 %v664
    %v1501 = vpop.f32.mrb[0].mxu0
    %v1502 = vadd.f32 %v1213, %v1501
    %v1503 = vpop.f32.mrb[0].mxu0
    %v1504 = vpop.f32.mrb[0].mxu0
    %v1505 = vadd.f32 %v1216, %v1504
    %v1506 = vpop.f32.mrb[0].mxu0
    %1507 = vmatprep.mubr.bf16.mxu0 %v669
    %1508 = vmatmul.mubr.bf16.gmra.mrb[0].mxu0 %v668
    %v1509 = vpop.f32.mrb[0].mxu0
    %v1510 = vadd.f32 %v1221, %v1509
    %v1511 = vpop.f32.mrb[0].mxu0
    %v1512 = vpop.f32.mrb[0].mxu0
    %v1513 = vadd.f32 %v1224, %v1512
    %v1514 = vpop.f32.mrb[0].mxu0
    %1515 = vmatprep.mubr.bf16.mxu0 %v673
    %1516 = vmatmul.mubr.bf16.gmra.mrb[0].mxu0 %v672
    %v1517 = vpop.f32.mrb[0].mxu0
    %v1518 = vadd.f32 %v1229, %v1517
    %v1519 = vpop.f32.mrb[0].mxu0
    %v1520 = vpop.f32.mrb[0].mxu0
    %v1521 = vadd.f32 %v1232, %v1520
    %v1522 = vpop.f32.mrb[0].mxu0
    %1523 = vmatprep.mubr.bf16.mxu0 %v677
    %1524 = vmatmul.mubr.bf16.gmra.mrb[0].mxu0 %v676
    %v1525 = vpop.f32.mrb[0].mxu0
    %v1526 = vadd.f32 %v1237, %v1525
    %v1527 = vpop.f32.mrb[0].mxu0
    %v1528 = vpop.f32.mrb[0].mxu0
    %v1529 = vadd.f32 %v1240, %v1528
    %v1530 = vpop.f32.mrb[0].mxu0
    %1531 = vmatprep.mubr.bf16.mxu0 %v681
    %1532 = vmatmul.mubr.bf16.gmra.mrb[0].mxu0 %v680
    %v1533 = vpop.f32.mrb[0].mxu0
    %v1534 = vadd.f32 %v1245, %v1533
    %v1535 = vpop.f32.mrb[0].mxu0
    %v1536 = vpop.f32.mrb[0].mxu0
    %v1537 = vadd.f32 %v1248, %v1536
    %v1538 = vpop.f32.mrb[0].mxu0
    %1539 = vmatprep.mubr.bf16.mxu0 %v685
    %1540 = vmatmul.mubr.bf16.gmra.mrb[0].mxu0 %v684
    %v1541 = vpop.f32.mrb[0].mxu0
    %v1542 = vadd.f32 %v1253, %v1541
    %v1543 = vpop.f32.mrb[0].mxu0
    %v1544 = vpop.f32.mrb[0].mxu0
    %v1545 = vadd.f32 %v1256, %v1544
    %v1546 = vpop.f32.mrb[0].mxu0
    %1547 = vmatprep.mubr.bf16.mxu0 %v689
    %1548 = vmatmul.mubr.bf16.gmra.mrb[0].mxu0 %v688
    %v1549 = vpop.f32.mrb[0].mxu0
    %v1550 = vadd.f32 %v1261, %v1549
    %v1551 = vpop.f32.mrb[0].mxu0
    %v1552 = vpop.f32.mrb[0].mxu0
    %v1553 = vadd.f32 %v1264, %v1552
    %v1554 = vpop.f32.mrb[0].mxu0
    %1555 = vmatprep.mubr.bf16.mxu0 %v693
    %1556 = vmatmul.mubr.bf16.gmra.mrb[0].mxu0 %v692
    %v1557 = vpop.f32.mrb[0].mxu0
    %v1558 = vadd.f32 %v1269, %v1557
    %v1559 = vpop.f32.mrb[0].mxu0
    %v1560 = vpop.f32.mrb[0].mxu0
    %v1561 = vadd.f32 %v1272, %v1560
    %v1562 = vpop.f32.mrb[0].mxu0
    %1563 = vmatprep.mubr.bf16.mxu0 %v697
    %1564 = vmatmul.mubr.bf16.gmra.mrb[0].mxu0 %v696
    %v1565 = vpop.f32.mrb[0].mxu0
    %v1566 = vadd.f32 %v1277, %v1565
    %v1567 = vpop.f32.mrb[0].mxu0
    %v1568 = vpop.f32.mrb[0].mxu0
    %v1569 = vadd.f32 %v1280, %v1568
    %v1570 = vpop.f32.mrb[0].mxu0
    %1571 = vmatprep.mubr.bf16.mxu0 %v701
    %1572 = vmatmul.mubr.bf16.gmra.mrb[0].mxu0 %v700
    %v1573 = vpop.f32.mrb[0].mxu0
    %v1574 = vadd.f32 %v1285, %v1573
    %v1575 = vpop.f32.mrb[0].mxu0
    %v1576 = vpop.f32.mrb[0].mxu0
    %v1577 = vadd.f32 %v1288, %v1576
    %v1578 = vpop.f32.mrb[0].mxu0
    %1579 = vmatprep.mubr.bf16.mxu0 %v705
    %1580 = vmatmul.mubr.bf16.gmra.mrb[0].mxu0 %v704
    %v1581 = vpop.f32.mrb[0].mxu0
    %v1582 = vadd.f32 %v1293, %v1581
    %v1583 = vpop.f32.mrb[0].mxu0
    %v1584 = vpop.f32.mrb[0].mxu0
    %v1585 = vadd.f32 %v1296, %v1584
    %v1586 = vpop.f32.mrb[0].mxu0
    %1587 = vmatprep.mubr.bf16.mxu0 %v709
    %1588 = vmatmul.mubr.bf16.gmra.mrb[0].mxu0 %v708
    %v1589 = vpop.f32.mrb[0].mxu0
    %v1590 = vadd.f32 %v1301, %v1589
    %v1591 = vpop.f32.mrb[0].mxu0
    %v1592 = vpop.f32.mrb[0].mxu0
    %v1593 = vadd.f32 %v1304, %v1592
    %v1594 = vpop.f32.mrb[0].mxu0
    %1595 = vmatprep.mubr.bf16.mxu0 %v713
    %1596 = vmatmul.mubr.bf16.gmra.mrb[0].mxu0 %v712
    %v1597 = vpop.f32.mrb[0].mxu0
    %v1598 = vadd.f32 %v1309, %v1597
    %v1599 = vpop.f32.mrb[0].mxu0
    %v1600 = vpop.f32.mrb[0].mxu0
    %v1601 = vadd.f32 %v1312, %v1600
    %v1602 = vpop.f32.mrb[0].mxu0
    %1603 = vmatprep.mubr.bf16.mxu0 %v717
    %1604 = vmatmul.mubr.bf16.gmra.mrb[0].mxu0 %v716
    %v1605 = vpop.f32.mrb[0].mxu0
    %v1606 = vadd.f32 %v1317, %v1605
    %v1607 = vpop.f32.mrb[0].mxu0
    %v1608 = vpop.f32.mrb[0].mxu0
    %v1609 = vadd.f32 %v1320, %v1608
    %v1610 = vpop.f32.mrb[0].mxu0
    %1611 = vmatprep.mubr.bf16.mxu0 %v721
    %1612 = vmatmul.mubr.bf16.gmra.mrb[0].mxu0 %v720
    %v1613 = vpop.f32.mrb[0].mxu0
    %v1614 = vadd.f32 %v1325, %v1613
    %v1615 = vpop.f32.mrb[0].mxu0
    %v1616 = vpop.f32.mrb[0].mxu0
    %v1617 = vadd.f32 %v1328, %v1616
    %v1618 = vpop.f32.mrb[0].mxu0
    %1619 = vdwg.mxu0
    %v1620 = vpack.c.bf16 %v1369, %v1366
    %v1621 = vpack.c.bf16 %v1377, %v1374
    %v1622 = vpack.c.bf16 %v1385, %v1382
    %v1623 = vpack.c.bf16 %v1393, %v1390
    %v1624 = vpack.c.bf16 %v1401, %v1398
    %v1625 = vpack.c.bf16 %v1409, %v1406
    %v1626 = vpack.c.bf16 %v1417, %v1414
    %v1627 = vpack.c.bf16 %v1425, %v1422
    %v1628 = vpack.c.bf16 %v1433, %v1430
    %v1629 = vpack.c.bf16 %v1441, %v1438
    %v1630 = vpack.c.bf16 %v1449, %v1446
    %v1631 = vpack.c.bf16 %v1457, %v1454
    %v1632 = vpack.c.bf16 %v1465, %v1462
    %v1633 = vpack.c.bf16 %v1473, %v1470
    %v1634 = vpack.c.bf16 %v1481, %v1478
    %v1635 = vpack.c.bf16 %v1489, %v1486
    %v1636 = vpack.c.bf16 %v1497, %v1494
    %v1637 = vpack.c.bf16 %v1505, %v1502
    %v1638 = vpack.c.bf16 %v1513, %v1510
    %v1639 = vpack.c.bf16 %v1521, %v1518
    %v1640 = vpack.c.bf16 %v1529, %v1526
    %v1641 = vpack.c.bf16 %v1537, %v1534
    %v1642 = vpack.c.bf16 %v1545, %v1542
    %v1643 = vpack.c.bf16 %v1553, %v1550
    %v1644 = vpack.c.bf16 %v1561, %v1558
    %v1645 = vpack.c.bf16 %v1569, %v1566
    %v1646 = vpack.c.bf16 %v1577, %v1574
    %v1647 = vpack.c.bf16 %v1585, %v1582
    %v1648 = vpack.c.bf16 %v1593, %v1590
    %v1649 = vpack.c.bf16 %v1601, %v1598
    %v1650 = vpack.c.bf16 %v1609, %v1606
    %v1651 = vpack.c.bf16 %v1617, %v1614
    %v1684 = vunpack.c.l.b16 %v1620
    %v1685 = vunpack.c.h.b16 %v1620
    %v1686 = vunpack.c.l.b16 %v1621
    %v1687 = vunpack.c.h.b16 %v1621
    %v1688 = vunpack.c.l.b16 %v1622
    %v1689 = vunpack.c.h.b16 %v1622
    %v1690 = vunpack.c.l.b16 %v1623
    %v1691 = vunpack.c.h.b16 %v1623
    %v1692 = vunpack.c.l.b16 %v1624
    %v1693 = vunpack.c.h.b16 %v1624
    %v1694 = vunpack.c.l.b16 %v1625
    %v1695 = vunpack.c.h.b16 %v1625
    %v1696 = vunpack.c.l.b16 %v1626
    %v1697 = vunpack.c.h.b16 %v1626
    %v1698 = vunpack.c.l.b16 %v1627
    %v1699 = vunpack.c.h.b16 %v1627
    %v1700 = vunpack.c.l.b16 %v1628
    %v1701 = vunpack.c.h.b16 %v1628
    %v1702 = vunpack.c.l.b16 %v1629
    %v1703 = vunpack.c.h.b16 %v1629
    %v1704 = vunpack.c.l.b16 %v1630
    %v1705 = vunpack.c.h.b16 %v1630
    %v1706 = vunpack.c.l.b16 %v1631
    %v1707 = vunpack.c.h.b16 %v1631
    %v1708 = vunpack.c.l.b16 %v1632
    %v1709 = vunpack.c.h.b16 %v1632
    %v1710 = vunpack.c.l.b16 %v1633
    %v1711 = vunpack.c.h.b16 %v1633
    %v1712 = vunpack.c.l.b16 %v1634
    %v1713 = vunpack.c.h.b16 %v1634
    %v1714 = vunpack.c.l.b16 %v1635
    %v1715 = vunpack.c.h.b16 %v1635
    %v1716 = vunpack.c.l.b16 %v1636
    %v1717 = vunpack.c.h.b16 %v1636
    %v1718 = vunpack.c.l.b16 %v1637
    %v1719 = vunpack.c.h.b16 %v1637
    %v1720 = vunpack.c.l.b16 %v1638
    %v1721 = vunpack.c.h.b16 %v1638
    %v1722 = vunpack.c.l.b16 %v1639
    %v1723 = vunpack.c.h.b16 %v1639
    %v1724 = vunpack.c.l.b16 %v1640
    %v1725 = vunpack.c.h.b16 %v1640
    %v1726 = vunpack.c.l.b16 %v1641
    %v1727 = vunpack.c.h.b16 %v1641
    %v1728 = vunpack.c.l.b16 %v1642
    %v1729 = vunpack.c.h.b16 %v1642
    %v1730 = vunpack.c.l.b16 %v1643
    %v1731 = vunpack.c.h.b16 %v1643
    %v1732 = vunpack.c.l.b16 %v1644
    %v1733 = vunpack.c.h.b16 %v1644
    %v1734 = vunpack.c.l.b16 %v1645
    %v1735 = vunpack.c.h.b16 %v1645
    %v1736 = vunpack.c.l.b16 %v1646
    %v1737 = vunpack.c.h.b16 %v1646
    %v1738 = vunpack.c.l.b16 %v1647
    %v1739 = vunpack.c.h.b16 %v1647
    %v1740 = vunpack.c.l.b16 %v1648
    %v1741 = vunpack.c.h.b16 %v1648
    %v1742 = vunpack.c.l.b16 %v1649
    %v1743 = vunpack.c.h.b16 %v1649
    %v1744 = vunpack.c.l.b16 %v1650
    %v1745 = vunpack.c.h.b16 %v1650
    %v1746 = vunpack.c.l.b16 %v1651
    %v1747 = vunpack.c.h.b16 %v1651
    %v1748 = vpack.c.b16 %v1684, %v1684
    %v1749 = vpack.c.b16 %v1685, %v1685
    %v1750 = vpack.c.b16 %v1686, %v1686
    %v1751 = vpack.c.b16 %v1687, %v1687
    %v1752 = vpack.c.b16 %v1688, %v1688
    %v1753 = vpack.c.b16 %v1689, %v1689
    %v1754 = vpack.c.b16 %v1690, %v1690
    %v1755 = vpack.c.b16 %v1691, %v1691
    %v1756 = vpack.c.b16 %v1692, %v1692
    %v1757 = vpack.c.b16 %v1693, %v1693
    %v1758 = vpack.c.b16 %v1694, %v1694
    %v1759 = vpack.c.b16 %v1695, %v1695
    %v1760 = vpack.c.b16 %v1696, %v1696
    %v1761 = vpack.c.b16 %v1697, %v1697
    %v1762 = vpack.c.b16 %v1698, %v1698
    %v1763 = vpack.c.b16 %v1699, %v1699
    %v1764 = vpack.c.b16 %v1700, %v1700
    %v1765 = vpack.c.b16 %v1701, %v1701
    %v1766 = vpack.c.b16 %v1702, %v1702
    %v1767 = vpack.c.b16 %v1703, %v1703
    %v1768 = vpack.c.b16 %v1704, %v1704
    %v1769 = vpack.c.b16 %v1705, %v1705
    %v1770 = vpack.c.b16 %v1706, %v1706
    %v1771 = vpack.c.b16 %v1707, %v1707
    %v1772 = vpack.c.b16 %v1708, %v1708
    %v1773 = vpack.c.b16 %v1709, %v1709
    %v1774 = vpack.c.b16 %v1710, %v1710
    %v1775 = vpack.c.b16 %v1711, %v1711
    %v1776 = vpack.c.b16 %v1712, %v1712
    %v1777 = vpack.c.b16 %v1713, %v1713
    %v1778 = vpack.c.b16 %v1714, %v1714
    %v1779 = vpack.c.b16 %v1715, %v1715
    %v1780 = vpack.c.b16 %v1716, %v1716
    %v1781 = vpack.c.b16 %v1717, %v1717
    %v1782 = vpack.c.b16 %v1718, %v1718
    %v1783 = vpack.c.b16 %v1719, %v1719
    %v1784 = vpack.c.b16 %v1720, %v1720
    %v1785 = vpack.c.b16 %v1721, %v1721
    %v1786 = vpack.c.b16 %v1722, %v1722
    %v1787 = vpack.c.b16 %v1723, %v1723
    %v1788 = vpack.c.b16 %v1724, %v1724
    %v1789 = vpack.c.b16 %v1725, %v1725
    %v1790 = vpack.c.b16 %v1726, %v1726
    %v1791 = vpack.c.b16 %v1727, %v1727
    %v1792 = vpack.c.b16 %v1728, %v1728
    %v1793 = vpack.c.b16 %v1729, %v1729
    %v1794 = vpack.c.b16 %v1730, %v1730
    %v1795 = vpack.c.b16 %v1731, %v1731
    %v1796 = vpack.c.b16 %v1732, %v1732
    %v1797 = vpack.c.b16 %v1733, %v1733
    %v1798 = vpack.c.b16 %v1734, %v1734
    %v1799 = vpack.c.b16 %v1735, %v1735
    %v1800 = vpack.c.b16 %v1736, %v1736
    %v1801 = vpack.c.b16 %v1737, %v1737
    %v1802 = vpack.c.b16 %v1738, %v1738
    %v1803 = vpack.c.b16 %v1739, %v1739
    %v1804 = vpack.c.b16 %v1740, %v1740
    %v1805 = vpack.c.b16 %v1741, %v1741
    %v1806 = vpack.c.b16 %v1742, %v1742
    %v1807 = vpack.c.b16 %v1743, %v1743
    %v1808 = vpack.c.b16 %v1744, %v1744
    %v1809 = vpack.c.b16 %v1745, %v1745
    %v1810 = vpack.c.b16 %v1746, %v1746
    %v1811 = vpack.c.b16 %v1747, %v1747
    %vm1876 = vcmask 519168
    %1877 = vst.msk [vmem:[#allocation2] sm:$0xf] %vm1876, %v1748
    %1878 = vst.msk [vmem:[#allocation2 + $0x4] sm:$0xf] %vm1876, %v1749
    %1879 = vst.msk [vmem:[#allocation2 + $0x8] sm:$0xf] %vm1876, %v1750
    %1880 = vst.msk [vmem:[#allocation2 + $0xc] sm:$0xf] %vm1876, %v1751
    %1881 = vst.msk [vmem:[#allocation2 + $0x10] sm:$0xf] %vm1876, %v1752
    %1882 = vst.msk [vmem:[#allocation2 + $0x14] sm:$0xf] %vm1876, %v1753
    %1883 = vst.msk [vmem:[#allocation2 + $0x18] sm:$0xf] %vm1876, %v1754
    %1884 = vst.msk [vmem:[#allocation2 + $0x1c] sm:$0xf] %vm1876, %v1755
    %1885 = vst.msk [vmem:[#allocation2 + $0x20] sm:$0xf] %vm1876, %v1756
    %1886 = vst.msk [vmem:[#allocation2 + $0x24] sm:$0xf] %vm1876, %v1757
    %1887 = vst.msk [vmem:[#allocation2 + $0x28] sm:$0xf] %vm1876, %v1758
    %1888 = vst.msk [vmem:[#allocation2 + $0x2c] sm:$0xf] %vm1876, %v1759
    %1889 = vst.msk [vmem:[#allocation2 + $0x30] sm:$0xf] %vm1876, %v1760
    %1890 = vst.msk [vmem:[#allocation2 + $0x34] sm:$0xf] %vm1876, %v1761
    %1891 = vst.msk [vmem:[#allocation2 + $0x38] sm:$0xf] %vm1876, %v1762
    %1892 = vst.msk [vmem:[#allocation2 + $0x3c] sm:$0xf] %vm1876, %v1763
    %1893 = vst.msk [vmem:[#allocation2 + $0x40] sm:$0xf] %vm1876, %v1764
    %1894 = vst.msk [vmem:[#allocation2 + $0x44] sm:$0xf] %vm1876, %v1765
    %1895 = vst.msk [vmem:[#allocation2 + $0x48] sm:$0xf] %vm1876, %v1766
    %1896 = vst.msk [vmem:[#allocation2 + $0x4c] sm:$0xf] %vm1876, %v1767
    %1897 = vst.msk [vmem:[#allocation2 + $0x50] sm:$0xf] %vm1876, %v1768
    %1898 = vst.msk [vmem:[#allocation2 + $0x54] sm:$0xf] %vm1876, %v1769
    %1899 = vst.msk [vmem:[#allocation2 + $0x58] sm:$0xf] %vm1876, %v1770
    %1900 = vst.msk [vmem:[#allocation2 + $0x5c] sm:$0xf] %vm1876, %v1771
    %1901 = vst.msk [vmem:[#allocation2 + $0x60] sm:$0xf] %vm1876, %v1772
    %1902 = vst.msk [vmem:[#allocation2 + $0x64] sm:$0xf] %vm1876, %v1773
    %1903 = vst.msk [vmem:[#allocation2 + $0x68] sm:$0xf] %vm1876, %v1774
    %1904 = vst.msk [vmem:[#allocation2 + $0x6c] sm:$0xf] %vm1876, %v1775
    %1905 = vst.msk [vmem:[#allocation2 + $0x70] sm:$0xf] %vm1876, %v1776
    %1906 = vst.msk [vmem:[#allocation2 + $0x74] sm:$0xf] %vm1876, %v1777
    %1907 = vst.msk [vmem:[#allocation2 + $0x78] sm:$0xf] %vm1876, %v1778
    %1908 = vst.msk [vmem:[#allocation2 + $0x7c] sm:$0xf] %vm1876, %v1779
    %1909 = vst.msk [vmem:[#allocation2 + $0x80] sm:$0xf] %vm1876, %v1780
    %1910 = vst.msk [vmem:[#allocation2 + $0x84] sm:$0xf] %vm1876, %v1781
    %1911 = vst.msk [vmem:[#allocation2 + $0x88] sm:$0xf] %vm1876, %v1782
    %1912 = vst.msk [vmem:[#allocation2 + $0x8c] sm:$0xf] %vm1876, %v1783
    %1913 = vst.msk [vmem:[#allocation2 + $0x90] sm:$0xf] %vm1876, %v1784
    %1914 = vst.msk [vmem:[#allocation2 + $0x94] sm:$0xf] %vm1876, %v1785
    %1915 = vst.msk [vmem:[#allocation2 + $0x98] sm:$0xf] %vm1876, %v1786
    %1916 = vst.msk [vmem:[#allocation2 + $0x9c] sm:$0xf] %vm1876, %v1787
    %1917 = vst.msk [vmem:[#allocation2 + $0xa0] sm:$0xf] %vm1876, %v1788
    %1918 = vst.msk [vmem:[#allocation2 + $0xa4] sm:$0xf] %vm1876, %v1789
    %1919 = vst.msk [vmem:[#allocation2 + $0xa8] sm:$0xf] %vm1876, %v1790
    %1920 = vst.msk [vmem:[#allocation2 + $0xac] sm:$0xf] %vm1876, %v1791
    %1921 = vst.msk [vmem:[#allocation2 + $0xb0] sm:$0xf] %vm1876, %v1792
    %1922 = vst.msk [vmem:[#allocation2 + $0xb4] sm:$0xf] %vm1876, %v1793
    %1923 = vst.msk [vmem:[#allocation2 + $0xb8] sm:$0xf] %vm1876, %v1794
    %1924 = vst.msk [vmem:[#allocation2 + $0xbc] sm:$0xf] %vm1876, %v1795
    %1925 = vst.msk [vmem:[#allocation2 + $0xc0] sm:$0xf] %vm1876, %v1796
    %1926 = vst.msk [vmem:[#allocation2 + $0xc4] sm:$0xf] %vm1876, %v1797
    %1927 = vst.msk [vmem:[#allocation2 + $0xc8] sm:$0xf] %vm1876, %v1798
    %1928 = vst.msk [vmem:[#allocation2 + $0xcc] sm:$0xf] %vm1876, %v1799
    %1929 = vst.msk [vmem:[#allocation2 + $0xd0] sm:$0xf] %vm1876, %v1800
    %1930 = vst.msk [vmem:[#allocation2 + $0xd4] sm:$0xf] %vm1876, %v1801
    %1931 = vst.msk [vmem:[#allocation2 + $0xd8] sm:$0xf] %vm1876, %v1802
    %1932 = vst.msk [vmem:[#allocation2 + $0xdc] sm:$0xf] %vm1876, %v1803
    %1933 = vst.msk [vmem:[#allocation2 + $0xe0] sm:$0xf] %vm1876, %v1804
    %1934 = vst.msk [vmem:[#allocation2 + $0xe4] sm:$0xf] %vm1876, %v1805
    %1935 = vst.msk [vmem:[#allocation2 + $0xe8] sm:$0xf] %vm1876, %v1806
    %1936 = vst.msk [vmem:[#allocation2 + $0xec] sm:$0xf] %vm1876, %v1807
    %1937 = vst.msk [vmem:[#allocation2 + $0xf0] sm:$0xf] %vm1876, %v1808
    %1938 = vst.msk [vmem:[#allocation2 + $0xf4] sm:$0xf] %vm1876, %v1809
    %1939 = vst.msk [vmem:[#allocation2 + $0xf8] sm:$0xf] %vm1876, %v1810
    %1940 = vst.msk [vmem:[#allocation2 + $0xfc] sm:$0xf] %vm1876, %v1811
    %v1941 = vld [vmem:[%s2] sm:$0xff]
    %v1942 = vld [vmem:[%s2 + $0x8] sm:$0xff]
    %v1943 = vld [vmem:[%s2 + $0x10] sm:$0xff]
    %v1944 = vld [vmem:[%s2 + $0x18] sm:$0xff]
    %v1945 = vld [vmem:[%s2 + $0x20] sm:$0xff]
    %v1946 = vld [vmem:[%s2 + $0x28] sm:$0xff]
    %v1947 = vld [vmem:[%s2 + $0x30] sm:$0xff]
    %v1948 = vld [vmem:[%s2 + $0x38] sm:$0xff]
    %v1949 = vld [vmem:[%s2 + $0x40] sm:$0xff]
    %v1950 = vld [vmem:[%s2 + $0x48] sm:$0xff]
    %v1951 = vld [vmem:[%s2 + $0x50] sm:$0xff]
    %v1952 = vld [vmem:[%s2 + $0x58] sm:$0xff]
    %v1953 = vld [vmem:[%s2 + $0x60] sm:$0xff]
    %v1954 = vld [vmem:[%s2 + $0x68] sm:$0xff]
    %v1955 = vld [vmem:[%s2 + $0x70] sm:$0xff]
    %v1956 = vld [vmem:[%s2 + $0x78] sm:$0xff]
    %v1957 = vld [vmem:[%s2 + $0x80] sm:$0xff]
    %v1958 = vld [vmem:[%s2 + $0x88] sm:$0xff]
    %v1959 = vld [vmem:[%s2 + $0x90] sm:$0xff]
    %v1960 = vld [vmem:[%s2 + $0x98] sm:$0xff]
    %v1961 = vld [vmem:[%s2 + $0xa0] sm:$0xff]
    %v1962 = vld [vmem:[%s2 + $0xa8] sm:$0xff]
    %v1963 = vld [vmem:[%s2 + $0xb0] sm:$0xff]
    %v1964 = vld [vmem:[%s2 + $0xb8] sm:$0xff]
    %v1965 = vld [vmem:[%s2 + $0xc0] sm:$0xff]
    %v1966 = vld [vmem:[%s2 + $0xc8] sm:$0xff]
    %v1967 = vld [vmem:[%s2 + $0xd0] sm:$0xff]
    %v1968 = vld [vmem:[%s2 + $0xd8] sm:$0xff]
    %v1969 = vld [vmem:[%s2 + $0xe0] sm:$0xff]
    %v1970 = vld [vmem:[%s2 + $0xe8] sm:$0xff]
    %v1971 = vld [vmem:[%s2 + $0xf0] sm:$0xff]
    %v1972 = vld [vmem:[%s2 + $0xf8] sm:$0xff]
    %v1973 = vld [vmem:[%s2 + $0x100] sm:$0xff]
    %v1974 = vld [vmem:[%s2 + $0x108] sm:$0xff]
    %v1975 = vld [vmem:[%s2 + $0x110] sm:$0xff]
    %v1976 = vld [vmem:[%s2 + $0x118] sm:$0xff]
    %v1977 = vld [vmem:[%s2 + $0x120] sm:$0xff]
    %v1978 = vld [vmem:[%s2 + $0x128] sm:$0xff]
    %v1979 = vld [vmem:[%s2 + $0x130] sm:$0xff]
    %v1980 = vld [vmem:[%s2 + $0x138] sm:$0xff]
    %v1981 = vld [vmem:[%s2 + $0x140] sm:$0xff]
    %v1982 = vld [vmem:[%s2 + $0x148] sm:$0xff]
    %v1983 = vld [vmem:[%s2 + $0x150] sm:$0xff]
    %v1984 = vld [vmem:[%s2 + $0x158] sm:$0xff]
    %v1985 = vld [vmem:[%s2 + $0x160] sm:$0xff]
    %v1986 = vld [vmem:[%s2 + $0x168] sm:$0xff]
    %v1987 = vld [vmem:[%s2 + $0x170] sm:$0xff]
    %v1988 = vld [vmem:[%s2 + $0x178] sm:$0xff]
    %v1989 = vld [vmem:[%s2 + $0x180] sm:$0xff]
    %v1990 = vld [vmem:[%s2 + $0x188] sm:$0xff]
    %v1991 = vld [vmem:[%s2 + $0x190] sm:$0xff]
    %v1992 = vld [vmem:[%s2 + $0x198] sm:$0xff]
    %v1993 = vld [vmem:[%s2 + $0x1a0] sm:$0xff]
    %v1994 = vld [vmem:[%s2 + $0x1a8] sm:$0xff]
    %v1995 = vld [vmem:[%s2 + $0x1b0] sm:$0xff]
    %v1996 = vld [vmem:[%s2 + $0x1b8] sm:$0xff]
    %v1997 = vld [vmem:[%s2 + $0x1c0] sm:$0xff]
    %v1998 = vld [vmem:[%s2 + $0x1c8] sm:$0xff]
    %v1999 = vld [vmem:[%s2 + $0x1d0] sm:$0xff]
    %v2000 = vld [vmem:[%s2 + $0x1d8] sm:$0xff]
    %v2001 = vld [vmem:[%s2 + $0x1e0] sm:$0xff]
    %v2002 = vld [vmem:[%s2 + $0x1e8] sm:$0xff]
    %v2003 = vld [vmem:[%s2 + $0x1f0] sm:$0xff]
    %v2004 = vld [vmem:[%s2 + $0x1f8] sm:$0xff]
    %v2005 = vadd.f32 %v1941, %v1366
    %v2006 = vadd.f32 %v1942, %v1369
    %v2007 = vadd.f32 %v1943, %v1374
    %v2008 = vadd.f32 %v1944, %v1377
    %v2009 = vadd.f32 %v1945, %v1382
    %v2010 = vadd.f32 %v1946, %v1385
    %v2011 = vadd.f32 %v1947, %v1390
    %v2012 = vadd.f32 %v1948, %v1393
    %v2013 = vadd.f32 %v1949, %v1398
    %v2014 = vadd.f32 %v1950, %v1401
    %v2015 = vadd.f32 %v1951, %v1406
    %v2016 = vadd.f32 %v1952, %v1409
    %v2017 = vadd.f32 %v1953, %v1414
    %v2018 = vadd.f32 %v1954, %v1417
    %v2019 = vadd.f32 %v1955, %v1422
    %v2020 = vadd.f32 %v1956, %v1425
    %v2021 = vadd.f32 %v1957, %v1430
    %v2022 = vadd.f32 %v1958, %v1433
    %v2023 = vadd.f32 %v1959, %v1438
    %v2024 = vadd.f32 %v1960, %v1441
    %v2025 = vadd.f32 %v1961, %v1446
    %v2026 = vadd.f32 %v1962, %v1449
    %v2027 = vadd.f32 %v1963, %v1454
    %v2028 = vadd.f32 %v1964, %v1457
    %v2029 = vadd.f32 %v1965, %v1462
    %v2030 = vadd.f32 %v1966, %v1465
    %v2031 = vadd.f32 %v1967, %v1470
    %v2032 = vadd.f32 %v1968, %v1473
    %v2033 = vadd.f32 %v1969, %v1478
    %v2034 = vadd.f32 %v1970, %v1481
    %v2035 = vadd.f32 %v1971, %v1486
    %v2036 = vadd.f32 %v1972, %v1489
    %v2037 = vadd.f32 %v1973, %v1494
    %v2038 = vadd.f32 %v1974, %v1497
    %v2039 = vadd.f32 %v1975, %v1502
    %v2040 = vadd.f32 %v1976, %v1505
    %v2041 = vadd.f32 %v1977, %v1510
    %v2042 = vadd.f32 %v1978, %v1513
    %v2043 = vadd.f32 %v1979, %v1518
    %v2044 = vadd.f32 %v1980, %v1521
    %v2045 = vadd.f32 %v1981, %v1526
    %v2046 = vadd.f32 %v1982, %v1529
    %v2047 = vadd.f32 %v1983, %v1534
    %v2048 = vadd.f32 %v1984, %v1537
    %v2049 = vadd.f32 %v1985, %v1542
    %v2050 = vadd.f32 %v1986, %v1545
    %v2051 = vadd.f32 %v1987, %v1550
    %v2052 = vadd.f32 %v1988, %v1553
    %v2053 = vadd.f32 %v1989, %v1558
    %v2054 = vadd.f32 %v1990, %v1561
    %v2055 = vadd.f32 %v1991, %v1566
    %v2056 = vadd.f32 %v1992, %v1569
    %v2057 = vadd.f32 %v1993, %v1574
    %v2058 = vadd.f32 %v1994, %v1577
    %v2059 = vadd.f32 %v1995, %v1582
    %v2060 = vadd.f32 %v1996, %v1585
    %v2061 = vadd.f32 %v1997, %v1590
    %v2062 = vadd.f32 %v1998, %v1593
    %v2063 = vadd.f32 %v1999, %v1598
    %v2064 = vadd.f32 %v2000, %v1601
    %v2065 = vadd.f32 %v2001, %v1606
    %v2066 = vadd.f32 %v2002, %v1609
    %v2067 = vadd.f32 %v2003, %v1614
    %v2068 = vadd.f32 %v2004, %v1617
    %vm2069 = vcmask 523264
    %2070 = vst.msk [vmem:[%s4] sm:$0xff] %vm2069, %v2005
    %2071 = vst.msk [vmem:[%s4 + $0x8] sm:$0xff] %vm2069, %v2006
    %2072 = vst.msk [vmem:[%s4 + $0x10] sm:$0xff] %vm2069, %v2007
    %2073 = vst.msk [vmem:[%s4 + $0x18] sm:$0xff] %vm2069, %v2008
    %2074 = vst.msk [vmem:[%s4 + $0x20] sm:$0xff] %vm2069, %v2009
    %2075 = vst.msk [vmem:[%s4 + $0x28] sm:$0xff] %vm2069, %v2010
    %2076 = vst.msk [vmem:[%s4 + $0x30] sm:$0xff] %vm2069, %v2011
    %2077 = vst.msk [vmem:[%s4 + $0x38] sm:$0xff] %vm2069, %v2012
    %2078 = vst.msk [vmem:[%s4 + $0x40] sm:$0xff] %vm2069, %v2013
    %2079 = vst.msk [vmem:[%s4 + $0x48] sm:$0xff] %vm2069, %v2014
    %2080 = vst.msk [vmem:[%s4 + $0x50] sm:$0xff] %vm2069, %v2015
    %2081 = vst.msk [vmem:[%s4 + $0x58] sm:$0xff] %vm2069, %v2016
    %2082 = vst.msk [vmem:[%s4 + $0x60] sm:$0xff] %vm2069, %v2017
    %2083 = vst.msk [vmem:[%s4 + $0x68] sm:$0xff] %vm2069, %v2018
    %2084 = vst.msk [vmem:[%s4 + $0x70] sm:$0xff] %vm2069, %v2019
    %2085 = vst.msk [vmem:[%s4 + $0x78] sm:$0xff] %vm2069, %v2020
    %2086 = vst.msk [vmem:[%s4 + $0x80] sm:$0xff] %vm2069, %v2021
    %2087 = vst.msk [vmem:[%s4 + $0x88] sm:$0xff] %vm2069, %v2022
    %2088 = vst.msk [vmem:[%s4 + $0x90] sm:$0xff] %vm2069, %v2023
    %2089 = vst.msk [vmem:[%s4 + $0x98] sm:$0xff] %vm2069, %v2024
    %2090 = vst.msk [vmem:[%s4 + $0xa0] sm:$0xff] %vm2069, %v2025
    %2091 = vst.msk [vmem:[%s4 + $0xa8] sm:$0xff] %vm2069, %v2026
    %2092 = vst.msk [vmem:[%s4 + $0xb0] sm:$0xff] %vm2069, %v2027
    %2093 = vst.msk [vmem:[%s4 + $0xb8] sm:$0xff] %vm2069, %v2028
    %2094 = vst.msk [vmem:[%s4 + $0xc0] sm:$0xff] %vm2069, %v2029
    %2095 = vst.msk [vmem:[%s4 + $0xc8] sm:$0xff] %vm2069, %v2030
    %2096 = vst.msk [vmem:[%s4 + $0xd0] sm:$0xff] %vm2069, %v2031
    %2097 = vst.msk [vmem:[%s4 + $0xd8] sm:$0xff] %vm2069, %v2032
    %2098 = vst.msk [vmem:[%s4 + $0xe0] sm:$0xff] %vm2069, %v2033
    %2099 = vst.msk [vmem:[%s4 + $0xe8] sm:$0xff] %vm2069, %v2034
    %2100 = vst.msk [vmem:[%s4 + $0xf0] sm:$0xff] %vm2069, %v2035
    %2101 = vst.msk [vmem:[%s4 + $0xf8] sm:$0xff] %vm2069, %v2036
    %2102 = vst.msk [vmem:[%s4 + $0x100] sm:$0xff] %vm2069, %v2037
    %2103 = vst.msk [vmem:[%s4 + $0x108] sm:$0xff] %vm2069, %v2038
    %2104 = vst.msk [vmem:[%s4 + $0x110] sm:$0xff] %vm2069, %v2039
    %2105 = vst.msk [vmem:[%s4 + $0x118] sm:$0xff] %vm2069, %v2040
    %2106 = vst.msk [vmem:[%s4 + $0x120] sm:$0xff] %vm2069, %v2041
    %2107 = vst.msk [vmem:[%s4 + $0x128] sm:$0xff] %vm2069, %v2042
    %2108 = vst.msk [vmem:[%s4 + $0x130] sm:$0xff] %vm2069, %v2043
    %2109 = vst.msk [vmem:[%s4 + $0x138] sm:$0xff] %vm2069, %v2044
    %2110 = vst.msk [vmem:[%s4 + $0x140] sm:$0xff] %vm2069, %v2045
    %2111 = vst.msk [vmem:[%s4 + $0x148] sm:$0xff] %vm2069, %v2046
    %2112 = vst.msk [vmem:[%s4 + $0x150] sm:$0xff] %vm2069, %v2047
    %2113 = vst.msk [vmem:[%s4 + $0x158] sm:$0xff] %vm2069, %v2048
    %2114 = vst.msk [vmem:[%s4 + $0x160] sm:$0xff] %vm2069, %v2049
    %2115 = vst.msk [vmem:[%s4 + $0x168] sm:$0xff] %vm2069, %v2050
    %2116 = vst.msk [vmem:[%s4 + $0x170] sm:$0xff] %vm2069, %v2051
    %2117 = vst.msk [vmem:[%s4 + $0x178] sm:$0xff] %vm2069, %v2052
    %2118 = vst.msk [vmem:[%s4 + $0x180] sm:$0xff] %vm2069, %v2053
    %2119 = vst.msk [vmem:[%s4 + $0x188] sm:$0xff] %vm2069, %v2054
    %2120 = vst.msk [vmem:[%s4 + $0x190] sm:$0xff] %vm2069, %v2055
    %2121 = vst.msk [vmem:[%s4 + $0x198] sm:$0xff] %vm2069, %v2056
    %2122 = vst.msk [vmem:[%s4 + $0x1a0] sm:$0xff] %vm2069, %v2057
    %2123 = vst.msk [vmem:[%s4 + $0x1a8] sm:$0xff] %vm2069, %v2058
    %2124 = vst.msk [vmem:[%s4 + $0x1b0] sm:$0xff] %vm2069, %v2059
    %2125 = vst.msk [vmem:[%s4 + $0x1b8] sm:$0xff] %vm2069, %v2060
    %2126 = vst.msk [vmem:[%s4 + $0x1c0] sm:$0xff] %vm2069, %v2061
    %2127 = vst.msk [vmem:[%s4 + $0x1c8] sm:$0xff] %vm2069, %v2062
    %2128 = vst.msk [vmem:[%s4 + $0x1d0] sm:$0xff] %vm2069, %v2063
    %2129 = vst.msk [vmem:[%s4 + $0x1d8] sm:$0xff] %vm2069, %v2064
    %2130 = vst.msk [vmem:[%s4 + $0x1e0] sm:$0xff] %vm2069, %v2065
    %2131 = vst.msk [vmem:[%s4 + $0x1e8] sm:$0xff] %vm2069, %v2066
    %2132 = vst.msk [vmem:[%s4 + $0x1f0] sm:$0xff] %vm2069, %v2067
    %2133 = vst.msk [vmem:[%s4 + $0x1f8] sm:$0xff] %vm2069, %v2068
    // Predicated region
    $region14: #{lightgcn_forward.6} parent=1 // pred_check
      _
    $region15: #{lightgcn_forward.6} parent=1 // pred_check_branch
      %2135 = sbr.rel (0) target = $region17
    $region16: #{lightgcn_forward.6} parent=1 // pred_region
      %s2137 = ssub.s32 4096, 4096
      %2138 = vsyncadd [#allocation3], %s2137
      %s2139 = sshll.u32 [#allocation2], 4
      %s2140 = int_to_ptr.vmem [resolvable:$true] %s2139
      %2145 = dma.vmem_to_hbm [thread:$0]  %s2140, 4096, %s3, [#allocation3], 64, 64, 4
    $region17: #{lightgcn_forward.6} parent=1 // pred_fallthru
      _
    // Predicated region
    $region18: #{lightgcn_forward.6} parent=1 // pred_check
      _
    $region19: #{lightgcn_forward.6} parent=1 // pred_check_branch
      %2147 = sbr.rel (0) target = $region21
    $region20: #{lightgcn_forward.6} parent=1 // pred_region
      _
    $region21: #{lightgcn_forward.6} parent=1 // pred_fallthru
      _
    // Predicated region
    $region22: #{lightgcn_forward.6} parent=1 // pred_check
      _
    $region23: #{lightgcn_forward.6} parent=1 // pred_check_branch
      %2149 = sbr.rel (0) target = $region25
    $region24: #{lightgcn_forward.6} parent=1 // pred_region
      %2150 = dma.done [#allocation3], 4096
    $region25: #{lightgcn_forward.6} parent=1 // pred_fallthru
      _
    // Predicated region
    $region26: #{lightgcn_forward.6} parent=1 // pred_check
      _
    $region27: #{lightgcn_forward.6} parent=1 // pred_check_branch
      %2152 = sbr.rel (0) target = $region29
    $region28: #{lightgcn_forward.6} parent=1 // pred_region
      _
    $region29: #{lightgcn_forward.6} parent=1 // pred_fallthru
      _
    %2153 = vsyncpa [#allocation3], 1

</llo_original>
